<compile_context>
chip_gen: v7x
topology: tpu7x:2x2x1
jax: 0.10.0
libtpu: 0.0.40
codegen_flags: <defaults>
</compile_context>

<pallas_src>
import functools

import jax
import jax.numpy as jnp
from jax import lax
from jax.experimental import pallas as pl
from jax.experimental.pallas import tpu as pltpu

BN_EPS = 1e-3
_NEG = -1e30  # acts as -inf for SAME max-pool padding (post-SiLU values > -0.28)


def _silu(v):
    # SiLU = v * sigmoid(v), exact f32 (exp on the EUP, exact divide).
    # NOTE: do NOT use pl.reciprocal(approx=True) here -- its low precision was
    # what pushed the kernel outside the 2e-2 tolerance vs the reference.
    return v * (1.0 / (1.0 + jnp.exp(-v)))


def sppf_kernel(x_ref, w1_ref, b1_ref, w2_ref, b2_ref, o_ref, pad_ref, *,
                k, h_tile, halo, img_h):
    """One (batch, h-tile) grid step.

    x_ref   : (1, H, W, Cin)        bf16  whole image, resident across h-tiles
    w1_ref  : (Cin, Cmid)           bf16  conv1 1x1 weight (BN scale folded)
    b1_ref  : (1, Cmid)             f32   conv1 folded BN bias
    w2_ref  : (4, Cmid, CoutP)      bf16  conv2 weight split into concat pieces
    b2_ref  : (1, CoutP)            f32   conv2 folded BN bias
    o_ref   : (1, h_tile, W, CoutP) bf16  one output row-slab
    pad_ref : (T+2p, W+2p, Cmid)    bf16  -inf padded pooling scratch
    """
    w = x_ref.shape[2]
    cin = x_ref.shape[3]
    cmid = w1_ref.shape[-1]
    cout_p = o_ref.shape[-1]
    p = k // 2
    t_rows = pad_ref.shape[0] - 2 * p          # T = rows computed this step
    tp = t_rows + 2 * p
    wp = w + 2 * p

    i = pl.program_id(1)
    # Global row window [cs, cs + T) needed by this slab's 3-pool chain.
    # The start is clamped so the window always stays inside the image; SAME
    # padding at the true image borders is provided by pad_ref's -inf border.
    # Any -inf rows that stand in for real-but-unloaded rows (interior tiles)
    # can only pollute pooled rows within 3*p of the window edge, which is
    # exactly the halo -- the stored h_tile rows are never affected.
    row0 = i * h_tile - halo
    cs = jnp.minimum(jnp.maximum(row0, 0), img_h - t_rows)
    off = i * h_tile - cs                      # slab's offset inside the window

    # ---- conv1: 1x1 conv on the window as a single fat MXU matmul ----------
    xw = x_ref[:, pl.ds(cs, t_rows), :, :].reshape(t_rows * w, cin)
    t = _silu(jnp.dot(xw, w1_ref[...], preferred_element_type=jnp.float32)
              + b1_ref[...])
    # bf16 pooling is exact: max commutes with the monotone bf16 rounding and
    # every piece is cast to bf16 before the conv2 MXU anyway.
    y = t.astype(jnp.bfloat16).reshape(t_rows, w, cmid)

    # ---- -inf border of the pooling scratch (border strips only; the centre
    # is always overwritten).  Unconditional each step: safe under "parallel"
    # megacore sharding (never gate this on program_id == 0).
    neg_row = jnp.full((p, wp, cmid), _NEG, pad_ref.dtype)
    neg_col = jnp.full((tp, p, cmid), _NEG, pad_ref.dtype)
    pad_ref[0:p, :, :] = neg_row
    pad_ref[tp - p:tp, :, :] = neg_row
    pad_ref[:, 0:p, :] = neg_col
    pad_ref[:, wp - p:wp, :] = neg_col

    # ---- conv2 over cat([t, y1, y2, y3], C) without materializing the concat:
    # running sum of per-piece matmuls.  Each piece is staged in pad_ref's
    # centre (needed for the next pool anyway); its h_tile output rows are read
    # back with a cheap dynamic-offset slice on the untiled row axis.
    acc2 = jnp.zeros((h_tile * w, cout_p), jnp.float32)
    for j in range(4):
        pad_ref[p:p + t_rows, p:p + w, :] = y                 # stage piece j
        piece = pad_ref[pl.ds(p + off, h_tile), p:p + w, :]   # (h_tile, W, Cmid)
        acc2 += jnp.dot(piece.reshape(h_tile * w, cmid), w2_ref[j],
                        preferred_element_type=jnp.float32)
        if j < 3:
            # k x k max-pool, stride 1, SAME padding: separable row/col maxes
            # over the -inf padded scratch (2k max ops instead of k*k).
            zp = pad_ref[...]                                 # (T+2p, W+2p, C)
            r = zp[0:t_rows, :, :]
            for dy in range(1, k):
                r = jnp.maximum(r, zp[dy:dy + t_rows, :, :])  # (T, W+2p, C)
            y = r[:, 0:w, :]
            for dx in range(1, k):
                y = jnp.maximum(y, r[:, dx:dx + w, :])        # (T, W, C)

    z = _silu(acc2 + b2_ref[...])
    # Lane-dense bf16 store (CoutP is a multiple of 128).
    o_ref[0] = z.reshape(h_tile, w, cout_p).astype(o_ref.dtype)


def _pick_h_tile(h):
    # Largest divisor of H that is <= 32: bounds per-step VMEM and gives the
    # pipeline multiple steps per image.
    for cand in range(min(h, 32), 0, -1):
        if h % cand == 0:
            return cand
    return h


def sppf_apply_nhwc(params, x_nhwc, *, cout, k=5, h_tile=None):
    """SPPF forward on NHWC activations (preferred: no extra relayout pass).

    Returns NHWC bf16 with exactly `cout` channels.
    """
    x = x_nhwc.astype(jnp.bfloat16)
    n, h, w, cin = x.shape
    cmid = params["w1"].shape[-1]
    cout_p = params["w2"].shape[-1]
    p = k // 2
    halo = 3 * p                                   # 3 chained k-pools
    if h_tile is None:
        h_tile = _pick_h_tile(h)
    assert h % h_tile == 0, (h, h_tile)
    n_h = h // h_tile
    t_rows = min(h_tile + 2 * halo, h)             # rows of t per grid step

    kernel = functools.partial(sppf_kernel, k=k, h_tile=h_tile, halo=halo,
                               img_h=h)
    out = pl.pallas_call(
        kernel,
        out_shape=jax.ShapeDtypeStruct((n, h, w, cout_p), jnp.bfloat16),
        grid=(n, n_h),
        in_specs=[
            # Whole image per batch element; the index map ignores the h-tile
            # axis, so the pipeline keeps it resident (no re-fetch) across
            # that axis while the output slabs stream out.
            pl.BlockSpec((1, h, w, cin), lambda b, i: (b, 0, 0, 0)),
            pl.BlockSpec((cin, cmid), lambda b, i: (0, 0)),
            pl.BlockSpec((1, cmid), lambda b, i: (0, 0)),
            pl.BlockSpec((4, cmid, cout_p), lambda b, i: (0, 0, 0)),
            pl.BlockSpec((1, cout_p), lambda b, i: (0, 0)),
        ],
        out_specs=pl.BlockSpec((1, h_tile, w, cout_p),
                               lambda b, i: (b, i, 0, 0)),
        scratch_shapes=[
            pltpu.VMEM((t_rows + 2 * p, w + 2 * p, cmid), jnp.bfloat16)],
        compiler_params=pltpu.CompilerParams(
            dimension_semantics=("parallel", "parallel"),
            vmem_limit_bytes=48 * 1024 * 1024,     # explicit, v7x-safe budget
        ),
    )(x, params["w1"], params["b1"], params["w2"], params["b2"])
    return out[..., :cout]                         # drop lane-padding channels


def sppf_apply(params, x_nchw, *, cout, k=5, h_tile=None):
    """PyTorch-parity entry point: NCHW f32 in -> NCHW f32 out."""
    x = jnp.transpose(x_nchw, (0, 2, 3, 1))
    out = sppf_apply_nhwc(params, x, cout=cout, k=k, h_tile=h_tile)
    return jnp.transpose(out, (0, 3, 1, 2)).astype(jnp.float32)


# ----------------------------------------------------------------------------
# Parameter construction (deterministic, synthetic -- mirrors SPPF.__init__).
# BatchNorm2d is folded (inference): the scale goes into the weight columns,
# only the bias survives as a separate per-channel vector.
# ----------------------------------------------------------------------------
def _fold_bn(gamma, beta, mean, var, eps=BN_EPS):
    scale = gamma / jnp.sqrt(var + eps)
    return scale, beta - mean * scale


def init_sppf(key, cin, cout, k=5):
    assert cin % 2 == 0
    cmid = cin // 2
    cout_p = cout if cout % 128 == 0 else (-(-cout // 128) * 128)
    k1, k2, k3, k4 = jax.random.split(key, 4)

    # conv1: 1x1, Cin -> Cmid, stored (Cin, Cmid); BN scale folded into columns
    w1 = ((2.0 / cin) ** 0.5) * jax.random.normal(k1, (cin, cmid), jnp.float32)
    g1 = 1.0 + 0.1 * jax.random.normal(k3, (cmid,), jnp.float32)
    s1, b1 = _fold_bn(g1, 0.05 * jnp.ones((cmid,), jnp.float32),
                      jnp.zeros((cmid,), jnp.float32),
                      jnp.ones((cmid,), jnp.float32))
    w1 = w1 * s1[None, :]

    # conv2: 1x1, 4*Cmid -> Cout, stored (4, Cmid, CoutP); leading axis matches
    # the torch.cat([x, y1, y2, y3], dim=1) piece order.
    w2 = ((2.0 / (4 * cmid)) ** 0.5) * jax.random.normal(
        k2, (4 * cmid, cout), jnp.float32)
    g2 = 1.0 + 0.1 * jax.random.normal(k4, (cout,), jnp.float32)
    s2, b2 = _fold_bn(g2, -0.05 * jnp.ones((cout,), jnp.float32),
                      jnp.zeros((cout,), jnp.float32),
                      jnp.ones((cout,), jnp.float32))
    w2 = w2 * s2[None, :]

    w2p = jnp.zeros((4 * cmid, cout_p), jnp.float32).at[:, :cout].set(w2)
    b2p = jnp.zeros((cout_p,), jnp.float32).at[:cout].set(b2)

    return {
        "w1": w1.astype(jnp.bfloat16),
        "b1": b1.reshape(1, cmid).astype(jnp.float32),
        "w2": w2p.reshape(4, cmid, cout_p).astype(jnp.bfloat16),
        "b2": b2p.reshape(1, cout_p).astype(jnp.float32),
    }


# ----------------------------------------------------------------------------
# Pure-JAX reference (same folded params, same bf16 matmul operands, same
# exact-sigmoid SiLU).  Output rounded to bf16 like the kernel's store.
# ----------------------------------------------------------------------------
def sppf_reference(params, x_nchw, *, cout, k=5):
    x = jnp.transpose(x_nchw, (0, 2, 3, 1)).astype(jnp.bfloat16)
    t = jnp.einsum("nhwc,cd->nhwd", x, params["w1"],
                   preferred_element_type=jnp.float32) + params["b1"][0]
    t = t * (1.0 / (1.0 + jnp.exp(-t)))

    def mp(z):
        return lax.reduce_window(z, -jnp.inf, lax.max,
                                 (1, k, k, 1), (1, 1, 1, 1), "SAME")

    y1 = mp(t)
    y2 = mp(y1)
    y3 = mp(y2)
    cat = jnp.concatenate([t, y1, y2, y3], axis=-1).astype(jnp.bfloat16)
    w2 = params["w2"].reshape(-1, params["w2"].shape[-1])
    z = jnp.einsum("nhwc,cd->nhwd", cat, w2,
                   preferred_element_type=jnp.float32) + params["b2"][0]
    z = z * (1.0 / (1.0 + jnp.exp(-z)))
    z = z[..., :cout].astype(jnp.bfloat16).astype(jnp.float32)
    return jnp.transpose(z, (0, 3, 1, 2))


# ----------------------------------------------------------------------------
if __name__ == "__main__":
    key = jax.random.PRNGKey(0)
    kp, kx, kp2, kx2 = jax.random.split(key, 4)
    fwd = jax.jit(sppf_apply, static_argnames=("cout", "k", "h_tile"))

    # Config 1: demo scale; padded Cout (64 -> 128 lanes), whole image fits one
    # pooling window (every h-tile window spans the full height).
    N, CIN, COUT, H, W, K = 2, 64, 64, 16, 16, 5
    params = init_sppf(kp, CIN, COUT, k=K)
    x = jax.random.normal(kx, (N, CIN, H, W), jnp.float32)
    out = fwd(params, x, cout=COUT, k=K, h_tile=4)
    jax.block_until_ready(out)
    assert out.shape == (N, COUT, H, W), out.shape
    assert bool(jnp.all(jnp.isfinite(out)))
    ref = sppf_reference(params, x, cout=COUT, k=K)
    assert bool(jnp.allclose(out, ref, atol=2e-2, rtol=2e-2)), \
        float(jnp.max(jnp.abs(out - ref)))

    # Config 2: exercises genuine H-tiling with halo windows smaller than the
    # image (clamped window starts) and an already-lane-dense Cout (no pad).
    N2, CIN2, COUT2, H2, W2 = 1, 64, 128, 32, 16
    params2 = init_sppf(kp2, CIN2, COUT2, k=K)
    x2 = jax.random.normal(kx2, (N2, CIN2, H2, W2), jnp.float32)
    out2 = fwd(params2, x2, cout=COUT2, k=K, h_tile=8)
    jax.block_until_ready(out2)
    assert out2.shape == (N2, COUT2, H2, W2), out2.shape
    assert bool(jnp.all(jnp.isfinite(out2)))
    ref2 = sppf_reference(params2, x2, cout=COUT2, k=K)
    assert bool(jnp.allclose(out2, ref2, atol=2e-2, rtol=2e-2)), \
        float(jnp.max(jnp.abs(out2 - ref2)))

    print("KERNEL_OK")
</pallas_src>

<mosaic_0001>
module attributes {stable_mosaic.version = 11 : i64} {
  func.func @sppf_kernel(%arg0: i32, %arg1: i32, %arg2: memref<1x16x16x64xbf16, #tpu.memory_space<vmem>>, %arg3: memref<64x32xbf16, #tpu.memory_space<vmem>>, %arg4: memref<1x32xf32, #tpu.memory_space<vmem>>, %arg5: memref<4x32x128xbf16, #tpu.memory_space<vmem>>, %arg6: memref<1x128xf32, #tpu.memory_space<vmem>>, %arg7: memref<1x4x16x128xbf16, #tpu.memory_space<vmem>>, %arg8: memref<20x20x32xbf16, #tpu.memory_space<vmem>>) attributes {dimension_semantics = [#tpu.dimension_semantics<parallel>, #tpu.dimension_semantics<parallel>], iteration_bounds = array<i64: 2, 4>, scalar_prefetch = 0 : i64, scratch_operands = 1 : i64, tpu.core_type = #tpu.core_type<tc>, window_params = [{transform_indices = @transform_0, window_bounds = array<i64: 1, 16, 16, 64>}, {pipeline_mode = #tpu.pipeline_mode<synchronous>, transform_indices = @transform_1, window_bounds = array<i64: 64, 32>}, {pipeline_mode = #tpu.pipeline_mode<synchronous>, transform_indices = @transform_2, window_bounds = array<i64: 1, 32>}, {pipeline_mode = #tpu.pipeline_mode<synchronous>, transform_indices = @transform_3, window_bounds = array<i64: 4, 32, 128>}, {pipeline_mode = #tpu.pipeline_mode<synchronous>, transform_indices = @transform_4, window_bounds = array<i64: 1, 128>}, {transform_indices = @transform_5, window_bounds = array<i64: 1, 4, 16, 128>}]} {
    %c4_i32 = arith.constant 4 : i32
    %0 = arith.muli %arg1, %c4_i32 : i32
    %c6_i32 = arith.constant 6 : i32
    %1 = arith.subi %0, %c6_i32 : i32
    %c0_i32 = arith.constant 0 : i32
    %2 = arith.maxsi %1, %c0_i32 : i32
    %c0_i32_0 = arith.constant 0 : i32
    %3 = arith.minsi %2, %c0_i32_0 : i32
    %c4_i32_1 = arith.constant 4 : i32
    %4 = arith.muli %arg1, %c4_i32_1 : i32
    %5 = arith.subi %4, %3 : i32
    %c0 = arith.constant 0 : index
    %6 = arith.index_cast %3 : i32 to index
    %c0_2 = arith.constant 0 : index
    %c0_3 = arith.constant 0 : index
    %7 = vector.load %arg2[%c0, %6, %c0_2, %c0_3] : memref<1x16x16x64xbf16, #tpu.memory_space<vmem>>, vector<1x16x16x64xbf16>
    %8 = vector.shape_cast %7 : vector<1x16x16x64xbf16> to vector<256x64xbf16>
    %c0_4 = arith.constant 0 : index
    %c0_5 = arith.constant 0 : index
    %9 = vector.load %arg3[%c0_4, %c0_5] : memref<64x32xbf16, #tpu.memory_space<vmem>>, vector<64x32xbf16>
    %cst = arith.constant dense<0.000000e+00> : vector<256x32xf32>
    %10 = tpu.matmul %8, %9, %cst {dimension_numbers = #tpu.dot_dimension_numbers<[1], [0], [0], [1], [0, 0, 1, 1], [], []>} : vector<256x64xbf16>, vector<64x32xbf16>, vector<256x32xf32> -> vector<256x32xf32>
    %c0_6 = arith.constant 0 : index
    %c0_7 = arith.constant 0 : index
    %11 = vector.load %arg4[%c0_6, %c0_7] : memref<1x32xf32, #tpu.memory_space<vmem>>, vector<1x32xf32>
    %12 = vector.broadcast %11 : vector<1x32xf32> to vector<256x32xf32>
    %13 = arith.addf %10, %12 : vector<256x32xf32>
    %cst_8 = arith.constant 0.000000e+00 : f32
    %14 = vector.broadcast %cst_8 : f32 to vector<256x32xf32>
    %15 = arith.subf %14, %13 : vector<256x32xf32>
    %16 = math.exp %15 : vector<256x32xf32>
    %cst_9 = arith.constant 1.000000e+00 : f32
    %17 = vector.broadcast %cst_9 : f32 to vector<256x32xf32>
    %18 = arith.addf %17, %16 : vector<256x32xf32>
    %cst_10 = arith.constant 1.000000e+00 : f32
    %19 = vector.broadcast %cst_10 : f32 to vector<256x32xf32>
    %20 = arith.divf %19, %18 : vector<256x32xf32>
    %21 = arith.mulf %13, %20 : vector<256x32xf32>
    %22 = arith.truncf %21 : vector<256x32xf32> to vector<256x32xbf16>
    %23 = vector.shape_cast %22 : vector<256x32xbf16> to vector<16x16x32xbf16>
    %cst_11 = arith.constant -1.000260e+30 : bf16
    %24 = vector.broadcast %cst_11 : bf16 to vector<2x20x32xbf16>
    %cst_12 = arith.constant -1.000260e+30 : bf16
    %25 = vector.broadcast %cst_12 : bf16 to vector<20x2x32xbf16>
    %c0_13 = arith.constant 0 : index
    %c0_14 = arith.constant 0 : index
    %c0_15 = arith.constant 0 : index
    %26 = vector.load %arg8[%c0_13, %c0_14, %c0_15] : memref<20x20x32xbf16, #tpu.memory_space<vmem>>, vector<2x20x32xbf16>
    tpu.vector_store %arg8[%c0_13, %c0_14, %c0_15], %24 {strides = array<i32>} : memref<20x20x32xbf16, #tpu.memory_space<vmem>>, vector<2x20x32xbf16>,
    %c18 = arith.constant 18 : index
    %c0_16 = arith.constant 0 : index
    %c0_17 = arith.constant 0 : index
    %27 = vector.load %arg8[%c18, %c0_16, %c0_17] : memref<20x20x32xbf16, #tpu.memory_space<vmem>>, vector<2x20x32xbf16>
    tpu.vector_store %arg8[%c18, %c0_16, %c0_17], %24 {strides = array<i32>} : memref<20x20x32xbf16, #tpu.memory_space<vmem>>, vector<2x20x32xbf16>,
    %c0_18 = arith.constant 0 : index
    %c0_19 = arith.constant 0 : index
    %c0_20 = arith.constant 0 : index
    %28 = vector.load %arg8[%c0_18, %c0_19, %c0_20] : memref<20x20x32xbf16, #tpu.memory_space<vmem>>, vector<20x2x32xbf16>
    tpu.vector_store %arg8[%c0_18, %c0_19, %c0_20], %25 {strides = array<i32>} : memref<20x20x32xbf16, #tpu.memory_space<vmem>>, vector<20x2x32xbf16>,
    %c0_21 = arith.constant 0 : index
    %c18_22 = arith.constant 18 : index
    %c0_23 = arith.constant 0 : index
    %29 = vector.load %arg8[%c0_21, %c18_22, %c0_23] : memref<20x20x32xbf16, #tpu.memory_space<vmem>>, vector<20x2x32xbf16>
    tpu.vector_store %arg8[%c0_21, %c18_22, %c0_23], %25 {strides = array<i32>} : memref<20x20x32xbf16, #tpu.memory_space<vmem>>, vector<20x2x32xbf16>,
    %cst_24 = arith.constant 0.000000e+00 : f32
    %30 = vector.broadcast %cst_24 : f32 to vector<64x128xf32>
    %c2 = arith.constant 2 : index
    %c2_25 = arith.constant 2 : index
    %c0_26 = arith.constant 0 : index
    %31 = vector.load %arg8[%c2, %c2_25, %c0_26] : memref<20x20x32xbf16, #tpu.memory_space<vmem>>, vector<16x16x32xbf16>
    tpu.vector_store %arg8[%c2, %c2_25, %c0_26], %23 {strides = array<i32>} : memref<20x20x32xbf16, #tpu.memory_space<vmem>>, vector<16x16x32xbf16>,
    %c2_i32 = arith.constant 2 : i32
    %32 = arith.addi %c2_i32, %5 : i32
    %33 = arith.index_cast %32 : i32 to index
    %c2_27 = arith.constant 2 : index
    %c0_28 = arith.constant 0 : index
    %34 = vector.load %arg8[%33, %c2_27, %c0_28] : memref<20x20x32xbf16, #tpu.memory_space<vmem>>, vector<4x16x32xbf16>
    %35 = vector.shape_cast %34 : vector<4x16x32xbf16> to vector<64x32xbf16>
    %c0_29 = arith.constant 0 : index
    %c0_30 = arith.constant 0 : index
    %c0_31 = arith.constant 0 : index
    %36 = vector.load %arg5[%c0_29, %c0_30, %c0_31] : memref<4x32x128xbf16, #tpu.memory_space<vmem>>, vector<1x32x128xbf16>
    %37 = vector.shape_cast %36 : vector<1x32x128xbf16> to vector<32x128xbf16>
    %cst_32 = arith.constant dense<0.000000e+00> : vector<64x128xf32>
    %38 = tpu.matmul %35, %37, %cst_32 {dimension_numbers = #tpu.dot_dimension_numbers<[1], [0], [0], [1], [0, 0, 1, 1], [], []>} : vector<64x32xbf16>, vector<32x128xbf16>, vector<64x128xf32> -> vector<64x128xf32>
    %39 = arith.addf %30, %38 : vector<64x128xf32>
    %c0_33 = arith.constant 0 : index
    %c0_34 = arith.constant 0 : index
    %c0_35 = arith.constant 0 : index
    %40 = vector.load %arg8[%c0_33, %c0_34, %c0_35] : memref<20x20x32xbf16, #tpu.memory_space<vmem>>, vector<20x20x32xbf16>
    %41 = vector.extract_strided_slice %40 {offsets = [0, 0, 0], sizes = [16, 20, 32], strides = [1, 1, 1]} : vector<20x20x32xbf16> to vector<16x20x32xbf16>
    %42 = vector.extract_strided_slice %40 {offsets = [1, 0, 0], sizes = [16, 20, 32], strides = [1, 1, 1]} : vector<20x20x32xbf16> to vector<16x20x32xbf16>
    %43 = arith.maximumf %41, %42 : vector<16x20x32xbf16>
    %44 = vector.extract_strided_slice %40 {offsets = [2, 0, 0], sizes = [16, 20, 32], strides = [1, 1, 1]} : vector<20x20x32xbf16> to vector<16x20x32xbf16>
    %45 = arith.maximumf %43, %44 : vector<16x20x32xbf16>
    %46 = vector.extract_strided_slice %40 {offsets = [3, 0, 0], sizes = [16, 20, 32], strides = [1, 1, 1]} : vector<20x20x32xbf16> to vector<16x20x32xbf16>
    %47 = arith.maximumf %45, %46 : vector<16x20x32xbf16>
    %48 = vector.extract_strided_slice %40 {offsets = [4, 0, 0], sizes = [16, 20, 32], strides = [1, 1, 1]} : vector<20x20x32xbf16> to vector<16x20x32xbf16>
    %49 = arith.maximumf %47, %48 : vector<16x20x32xbf16>
    %50 = vector.extract_strided_slice %49 {offsets = [0, 0, 0], sizes = [16, 16, 32], strides = [1, 1, 1]} : vector<16x20x32xbf16> to vector<16x16x32xbf16>
    %51 = vector.extract_strided_slice %49 {offsets = [0, 1, 0], sizes = [16, 16, 32], strides = [1, 1, 1]} : vector<16x20x32xbf16> to vector<16x16x32xbf16>
    %52 = arith.maximumf %50, %51 : vector<16x16x32xbf16>
    %53 = vector.extract_strided_slice %49 {offsets = [0, 2, 0], sizes = [16, 16, 32], strides = [1, 1, 1]} : vector<16x20x32xbf16> to vector<16x16x32xbf16>
    %54 = arith.maximumf %52, %53 : vector<16x16x32xbf16>
    %55 = vector.extract_strided_slice %49 {offsets = [0, 3, 0], sizes = [16, 16, 32], strides = [1, 1, 1]} : vector<16x20x32xbf16> to vector<16x16x32xbf16>
    %56 = arith.maximumf %54, %55 : vector<16x16x32xbf16>
    %57 = vector.extract_strided_slice %49 {offsets = [0, 4, 0], sizes = [16, 16, 32], strides = [1, 1, 1]} : vector<16x20x32xbf16> to vector<16x16x32xbf16>
    %58 = arith.maximumf %56, %57 : vector<16x16x32xbf16>
    %c2_36 = arith.constant 2 : index
    %c2_37 = arith.constant 2 : index
    %c0_38 = arith.constant 0 : index
    %59 = vector.load %arg8[%c2_36, %c2_37, %c0_38] : memref<20x20x32xbf16, #tpu.memory_space<vmem>>, vector<16x16x32xbf16>
    tpu.vector_store %arg8[%c2_36, %c2_37, %c0_38], %58 {strides = array<i32>} : memref<20x20x32xbf16, #tpu.memory_space<vmem>>, vector<16x16x32xbf16>,
    %c2_i32_39 = arith.constant 2 : i32
    %60 = arith.addi %c2_i32_39, %5 : i32
    %61 = arith.index_cast %60 : i32 to index
    %c2_40 = arith.constant 2 : index
    %c0_41 = arith.constant 0 : index
    %62 = vector.load %arg8[%61, %c2_40, %c0_41] : memref<20x20x32xbf16, #tpu.memory_space<vmem>>, vector<4x16x32xbf16>
    %63 = vector.shape_cast %62 : vector<4x16x32xbf16> to vector<64x32xbf16>
    %c1 = arith.constant 1 : index
    %c0_42 = arith.constant 0 : index
    %c0_43 = arith.constant 0 : index
    %64 = vector.load %arg5[%c1, %c0_42, %c0_43] : memref<4x32x128xbf16, #tpu.memory_space<vmem>>, vector<1x32x128xbf16>
    %65 = vector.shape_cast %64 : vector<1x32x128xbf16> to vector<32x128xbf16>
    %cst_44 = arith.constant dense<0.000000e+00> : vector<64x128xf32>
    %66 = tpu.matmul %63, %65, %cst_44 {dimension_numbers = #tpu.dot_dimension_numbers<[1], [0], [0], [1], [0, 0, 1, 1], [], []>} : vector<64x32xbf16>, vector<32x128xbf16>, vector<64x128xf32> -> vector<64x128xf32>
    %67 = arith.addf %39, %66 : vector<64x128xf32>
    %c0_45 = arith.constant 0 : index
    %c0_46 = arith.constant 0 : index
    %c0_47 = arith.constant 0 : index
    %68 = vector.load %arg8[%c0_45, %c0_46, %c0_47] : memref<20x20x32xbf16, #tpu.memory_space<vmem>>, vector<20x20x32xbf16>
    %69 = vector.extract_strided_slice %68 {offsets = [0, 0, 0], sizes = [16, 20, 32], strides = [1, 1, 1]} : vector<20x20x32xbf16> to vector<16x20x32xbf16>
    %70 = vector.extract_strided_slice %68 {offsets = [1, 0, 0], sizes = [16, 20, 32], strides = [1, 1, 1]} : vector<20x20x32xbf16> to vector<16x20x32xbf16>
    %71 = arith.maximumf %69, %70 : vector<16x20x32xbf16>
    %72 = vector.extract_strided_slice %68 {offsets = [2, 0, 0], sizes = [16, 20, 32], strides = [1, 1, 1]} : vector<20x20x32xbf16> to vector<16x20x32xbf16>
    %73 = arith.maximumf %71, %72 : vector<16x20x32xbf16>
    %74 = vector.extract_strided_slice %68 {offsets = [3, 0, 0], sizes = [16, 20, 32], strides = [1, 1, 1]} : vector<20x20x32xbf16> to vector<16x20x32xbf16>
    %75 = arith.maximumf %73, %74 : vector<16x20x32xbf16>
    %76 = vector.extract_strided_slice %68 {offsets = [4, 0, 0], sizes = [16, 20, 32], strides = [1, 1, 1]} : vector<20x20x32xbf16> to vector<16x20x32xbf16>
    %77 = arith.maximumf %75, %76 : vector<16x20x32xbf16>
    %78 = vector.extract_strided_slice %77 {offsets = [0, 0, 0], sizes = [16, 16, 32], strides = [1, 1, 1]} : vector<16x20x32xbf16> to vector<16x16x32xbf16>
    %79 = vector.extract_strided_slice %77 {offsets = [0, 1, 0], sizes = [16, 16, 32], strides = [1, 1, 1]} : vector<16x20x32xbf16> to vector<16x16x32xbf16>
    %80 = arith.maximumf %78, %79 : vector<16x16x32xbf16>
    %81 = vector.extract_strided_slice %77 {offsets = [0, 2, 0], sizes = [16, 16, 32], strides = [1, 1, 1]} : vector<16x20x32xbf16> to vector<16x16x32xbf16>
    %82 = arith.maximumf %80, %81 : vector<16x16x32xbf16>
    %83 = vector.extract_strided_slice %77 {offsets = [0, 3, 0], sizes = [16, 16, 32], strides = [1, 1, 1]} : vector<16x20x32xbf16> to vector<16x16x32xbf16>
    %84 = arith.maximumf %82, %83 : vector<16x16x32xbf16>
    %85 = vector.extract_strided_slice %77 {offsets = [0, 4, 0], sizes = [16, 16, 32], strides = [1, 1, 1]} : vector<16x20x32xbf16> to vector<16x16x32xbf16>
    %86 = arith.maximumf %84, %85 : vector<16x16x32xbf16>
    %c2_48 = arith.constant 2 : index
    %c2_49 = arith.constant 2 : index
    %c0_50 = arith.constant 0 : index
    %87 = vector.load %arg8[%c2_48, %c2_49, %c0_50] : memref<20x20x32xbf16, #tpu.memory_space<vmem>>, vector<16x16x32xbf16>
    tpu.vector_store %arg8[%c2_48, %c2_49, %c0_50], %86 {strides = array<i32>} : memref<20x20x32xbf16, #tpu.memory_space<vmem>>, vector<16x16x32xbf16>,
    %c2_i32_51 = arith.constant 2 : i32
    %88 = arith.addi %c2_i32_51, %5 : i32
    %89 = arith.index_cast %88 : i32 to index
    %c2_52 = arith.constant 2 : index
    %c0_53 = arith.constant 0 : index
    %90 = vector.load %arg8[%89, %c2_52, %c0_53] : memref<20x20x32xbf16, #tpu.memory_space<vmem>>, vector<4x16x32xbf16>
    %91 = vector.shape_cast %90 : vector<4x16x32xbf16> to vector<64x32xbf16>
    %c2_54 = arith.constant 2 : index
    %c0_55 = arith.constant 0 : index
    %c0_56 = arith.constant 0 : index
    %92 = vector.load %arg5[%c2_54, %c0_55, %c0_56] : memref<4x32x128xbf16, #tpu.memory_space<vmem>>, vector<1x32x128xbf16>
    %93 = vector.shape_cast %92 : vector<1x32x128xbf16> to vector<32x128xbf16>
    %cst_57 = arith.constant dense<0.000000e+00> : vector<64x128xf32>
    %94 = tpu.matmul %91, %93, %cst_57 {dimension_numbers = #tpu.dot_dimension_numbers<[1], [0], [0], [1], [0, 0, 1, 1], [], []>} : vector<64x32xbf16>, vector<32x128xbf16>, vector<64x128xf32> -> vector<64x128xf32>
    %95 = arith.addf %67, %94 : vector<64x128xf32>
    %c0_58 = arith.constant 0 : index
    %c0_59 = arith.constant 0 : index
    %c0_60 = arith.constant 0 : index
    %96 = vector.load %arg8[%c0_58, %c0_59, %c0_60] : memref<20x20x32xbf16, #tpu.memory_space<vmem>>, vector<20x20x32xbf16>
    %97 = vector.extract_strided_slice %96 {offsets = [0, 0, 0], sizes = [16, 20, 32], strides = [1, 1, 1]} : vector<20x20x32xbf16> to vector<16x20x32xbf16>
    %98 = vector.extract_strided_slice %96 {offsets = [1, 0, 0], sizes = [16, 20, 32], strides = [1, 1, 1]} : vector<20x20x32xbf16> to vector<16x20x32xbf16>
    %99 = arith.maximumf %97, %98 : vector<16x20x32xbf16>
    %100 = vector.extract_strided_slice %96 {offsets = [2, 0, 0], sizes = [16, 20, 32], strides = [1, 1, 1]} : vector<20x20x32xbf16> to vector<16x20x32xbf16>
    %101 = arith.maximumf %99, %100 : vector<16x20x32xbf16>
    %102 = vector.extract_strided_slice %96 {offsets = [3, 0, 0], sizes = [16, 20, 32], strides = [1, 1, 1]} : vector<20x20x32xbf16> to vector<16x20x32xbf16>
    %103 = arith.maximumf %101, %102 : vector<16x20x32xbf16>
    %104 = vector.extract_strided_slice %96 {offsets = [4, 0, 0], sizes = [16, 20, 32], strides = [1, 1, 1]} : vector<20x20x32xbf16> to vector<16x20x32xbf16>
    %105 = arith.maximumf %103, %104 : vector<16x20x32xbf16>
    %106 = vector.extract_strided_slice %105 {offsets = [0, 0, 0], sizes = [16, 16, 32], strides = [1, 1, 1]} : vector<16x20x32xbf16> to vector<16x16x32xbf16>
    %107 = vector.extract_strided_slice %105 {offsets = [0, 1, 0], sizes = [16, 16, 32], strides = [1, 1, 1]} : vector<16x20x32xbf16> to vector<16x16x32xbf16>
    %108 = arith.maximumf %106, %107 : vector<16x16x32xbf16>
    %109 = vector.extract_strided_slice %105 {offsets = [0, 2, 0], sizes = [16, 16, 32], strides = [1, 1, 1]} : vector<16x20x32xbf16> to vector<16x16x32xbf16>
    %110 = arith.maximumf %108, %109 : vector<16x16x32xbf16>
    %111 = vector.extract_strided_slice %105 {offsets = [0, 3, 0], sizes = [16, 16, 32], strides = [1, 1, 1]} : vector<16x20x32xbf16> to vector<16x16x32xbf16>
    %112 = arith.maximumf %110, %111 : vector<16x16x32xbf16>
    %113 = vector.extract_strided_slice %105 {offsets = [0, 4, 0], sizes = [16, 16, 32], strides = [1, 1, 1]} : vector<16x20x32xbf16> to vector<16x16x32xbf16>
    %114 = arith.maximumf %112, %113 : vector<16x16x32xbf16>
    %c2_61 = arith.constant 2 : index
    %c2_62 = arith.constant 2 : index
    %c0_63 = arith.constant 0 : index
    %115 = vector.load %arg8[%c2_61, %c2_62, %c0_63] : memref<20x20x32xbf16, #tpu.memory_space<vmem>>, vector<16x16x32xbf16>
    tpu.vector_store %arg8[%c2_61, %c2_62, %c0_63], %114 {strides = array<i32>} : memref<20x20x32xbf16, #tpu.memory_space<vmem>>, vector<16x16x32xbf16>,
    %c2_i32_64 = arith.constant 2 : i32
    %116 = arith.addi %c2_i32_64, %5 : i32
    %117 = arith.index_cast %116 : i32 to index
    %c2_65 = arith.constant 2 : index
    %c0_66 = arith.constant 0 : index
    %118 = vector.load %arg8[%117, %c2_65, %c0_66] : memref<20x20x32xbf16, #tpu.memory_space<vmem>>, vector<4x16x32xbf16>
    %119 = vector.shape_cast %118 : vector<4x16x32xbf16> to vector<64x32xbf16>
    %c3 = arith.constant 3 : index
    %c0_67 = arith.constant 0 : index
    %c0_68 = arith.constant 0 : index
    %120 = vector.load %arg5[%c3, %c0_67, %c0_68] : memref<4x32x128xbf16, #tpu.memory_space<vmem>>, vector<1x32x128xbf16>
    %121 = vector.shape_cast %120 : vector<1x32x128xbf16> to vector<32x128xbf16>
    %cst_69 = arith.constant dense<0.000000e+00> : vector<64x128xf32>
    %122 = tpu.matmul %119, %121, %cst_69 {dimension_numbers = #tpu.dot_dimension_numbers<[1], [0], [0], [1], [0, 0, 1, 1], [], []>} : vector<64x32xbf16>, vector<32x128xbf16>, vector<64x128xf32> -> vector<64x128xf32>
    %123 = arith.addf %95, %122 : vector<64x128xf32>
    %c0_70 = arith.constant 0 : index
    %c0_71 = arith.constant 0 : index
    %124 = vector.load %arg6[%c0_70, %c0_71] : memref<1x128xf32, #tpu.memory_space<vmem>>, vector<1x128xf32>
    %125 = vector.broadcast %124 : vector<1x128xf32> to vector<64x128xf32>
    %126 = arith.addf %123, %125 : vector<64x128xf32>
    %cst_72 = arith.constant 0.000000e+00 : f32
    %127 = vector.broadcast %cst_72 : f32 to vector<64x128xf32>
    %128 = arith.subf %127, %126 : vector<64x128xf32>
    %129 = math.exp %128 : vector<64x128xf32>
    %cst_73 = arith.constant 1.000000e+00 : f32
    %130 = vector.broadcast %cst_73 : f32 to vector<64x128xf32>
    %131 = arith.addf %130, %129 : vector<64x128xf32>
    %cst_74 = arith.constant 1.000000e+00 : f32
    %132 = vector.broadcast %cst_74 : f32 to vector<64x128xf32>
    %133 = arith.divf %132, %131 : vector<64x128xf32>
    %134 = arith.mulf %126, %133 : vector<64x128xf32>
    %135 = vector.shape_cast %134 : vector<64x128xf32> to vector<4x16x128xf32>
    %136 = arith.truncf %135 : vector<4x16x128xf32> to vector<4x16x128xbf16>
    %c0_75 = arith.constant 0 : index
    %c0_76 = arith.constant 0 : index
    %c0_77 = arith.constant 0 : index
    %c0_78 = arith.constant 0 : index
    %137 = vector.load %arg7[%c0_75, %c0_76, %c0_77, %c0_78] : memref<1x4x16x128xbf16, #tpu.memory_space<vmem>>, vector<1x4x16x128xbf16>
    %138 = vector.shape_cast %137 : vector<1x4x16x128xbf16> to vector<4x16x128xbf16>
    %139 = vector.shape_cast %136 : vector<4x16x128xbf16> to vector<1x4x16x128xbf16>
    tpu.vector_store %arg7[%c0_75, %c0_76, %c0_77, %c0_78], %139 {strides = array<i32>} : memref<1x4x16x128xbf16, #tpu.memory_space<vmem>>, vector<1x4x16x128xbf16>,
    return
  }
  func.func @transform_0(%arg0: i32, %arg1: i32) -> (i32, i32, i32, i32) {
    %c0_i32 = arith.constant 0 : i32
    %c0_i32_0 = arith.constant 0 : i32
    %c0_i32_1 = arith.constant 0 : i32
    %c0_i32_2 = arith.constant 0 : i32
    return %arg0, %c0_i32, %c0_i32_0, %c0_i32_1 : i32, i32, i32, i32
  }
  func.func @transform_1(%arg0: i32, %arg1: i32) -> (i32, i32) {
    %c0_i32 = arith.constant 0 : i32
    %c0_i32_0 = arith.constant 0 : i32
    %c0_i32_1 = arith.constant 0 : i32
    return %c0_i32, %c0_i32_0 : i32, i32
  }
  func.func @transform_2(%arg0: i32, %arg1: i32) -> (i32, i32) {
    %c0_i32 = arith.constant 0 : i32
    %c0_i32_0 = arith.constant 0 : i32
    %c0_i32_1 = arith.constant 0 : i32
    return %c0_i32, %c0_i32_0 : i32, i32
  }
  func.func @transform_3(%arg0: i32, %arg1: i32) -> (i32, i32, i32) {
    %c0_i32 = arith.constant 0 : i32
    %c0_i32_0 = arith.constant 0 : i32
    %c0_i32_1 = arith.constant 0 : i32
    %c0_i32_2 = arith.constant 0 : i32
    return %c0_i32, %c0_i32_0, %c0_i32_1 : i32, i32, i32
  }
  func.func @transform_4(%arg0: i32, %arg1: i32) -> (i32, i32) {
    %c0_i32 = arith.constant 0 : i32
    %c0_i32_0 = arith.constant 0 : i32
    %c0_i32_1 = arith.constant 0 : i32
    return %c0_i32, %c0_i32_0 : i32, i32
  }
  func.func @transform_5(%arg0: i32, %arg1: i32) -> (i32, i32, i32, i32) {
    %c0_i32 = arith.constant 0 : i32
    %c0_i32_0 = arith.constant 0 : i32
    %c0_i32_1 = arith.constant 0 : i32
    return %arg0, %arg1, %c0_i32, %c0_i32_0 : i32, i32, i32, i32
  }
}

</mosaic_0001>

<llo_original>
// kernel: sppf_apply.1
$region0: #{sppf_apply.1}
  #allocation0 [shape = 'u32[]', space=smem, size = 0x4, offset = 0x4, fixed_abs, tag = 'smem constant byte address 0x4 - core index']
  #allocation1 [shape = 'u32[144,128]{1,0:T(1,128)}', space=vmem, size = 0x12000, scoped, tag = 'internal scratch']
  #allocation2 [shape = 'bf16[20,20,32]{2,1,0:T(8,128)(2,1)}', space=vmem, size = 0x1e000, scoped, tag = 'scratch operand']
  %s0 = inlined_call_operand.vmem [shape: bf16[2,16,16,64], index: 0, kind: input, shape index: {}]
  %s1 = inlined_call_operand.vmem [shape: bf16[64,32], index: 1, kind: input, shape index: {}]
  %s2 = inlined_call_operand.vmem [shape: f32[1,32], index: 2, kind: input, shape index: {}]
  %s3 = inlined_call_operand.vmem [shape: bf16[4,32,128], index: 3, kind: input, shape index: {}]
  %s4 = inlined_call_operand.vmem [shape: f32[1,128], index: 4, kind: input, shape index: {}]
  %s5 = inlined_call_operand.vmem [shape: bf16[2,16,16,128], index: 5, kind: output, shape index: {}]
  %s6 = sld [smem:[#allocation0]]
  $region53: #{sppf_apply.1} parent=0
    _
  %s8 = ssub.s32 1, %s6
  %s9 = scalar_select 0, %s8, %s6
  loop: start=0, step=1, limit=10
  $region2: #{sppf_apply.1} parent=0 // loop_pre_header
    _
  $region3: #{sppf_apply.1} parent=0 // loop_header
    %s11 = sphi 0, %s15
    %p12 = scmp.ge.s32.totalorder %s11, 10
    %s18 = sphi 0, %s30
    %s19 = sphi 0, %s26
    %s20 = sphi 0, %s18
    %s21 = sphi 0, %s19
    %s22 = sphi 0, %s20
    %s23 = sphi 0, %s21
    %s33 = sphi 0, %s35
    %s36 = sphi 0, %s33
    %s37 = sphi 0, %s36
    %s53 = sphi 0, %s37
    %s57 = sphi 0, %s57
    %s59 = sphi 0, %s57
    %s60 = sphi 0, %s59
    %s74 = sphi 0, %s60
    %s78 = sphi 0, %s78
    %s80 = sphi 0, %s78
    %s81 = sphi 0, %s80
    %s95 = sphi 0, %s81
    %s99 = sphi 0, %s99
    %s101 = sphi 0, %s99
    %s102 = sphi 0, %s101
    %s116 = sphi 0, %s102
    %s120 = sphi 0, %s120
    %s122 = sphi 0, %s120
    %s123 = sphi 0, %s122
    %s137 = sphi 0, %s123
    %s145 = sphi 0, %s147
    %s148 = sphi 0, %s145
    %s149 = sphi 0, %s148
    %s165 = sphi 0, %s149
  $region4: #{sppf_apply.1} parent=0 // loop_header_branch
    %14 = sbr.rel (%p12) target = $region8
  $region5: #{sppf_apply.1} parent=0 // loop_body
    %s16 = ssub.s32 %s11, 1
    %s17 = ssub.s32 %s11, 2
    %s24 = sadd.s32 1, %s19
    %p25 = scmp.ge.s32.totalorder %s24, 4
    %s26 = scalar_select %p25, 0, %s24
    %s27 = sadd.s32 1, %s18
    %s28 = scalar_select %p25, %s27, %s18
    %p29 = scmp.ge.s32.totalorder %s28, 2
    %s30 = scalar_select %p29, 0, %s28
    %s31 = ssub.s32 %s18, %s30
    %p32 = scmp.eq.s32.totalorder %s31, 0
    %s34 = sadd.s32 %s33, 1
    %s35 = scalar_select %p32, %s33, %s34
    %p38 = pneg %p32
    %p39 = scmp.eq.s32.totalorder %s11, 7
    %p40 = por %p38, %p39
    %p41 = scmp.ne.s32.totalorder %s33, %s36
    %p42 = scmp.eq.s32.totalorder %s11, 0
    %p43 = por %p41, %p42
    %p44 = scmp.ne.s32.totalorder %s33, %s36
    %p45 = scmp.eq.s32.totalorder %s16, 7
    %p46 = por %p44, %p45
    %p47 = scmp.ne.s32.totalorder %s36, %s37
    %p48 = scmp.eq.s32.totalorder %s16, 0
    %p49 = por %p47, %p48
    %p50 = scmp.ne.s32.totalorder %s36, %s37
    %p51 = scmp.eq.s32.totalorder %s17, 7
    %p52 = por %p50, %p51
    %p54 = scmp.ne.s32.totalorder %s37, %s53
    %p55 = scmp.eq.s32.totalorder %s17, 0
    %p56 = por %p54, %p55
    %s58 = sadd.s32 %s57, 1
    %p61 = scmp.eq.s32.totalorder %s11, 7
    %p62 = scmp.ne.s32.totalorder %s57, %s59
    %p63 = scmp.eq.s32.totalorder %s11, 0
    %p64 = por %p62, %p63
    %p65 = scmp.ne.s32.totalorder %s57, %s59
    %p66 = scmp.eq.s32.totalorder %s16, 7
    %p67 = por %p65, %p66
    %p68 = scmp.ne.s32.totalorder %s59, %s60
    %p69 = scmp.eq.s32.totalorder %s16, 0
    %p70 = por %p68, %p69
    %p71 = scmp.ne.s32.totalorder %s59, %s60
    %p72 = scmp.eq.s32.totalorder %s17, 7
    %p73 = por %p71, %p72
    %p75 = scmp.ne.s32.totalorder %s60, %s74
    %p76 = scmp.eq.s32.totalorder %s17, 0
    %p77 = por %p75, %p76
    %s79 = sadd.s32 %s78, 1
    %p82 = scmp.eq.s32.totalorder %s11, 7
    %p83 = scmp.ne.s32.totalorder %s78, %s80
    %p84 = scmp.eq.s32.totalorder %s11, 0
    %p85 = por %p83, %p84
    %p86 = scmp.ne.s32.totalorder %s78, %s80
    %p87 = scmp.eq.s32.totalorder %s16, 7
    %p88 = por %p86, %p87
    %p89 = scmp.ne.s32.totalorder %s80, %s81
    %p90 = scmp.eq.s32.totalorder %s16, 0
    %p91 = por %p89, %p90
    %p92 = scmp.ne.s32.totalorder %s80, %s81
    %p93 = scmp.eq.s32.totalorder %s17, 7
    %p94 = por %p92, %p93
    %p96 = scmp.ne.s32.totalorder %s81, %s95
    %p97 = scmp.eq.s32.totalorder %s17, 0
    %p98 = por %p96, %p97
    %s100 = sadd.s32 %s99, 1
    %p103 = scmp.eq.s32.totalorder %s11, 7
    %p104 = scmp.ne.s32.totalorder %s99, %s101
    %p105 = scmp.eq.s32.totalorder %s11, 0
    %p106 = por %p104, %p105
    %p107 = scmp.ne.s32.totalorder %s99, %s101
    %p108 = scmp.eq.s32.totalorder %s16, 7
    %p109 = por %p107, %p108
    %p110 = scmp.ne.s32.totalorder %s101, %s102
    %p111 = scmp.eq.s32.totalorder %s16, 0
    %p112 = por %p110, %p111
    %p113 = scmp.ne.s32.totalorder %s101, %s102
    %p114 = scmp.eq.s32.totalorder %s17, 7
    %p115 = por %p113, %p114
    %p117 = scmp.ne.s32.totalorder %s102, %s116
    %p118 = scmp.eq.s32.totalorder %s17, 0
    %p119 = por %p117, %p118
    %s121 = sadd.s32 %s120, 1
    %p124 = scmp.eq.s32.totalorder %s11, 7
    %p125 = scmp.ne.s32.totalorder %s120, %s122
    %p126 = scmp.eq.s32.totalorder %s11, 0
    %p127 = por %p125, %p126
    %p128 = scmp.ne.s32.totalorder %s120, %s122
    %p129 = scmp.eq.s32.totalorder %s16, 7
    %p130 = por %p128, %p129
    %p131 = scmp.ne.s32.totalorder %s122, %s123
    %p132 = scmp.eq.s32.totalorder %s16, 0
    %p133 = por %p131, %p132
    %p134 = scmp.ne.s32.totalorder %s122, %s123
    %p135 = scmp.eq.s32.totalorder %s17, 7
    %p136 = por %p134, %p135
    %p138 = scmp.ne.s32.totalorder %s123, %s137
    %p139 = scmp.eq.s32.totalorder %s17, 0
    %p140 = por %p138, %p139
    %s141 = ssub.s32 %s18, %s30
    %s142 = ssub.s32 %s19, %s26
    %s143 = sor.u32 %s141, %s142
    %p144 = scmp.eq.s32.totalorder %s143, 0
    %s146 = sadd.s32 %s145, 1
    %s147 = scalar_select %p144, %s145, %s146
    %p150 = pneg %p144
    %p151 = scmp.eq.s32.totalorder %s11, 7
    %p152 = por %p150, %p151
    %p153 = scmp.ne.s32.totalorder %s145, %s148
    %p154 = scmp.eq.s32.totalorder %s11, 0
    %p155 = por %p153, %p154
    %p156 = scmp.ne.s32.totalorder %s145, %s148
    %p157 = scmp.eq.s32.totalorder %s16, 7
    %p158 = por %p156, %p157
    %p159 = scmp.ne.s32.totalorder %s148, %s149
    %p160 = scmp.eq.s32.totalorder %s16, 0
    %p161 = por %p159, %p160
    %p162 = scmp.ne.s32.totalorder %s148, %s149
    %p163 = scmp.eq.s32.totalorder %s17, 7
    %p164 = por %p162, %p163
    %p166 = scmp.ne.s32.totalorder %s149, %s165
    %p167 = scmp.eq.s32.totalorder %s17, 0
    %p168 = por %p166, %p167
    %p169 = scmp.le.s32.totalorder 1, %s11
    %p170 = scmp.lt.s32.totalorder %s11, 9
    %p171 = pnand %p169, %p170
    %p172 = pneg %p171
    // Predicated region
    $region9: #{sppf_apply.1} parent=5 // pred_check
      _
    $region10: #{sppf_apply.1} parent=5 // pred_check_branch
      %174 = sbr.rel (%p171) target = $region12
    $region11: #{sppf_apply.1} parent=5 // pred_region
      %s175 = ssub.s32 %s11, 1
      // Predicated region
      $region13: #{sppf_apply.1} parent=11 // pred_check
        %p176 = pneg %p70
      $region14: #{sppf_apply.1} parent=11 // pred_check_branch
        %178 = sbr.rel (%p176) target = $region16
      $region15: #{sppf_apply.1} parent=11 // pred_region
        _
      $region16: #{sppf_apply.1} parent=11 // pred_fallthru
        _
      // Predicated region
      $region17: #{sppf_apply.1} parent=11 // pred_check
        %p179 = pneg %p91
      $region18: #{sppf_apply.1} parent=11 // pred_check_branch
        %181 = sbr.rel (%p179) target = $region20
      $region19: #{sppf_apply.1} parent=11 // pred_region
        _
      $region20: #{sppf_apply.1} parent=11 // pred_fallthru
        _
      // Predicated region
      $region21: #{sppf_apply.1} parent=11 // pred_check
        %p182 = pneg %p112
      $region22: #{sppf_apply.1} parent=11 // pred_check_branch
        %184 = sbr.rel (%p182) target = $region24
      $region23: #{sppf_apply.1} parent=11 // pred_region
        _
      $region24: #{sppf_apply.1} parent=11 // pred_fallthru
        _
      // Predicated region
      $region25: #{sppf_apply.1} parent=11 // pred_check
        %p185 = pneg %p133
      $region26: #{sppf_apply.1} parent=11 // pred_check_branch
        %187 = sbr.rel (%p185) target = $region28
      $region27: #{sppf_apply.1} parent=11 // pred_region
        _
      $region28: #{sppf_apply.1} parent=11 // pred_fallthru
        _
    $region12: #{sppf_apply.1} parent=5 // pred_fallthru
      _
    %p188 = scmp.lt.s32.totalorder %s11, 8
    // Predicated region
    $region29: #{sppf_apply.1} parent=5 // pred_check
      %p189 = pneg %p188
    $region30: #{sppf_apply.1} parent=5 // pred_check_branch
      %191 = sbr.rel (%p189) target = $region32
    $region31: #{sppf_apply.1} parent=5 // pred_region
      // Predicated region
      $region33: #{sppf_apply.1} parent=31 // pred_check
        %p192 = pneg %p43
      $region34: #{sppf_apply.1} parent=31 // pred_check_branch
        %194 = sbr.rel (%p192) target = $region36
      $region35: #{sppf_apply.1} parent=31 // pred_region
        %p195 = scmp.lt.s32.totalorder %s18, 1
        %s196 = scalar_select %p195, %s18, 1
        %s197 = smul.addr %s196, 32
        %s198 = smul.addr %s197, 4
        %s199 = scalar_lea.vmem %s0, %s198
      $region36: #{sppf_apply.1} parent=31 // pred_fallthru
        _
    $region32: #{sppf_apply.1} parent=5 // pred_fallthru
      _
    %p200 = scmp.le.s32.totalorder 1, %s11
    %p201 = scmp.lt.s32.totalorder %s11, 9
    %p202 = pnand %p200, %p201
    %p203 = pneg %p202
    // Predicated region
    $region37: #{sppf_apply.1} parent=5 // pred_check
      _
    $region38: #{sppf_apply.1} parent=5 // pred_check_branch
      %205 = sbr.rel (%p202) target = $region40
    $region39: #{sppf_apply.1} parent=5 // pred_region
      %s206 = ssub.s32 %s11, 1
      %p207 = scmp.lt.s32.totalorder %s20, 1
      %s208 = scalar_select %p207, %s20, 1
      %s209 = smul.addr %s208, 32
      %s210 = smul.addr %s209, 4
      %s211 = scalar_lea.vmem %s0, %s210
      %p212 = pneg %p49
      %p213 = pneg %p46
      %p214 = pneg %p70
      %p215 = pneg %p67
      %p216 = pneg %p91
      %p217 = pneg %p88
      %p218 = pneg %p112
      %p219 = pneg %p109
      %p220 = pneg %p133
      %p221 = pneg %p130
      %p222 = pneg %p161
      %p223 = pneg %p158
      %s224 = smul.u32 4, %s21
      %p225 = scmp.lt.s32.totalorder %s20, 1
      %s226 = scalar_select %p225, %s20, 1
      %p227 = scmp.lt.s32.totalorder %s224, 15
      %s228 = scalar_select %p227, %s224, 15
      %s229 = smul.addr %s228, 2
      %s230 = smul.addr %s226, 32
      %s231 = sadd.s32 %s229, %s230
      %s232 = smul.addr %s231, 4
      %s233 = scalar_lea.vmem %s5, %s232
      %p234 = scmp.lt.s32.totalorder %s20, 1
      %s235 = scalar_select %p234, %s20, 1
      %s236 = smul.addr %s235, 32
      %s237 = smul.addr %s236, 4
      %s238 = scalar_lea.vmem %s0, %s237
      %s239 = smul.u32 4, %s21
      %p240 = scmp.lt.s32.totalorder %s20, 1
      %s241 = scalar_select %p240, %s20, 1
      %p242 = scmp.lt.s32.totalorder %s239, 15
      %s243 = scalar_select %p242, %s239, 15
      %s244 = smul.addr %s243, 2
      %s245 = smul.addr %s241, 32
      %s246 = sadd.s32 %s244, %s245
      %s247 = smul.addr %s246, 4
      %s248 = scalar_lea.vmem %s5, %s247
      %s249 = smul.u32 4, %s21
      %s252 = smul.u32 %s21, 4
      %s253 = ssub.s32 %s252, 6
      %p254 = scmp.gt.s32.totalorder %s253, 0
      %s255 = scalar_select %p254, %s253, 0
      %p256 = scmp.lt.s32.totalorder %s255, 0
      %s257 = scalar_select %p256, %s255, 0
      %s258 = ssub.s32 %s252, %s257
      %s259 = smul.u32 %s257, 2
      %s260 = smul.addr %s259, 4
      %s261 = scalar_lea.vmem %s238, %s260
      %v262 = vld [vmem:[%s261] sm:$0xf]
      %v263 = vld [vmem:[%s261 + $0x4] sm:$0xf]
      %v264 = vld [vmem:[%s261 + $0x8] sm:$0xf]
      %v265 = vld [vmem:[%s261 + $0xc] sm:$0xf]
      %v266 = vld [vmem:[%s261 + $0x10] sm:$0xf]
      %v267 = vld [vmem:[%s261 + $0x14] sm:$0xf]
      %v268 = vld [vmem:[%s261 + $0x18] sm:$0xf]
      %v269 = vld [vmem:[%s261 + $0x1c] sm:$0xf]
      %v270 = vld [vmem:[%s261 + $0x20] sm:$0xf]
      %v271 = vld [vmem:[%s261 + $0x24] sm:$0xf]
      %v272 = vld [vmem:[%s261 + $0x28] sm:$0xf]
      %v273 = vld [vmem:[%s261 + $0x2c] sm:$0xf]
      %v274 = vld [vmem:[%s261 + $0x30] sm:$0xf]
      %v275 = vld [vmem:[%s261 + $0x34] sm:$0xf]
      %v276 = vld [vmem:[%s261 + $0x38] sm:$0xf]
      %v277 = vld [vmem:[%s261 + $0x3c] sm:$0xf]
      %v278 = vld [vmem:[%s261 + $0x40] sm:$0xf]
      %v279 = vld [vmem:[%s261 + $0x44] sm:$0xf]
      %v280 = vld [vmem:[%s261 + $0x48] sm:$0xf]
      %v281 = vld [vmem:[%s261 + $0x4c] sm:$0xf]
      %v282 = vld [vmem:[%s261 + $0x50] sm:$0xf]
      %v283 = vld [vmem:[%s261 + $0x54] sm:$0xf]
      %v284 = vld [vmem:[%s261 + $0x58] sm:$0xf]
      %v285 = vld [vmem:[%s261 + $0x5c] sm:$0xf]
      %v286 = vld [vmem:[%s261 + $0x60] sm:$0xf]
      %v287 = vld [vmem:[%s261 + $0x64] sm:$0xf]
      %v288 = vld [vmem:[%s261 + $0x68] sm:$0xf]
      %v289 = vld [vmem:[%s261 + $0x6c] sm:$0xf]
      %v290 = vld [vmem:[%s261 + $0x70] sm:$0xf]
      %v291 = vld [vmem:[%s261 + $0x74] sm:$0xf]
      %v292 = vld [vmem:[%s261 + $0x78] sm:$0xf]
      %v293 = vld [vmem:[%s261 + $0x7c] sm:$0xf]
      %v294 = vld [vmem:[%s1] sm:$0xf]
      %v295 = vld [vmem:[%s1 + $0x4] sm:$0xf]
      %v296 = vld [vmem:[%s1 + $0x8] sm:$0xf]
      %v297 = vld [vmem:[%s1 + $0xc] sm:$0xf]
      %v298 = vld [vmem:[%s1 + $0x10] sm:$0xf]
      %v299 = vld [vmem:[%s1 + $0x14] sm:$0xf]
      %v300 = vld [vmem:[%s1 + $0x18] sm:$0xf]
      %v301 = vld [vmem:[%s1 + $0x1c] sm:$0xf]
      %v302 = vld [vmem:[%s2] sm:$0x1]
      %v304 = vlaneseq
      %v305 = vshrl.u32 %v304, 7
      %v306 = vsub.s32 0, %v305
      %v307 = vrot.slane %v302, %v306
      %v341 = vunpack.c.l.b16 %v262
      %v342 = vunpack.c.l.b16 %v263
      %v343 = vunpack.c.l.b16 %v264
      %v344 = vunpack.c.l.b16 %v265
      %v345 = vunpack.c.l.b16 %v266
      %v346 = vunpack.c.l.b16 %v267
      %v347 = vunpack.c.l.b16 %v268
      %v348 = vunpack.c.l.b16 %v269
      %v349 = vunpack.c.l.b16 %v270
      %v350 = vunpack.c.l.b16 %v271
      %v351 = vunpack.c.l.b16 %v272
      %v352 = vunpack.c.l.b16 %v273
      %v353 = vunpack.c.l.b16 %v274
      %v354 = vunpack.c.l.b16 %v275
      %v355 = vunpack.c.l.b16 %v276
      %v356 = vunpack.c.l.b16 %v277
      %v357 = vunpack.c.l.b16 %v278
      %v358 = vunpack.c.l.b16 %v279
      %v359 = vunpack.c.l.b16 %v280
      %v360 = vunpack.c.l.b16 %v281
      %v361 = vunpack.c.l.b16 %v282
      %v362 = vunpack.c.l.b16 %v283
      %v363 = vunpack.c.l.b16 %v284
      %v364 = vunpack.c.l.b16 %v285
      %v365 = vunpack.c.l.b16 %v286
      %v366 = vunpack.c.l.b16 %v287
      %v367 = vunpack.c.l.b16 %v288
      %v368 = vunpack.c.l.b16 %v289
      %v369 = vunpack.c.l.b16 %v290
      %v370 = vunpack.c.l.b16 %v291
      %v371 = vunpack.c.l.b16 %v292
      %v372 = vunpack.c.l.b16 %v293
      %v373 = vpack.c.b16 %v342, %v341
      %v374 = vpack.c.b16 %v344, %v343
      %v375 = vpack.c.b16 %v346, %v345
      %v376 = vpack.c.b16 %v348, %v347
      %v377 = vpack.c.b16 %v350, %v349
      %v378 = vpack.c.b16 %v352, %v351
      %v379 = vpack.c.b16 %v354, %v353
      %v380 = vpack.c.b16 %v356, %v355
      %v381 = vpack.c.b16 %v358, %v357
      %v382 = vpack.c.b16 %v360, %v359
      %v383 = vpack.c.b16 %v362, %v361
      %v384 = vpack.c.b16 %v364, %v363
      %v385 = vpack.c.b16 %v366, %v365
      %v386 = vpack.c.b16 %v368, %v367
      %v387 = vpack.c.b16 %v370, %v369
      %v388 = vpack.c.b16 %v372, %v371
      %v397 = vunpack.c.l.b16 %v294
      %v398 = vunpack.c.l.b16 %v295
      %v399 = vunpack.c.l.b16 %v296
      %v400 = vunpack.c.l.b16 %v297
      %v401 = vunpack.c.l.b16 %v298
      %v402 = vunpack.c.l.b16 %v299
      %v403 = vunpack.c.l.b16 %v300
      %v404 = vunpack.c.l.b16 %v301
      %v405 = vpack.c.b16 %v398, %v397
      %v406 = vpack.c.b16 %v400, %v399
      %v407 = vpack.c.b16 %v402, %v401
      %v408 = vpack.c.b16 %v404, %v403
      %vm413 = vcmask 523264
      %v415 = vsel %vm413, %v373, 0
      %v418 = vsel %vm413, %v374, 0
      %v421 = vsel %vm413, %v375, 0
      %v424 = vsel %vm413, %v376, 0
      %v427 = vsel %vm413, %v377, 0
      %v430 = vsel %vm413, %v378, 0
      %v433 = vsel %vm413, %v379, 0
      %v436 = vsel %vm413, %v380, 0
      %v439 = vsel %vm413, %v381, 0
      %v442 = vsel %vm413, %v382, 0
      %v445 = vsel %vm413, %v383, 0
      %v448 = vsel %vm413, %v384, 0
      %v451 = vsel %vm413, %v385, 0
      %v454 = vsel %vm413, %v386, 0
      %v457 = vsel %vm413, %v387, 0
      %v460 = vsel %vm413, %v388, 0
      %462 = vmatprep.subr.bf16.mxu0 0
      %463 = vmatpush1.bf16.msra.mxu0 %v405
      %464 = vmatprep.subr.bf16.mxu0 0
      %465 = vmatpush1.bf16.msra.mxu0 %v406
      %466 = vmatprep.subr.bf16.mxu0 0
      %467 = vmatpush1.bf16.msra.mxu0 %v407
      %468 = vmatprep.subr.bf16.mxu0 0
      %469 = vmatpush1.bf16.msra.mxu0 %v408
      %470 = vmatprep.subr.bf16.mxu0 0
      %471 = vmatpush1.bf16.msra.mxu0 0
      %472 = vmatprep.subr.bf16.mxu0 0
      %473 = vmatpush1.bf16.msra.mxu0 0
      %474 = vmatprep.subr.bf16.mxu0 0
      %475 = vmatpush1.bf16.msra.mxu0 0
      %476 = vmatprep.subr.bf16.mxu0 0
      %477 = vmatpush1.bf16.msra.mxu0 0
      %478 = vmatprep.subr.bf16.mxu0 0
      %479 = vmatpush1.bf16.msra.mxu0 0
      %480 = vmatprep.subr.bf16.mxu0 0
      %481 = vmatpush1.bf16.msra.mxu0 0
      %482 = vmatprep.subr.bf16.mxu0 0
      %483 = vmatpush1.bf16.msra.mxu0 0
      %484 = vmatprep.subr.bf16.mxu0 0
      %485 = vmatpush1.bf16.msra.mxu0 0
      %486 = vmatprep.subr.bf16.mxu0 0
      %487 = vmatpush1.bf16.msra.mxu0 0
      %488 = vmatprep.subr.bf16.mxu0 0
      %489 = vmatpush1.bf16.msra.mxu0 0
      %490 = vmatprep.subr.bf16.mxu0 0
      %491 = vmatpush1.bf16.msra.mxu0 0
      %492 = vmatprep.subr.bf16.mxu0 0
      %493 = vmatpush1.bf16.msra.mxu0 0
      %494 = vmatprep.mubr.bf16.mxu0 0
      %495 = vmatmul.mubr.bf16.gmra.mrb[0].mxu0 %v415
      %v496 = vpop.f32.mrb[0].mxu0
      %v497 = vadd.f32 %v307, %v496
      %v498 = vpop.f32.mrb[0].mxu0
      %v499 = vpop.f32.mrb[0].mxu0
      %v500 = vadd.f32 %v307, %v499
      %v501 = vpop.f32.mrb[0].mxu0
      %502 = vmatprep.mubr.bf16.mxu0 0
      %503 = vmatmul.mubr.bf16.gmra.mrb[0].mxu0 %v418
      %v504 = vpop.f32.mrb[0].mxu0
      %v505 = vadd.f32 %v307, %v504
      %v506 = vpop.f32.mrb[0].mxu0
      %v507 = vpop.f32.mrb[0].mxu0
      %v508 = vadd.f32 %v307, %v507
      %v509 = vpop.f32.mrb[0].mxu0
      %510 = vmatprep.mubr.bf16.mxu0 0
      %511 = vmatmul.mubr.bf16.gmra.mrb[0].mxu0 %v421
      %v512 = vpop.f32.mrb[0].mxu0
      %v513 = vadd.f32 %v307, %v512
      %v514 = vpop.f32.mrb[0].mxu0
      %v515 = vpop.f32.mrb[0].mxu0
      %v516 = vadd.f32 %v307, %v515
      %v517 = vpop.f32.mrb[0].mxu0
      %518 = vmatprep.mubr.bf16.mxu0 0
      %519 = vmatmul.mubr.bf16.gmra.mrb[0].mxu0 %v424
      %v520 = vpop.f32.mrb[0].mxu0
      %v521 = vadd.f32 %v307, %v520
      %v522 = vpop.f32.mrb[0].mxu0
      %v523 = vpop.f32.mrb[0].mxu0
      %v524 = vadd.f32 %v307, %v523
      %v525 = vpop.f32.mrb[0].mxu0
      %526 = vmatprep.mubr.bf16.mxu0 0
      %527 = vmatmul.mubr.bf16.gmra.mrb[0].mxu0 %v427
      %v528 = vpop.f32.mrb[0].mxu0
      %v529 = vadd.f32 %v307, %v528
      %v530 = vpop.f32.mrb[0].mxu0
      %v531 = vpop.f32.mrb[0].mxu0
      %v532 = vadd.f32 %v307, %v531
      %v533 = vpop.f32.mrb[0].mxu0
      %534 = vmatprep.mubr.bf16.mxu0 0
      %535 = vmatmul.mubr.bf16.gmra.mrb[0].mxu0 %v430
      %v536 = vpop.f32.mrb[0].mxu0
      %v537 = vadd.f32 %v307, %v536
      %v538 = vpop.f32.mrb[0].mxu0
      %v539 = vpop.f32.mrb[0].mxu0
      %v540 = vadd.f32 %v307, %v539
      %v541 = vpop.f32.mrb[0].mxu0
      %542 = vmatprep.mubr.bf16.mxu0 0
      %543 = vmatmul.mubr.bf16.gmra.mrb[0].mxu0 %v433
      %v544 = vpop.f32.mrb[0].mxu0
      %v545 = vadd.f32 %v307, %v544
      %v546 = vpop.f32.mrb[0].mxu0
      %v547 = vpop.f32.mrb[0].mxu0
      %v548 = vadd.f32 %v307, %v547
      %v549 = vpop.f32.mrb[0].mxu0
      %550 = vmatprep.mubr.bf16.mxu0 0
      %551 = vmatmul.mubr.bf16.gmra.mrb[0].mxu0 %v436
      %v552 = vpop.f32.mrb[0].mxu0
      %v553 = vadd.f32 %v307, %v552
      %v554 = vpop.f32.mrb[0].mxu0
      %v555 = vpop.f32.mrb[0].mxu0
      %v556 = vadd.f32 %v307, %v555
      %v557 = vpop.f32.mrb[0].mxu0
      %558 = vmatprep.mubr.bf16.mxu0 0
      %559 = vmatmul.mubr.bf16.gmra.mrb[0].mxu0 %v439
      %v560 = vpop.f32.mrb[0].mxu0
      %v561 = vadd.f32 %v307, %v560
      %v562 = vpop.f32.mrb[0].mxu0
      %v563 = vpop.f32.mrb[0].mxu0
      %v564 = vadd.f32 %v307, %v563
      %v565 = vpop.f32.mrb[0].mxu0
      %566 = vmatprep.mubr.bf16.mxu0 0
      %567 = vmatmul.mubr.bf16.gmra.mrb[0].mxu0 %v442
      %v568 = vpop.f32.mrb[0].mxu0
      %v569 = vadd.f32 %v307, %v568
      %v570 = vpop.f32.mrb[0].mxu0
      %v571 = vpop.f32.mrb[0].mxu0
      %v572 = vadd.f32 %v307, %v571
      %v573 = vpop.f32.mrb[0].mxu0
      %574 = vmatprep.mubr.bf16.mxu0 0
      %575 = vmatmul.mubr.bf16.gmra.mrb[0].mxu0 %v445
      %v576 = vpop.f32.mrb[0].mxu0
      %v577 = vadd.f32 %v307, %v576
      %v578 = vpop.f32.mrb[0].mxu0
      %v579 = vpop.f32.mrb[0].mxu0
      %v580 = vadd.f32 %v307, %v579
      %v581 = vpop.f32.mrb[0].mxu0
      %582 = vmatprep.mubr.bf16.mxu0 0
      %583 = vmatmul.mubr.bf16.gmra.mrb[0].mxu0 %v448
      %v584 = vpop.f32.mrb[0].mxu0
      %v585 = vadd.f32 %v307, %v584
      %v586 = vpop.f32.mrb[0].mxu0
      %v587 = vpop.f32.mrb[0].mxu0
      %v588 = vadd.f32 %v307, %v587
      %v589 = vpop.f32.mrb[0].mxu0
      %590 = vmatprep.mubr.bf16.mxu0 0
      %591 = vmatmul.mubr.bf16.gmra.mrb[0].mxu0 %v451
      %v592 = vpop.f32.mrb[0].mxu0
      %v593 = vadd.f32 %v307, %v592
      %v594 = vpop.f32.mrb[0].mxu0
      %v595 = vpop.f32.mrb[0].mxu0
      %v596 = vadd.f32 %v307, %v595
      %v597 = vpop.f32.mrb[0].mxu0
      %598 = vmatprep.mubr.bf16.mxu0 0
      %599 = vmatmul.mubr.bf16.gmra.mrb[0].mxu0 %v454
      %v600 = vpop.f32.mrb[0].mxu0
      %v601 = vadd.f32 %v307, %v600
      %v602 = vpop.f32.mrb[0].mxu0
      %v603 = vpop.f32.mrb[0].mxu0
      %v604 = vadd.f32 %v307, %v603
      %v605 = vpop.f32.mrb[0].mxu0
      %606 = vmatprep.mubr.bf16.mxu0 0
      %607 = vmatmul.mubr.bf16.gmra.mrb[0].mxu0 %v457
      %v608 = vpop.f32.mrb[0].mxu0
      %v609 = vadd.f32 %v307, %v608
      %v610 = vpop.f32.mrb[0].mxu0
      %v611 = vpop.f32.mrb[0].mxu0
      %v612 = vadd.f32 %v307, %v611
      %v613 = vpop.f32.mrb[0].mxu0
      %614 = vmatprep.mubr.bf16.mxu0 0
      %615 = vmatmul.mubr.bf16.gmra.mrb[0].mxu0 %v460
      %v616 = vpop.f32.mrb[0].mxu0
      %v617 = vadd.f32 %v307, %v616
      %v618 = vpop.f32.mrb[0].mxu0
      %v619 = vpop.f32.mrb[0].mxu0
      %v620 = vadd.f32 %v307, %v619
      %v621 = vpop.f32.mrb[0].mxu0
      %622 = vdwg.mxu0
      %v623 = vsub.f32 0.0, %v497
      %v624 = vsub.f32 0.0, %v500
      %v625 = vsub.f32 0.0, %v505
      %v626 = vsub.f32 0.0, %v508
      %v627 = vsub.f32 0.0, %v513
      %v628 = vsub.f32 0.0, %v516
      %v629 = vsub.f32 0.0, %v521
      %v630 = vsub.f32 0.0, %v524
      %v631 = vsub.f32 0.0, %v529
      %v632 = vsub.f32 0.0, %v532
      %v633 = vsub.f32 0.0, %v537
      %v634 = vsub.f32 0.0, %v540
      %v635 = vsub.f32 0.0, %v545
      %v636 = vsub.f32 0.0, %v548
      %v637 = vsub.f32 0.0, %v553
      %v638 = vsub.f32 0.0, %v556
      %v639 = vsub.f32 0.0, %v561
      %v640 = vsub.f32 0.0, %v564
      %v641 = vsub.f32 0.0, %v569
      %v642 = vsub.f32 0.0, %v572
      %v643 = vsub.f32 0.0, %v577
      %v644 = vsub.f32 0.0, %v580
      %v645 = vsub.f32 0.0, %v585
      %v646 = vsub.f32 0.0, %v588
      %v647 = vsub.f32 0.0, %v593
      %v648 = vsub.f32 0.0, %v596
      %v649 = vsub.f32 0.0, %v601
      %v650 = vsub.f32 0.0, %v604
      %v651 = vsub.f32 0.0, %v609
      %v652 = vsub.f32 0.0, %v612
      %v653 = vsub.f32 0.0, %v617
      %v654 = vsub.f32 0.0, %v620
      %v655 = vmul.f32 %v623, 1.442695
      %v656 = vpow.pop %v655
      %v657 = vmul.f32 %v624, 1.442695
      %v658 = vpow.pop %v657
      %v659 = vmul.f32 %v625, 1.442695
      %v660 = vpow.pop %v659
      %v661 = vmul.f32 %v626, 1.442695
      %v662 = vpow.pop %v661
      %v663 = vmul.f32 %v627, 1.442695
      %v664 = vpow.pop %v663
      %v665 = vmul.f32 %v628, 1.442695
      %v666 = vpow.pop %v665
      %v667 = vmul.f32 %v629, 1.442695
      %v668 = vpow.pop %v667
      %v669 = vmul.f32 %v630, 1.442695
      %v670 = vpow.pop %v669
      %v671 = vmul.f32 %v631, 1.442695
      %v672 = vpow.pop %v671
      %v673 = vmul.f32 %v632, 1.442695
      %v674 = vpow.pop %v673
      %v675 = vmul.f32 %v633, 1.442695
      %v676 = vpow.pop %v675
      %v677 = vmul.f32 %v634, 1.442695
      %v678 = vpow.pop %v677
      %v679 = vmul.f32 %v635, 1.442695
      %v680 = vpow.pop %v679
      %v681 = vmul.f32 %v636, 1.442695
      %v682 = vpow.pop %v681
      %v683 = vmul.f32 %v637, 1.442695
      %v684 = vpow.pop %v683
      %v685 = vmul.f32 %v638, 1.442695
      %v686 = vpow.pop %v685
      %v687 = vmul.f32 %v639, 1.442695
      %v688 = vpow.pop %v687
      %v689 = vmul.f32 %v640, 1.442695
      %v690 = vpow.pop %v689
      %v691 = vmul.f32 %v641, 1.442695
      %v692 = vpow.pop %v691
      %v693 = vmul.f32 %v642, 1.442695
      %v694 = vpow.pop %v693
      %v695 = vmul.f32 %v643, 1.442695
      %v696 = vpow.pop %v695
      %v697 = vmul.f32 %v644, 1.442695
      %v698 = vpow.pop %v697
      %v699 = vmul.f32 %v645, 1.442695
      %v700 = vpow.pop %v699
      %v701 = vmul.f32 %v646, 1.442695
      %v702 = vpow.pop %v701
      %v703 = vmul.f32 %v647, 1.442695
      %v704 = vpow.pop %v703
      %v705 = vmul.f32 %v648, 1.442695
      %v706 = vpow.pop %v705
      %v707 = vmul.f32 %v649, 1.442695
      %v708 = vpow.pop %v707
      %v709 = vmul.f32 %v650, 1.442695
      %v710 = vpow.pop %v709
      %v711 = vmul.f32 %v651, 1.442695
      %v712 = vpow.pop %v711
      %v713 = vmul.f32 %v652, 1.442695
      %v714 = vpow.pop %v713
      %v715 = vmul.f32 %v653, 1.442695
      %v716 = vpow.pop %v715
      %v717 = vmul.f32 %v654, 1.442695
      %v718 = vpow.pop %v717
      %v719 = vadd.f32 %v656, 1.0
      %v720 = vadd.f32 %v658, 1.0
      %v721 = vadd.f32 %v660, 1.0
      %v722 = vadd.f32 %v662, 1.0
      %v723 = vadd.f32 %v664, 1.0
      %v724 = vadd.f32 %v666, 1.0
      %v725 = vadd.f32 %v668, 1.0
      %v726 = vadd.f32 %v670, 1.0
      %v727 = vadd.f32 %v672, 1.0
      %v728 = vadd.f32 %v674, 1.0
      %v729 = vadd.f32 %v676, 1.0
      %v730 = vadd.f32 %v678, 1.0
      %v731 = vadd.f32 %v680, 1.0
      %v732 = vadd.f32 %v682, 1.0
      %v733 = vadd.f32 %v684, 1.0
      %v734 = vadd.f32 %v686, 1.0
      %v735 = vadd.f32 %v688, 1.0
      %v736 = vadd.f32 %v690, 1.0
      %v737 = vadd.f32 %v692, 1.0
      %v738 = vadd.f32 %v694, 1.0
      %v739 = vadd.f32 %v696, 1.0
      %v740 = vadd.f32 %v698, 1.0
      %v741 = vadd.f32 %v700, 1.0
      %v742 = vadd.f32 %v702, 1.0
      %v743 = vadd.f32 %v704, 1.0
      %v744 = vadd.f32 %v706, 1.0
      %v745 = vadd.f32 %v708, 1.0
      %v746 = vadd.f32 %v710, 1.0
      %v747 = vadd.f32 %v712, 1.0
      %v748 = vadd.f32 %v714, 1.0
      %v749 = vadd.f32 %v716, 1.0
      %v750 = vadd.f32 %v718, 1.0
      %v751 = vrcp.pop %v719
      %v752 = vmul.f32 1.0, %v751
      %v753 = vrcp.pop %v720
      %v754 = vmul.f32 1.0, %v753
      %v755 = vrcp.pop %v721
      %v756 = vmul.f32 1.0, %v755
      %v757 = vrcp.pop %v722
      %v758 = vmul.f32 1.0, %v757
      %v759 = vrcp.pop %v723
      %v760 = vmul.f32 1.0, %v759
      %v761 = vrcp.pop %v724
      %v762 = vmul.f32 1.0, %v761
      %v763 = vrcp.pop %v725
      %v764 = vmul.f32 1.0, %v763
      %v765 = vrcp.pop %v726
      %v766 = vmul.f32 1.0, %v765
      %v767 = vrcp.pop %v727
      %v768 = vmul.f32 1.0, %v767
      %v769 = vrcp.pop %v728
      %v770 = vmul.f32 1.0, %v769
      %v771 = vrcp.pop %v729
      %v772 = vmul.f32 1.0, %v771
      %v773 = vrcp.pop %v730
      %v774 = vmul.f32 1.0, %v773
      %v775 = vrcp.pop %v731
      %v776 = vmul.f32 1.0, %v775
      %v777 = vrcp.pop %v732
      %v778 = vmul.f32 1.0, %v777
      %v779 = vrcp.pop %v733
      %v780 = vmul.f32 1.0, %v779
      %v781 = vrcp.pop %v734
      %v782 = vmul.f32 1.0, %v781
      %v783 = vrcp.pop %v735
      %v784 = vmul.f32 1.0, %v783
      %v785 = vrcp.pop %v736
      %v786 = vmul.f32 1.0, %v785
      %v787 = vrcp.pop %v737
      %v788 = vmul.f32 1.0, %v787
      %v789 = vrcp.pop %v738
      %v790 = vmul.f32 1.0, %v789
      %v791 = vrcp.pop %v739
      %v792 = vmul.f32 1.0, %v791
      %v793 = vrcp.pop %v740
      %v794 = vmul.f32 1.0, %v793
      %v795 = vrcp.pop %v741
      %v796 = vmul.f32 1.0, %v795
      %v797 = vrcp.pop %v742
      %v798 = vmul.f32 1.0, %v797
      %v799 = vrcp.pop %v743
      %v800 = vmul.f32 1.0, %v799
      %v801 = vrcp.pop %v744
      %v802 = vmul.f32 1.0, %v801
      %v803 = vrcp.pop %v745
      %v804 = vmul.f32 1.0, %v803
      %v805 = vrcp.pop %v746
      %v806 = vmul.f32 1.0, %v805
      %v807 = vrcp.pop %v747
      %v808 = vmul.f32 1.0, %v807
      %v809 = vrcp.pop %v748
      %v810 = vmul.f32 1.0, %v809
      %v811 = vrcp.pop %v749
      %v812 = vmul.f32 1.0, %v811
      %v813 = vrcp.pop %v750
      %v814 = vmul.f32 1.0, %v813
      %v815 = vmul.f32 %v497, %v752
      %v816 = vmul.f32 %v500, %v754
      %v817 = vmul.f32 %v505, %v756
      %v818 = vmul.f32 %v508, %v758
      %v819 = vmul.f32 %v513, %v760
      %v820 = vmul.f32 %v516, %v762
      %v821 = vmul.f32 %v521, %v764
      %v822 = vmul.f32 %v524, %v766
      %v823 = vmul.f32 %v529, %v768
      %v824 = vmul.f32 %v532, %v770
      %v825 = vmul.f32 %v537, %v772
      %v826 = vmul.f32 %v540, %v774
      %v827 = vmul.f32 %v545, %v776
      %v828 = vmul.f32 %v548, %v778
      %v829 = vmul.f32 %v553, %v780
      %v830 = vmul.f32 %v556, %v782
      %v831 = vmul.f32 %v561, %v784
      %v832 = vmul.f32 %v564, %v786
      %v833 = vmul.f32 %v569, %v788
      %v834 = vmul.f32 %v572, %v790
      %v835 = vmul.f32 %v577, %v792
      %v836 = vmul.f32 %v580, %v794
      %v837 = vmul.f32 %v585, %v796
      %v838 = vmul.f32 %v588, %v798
      %v839 = vmul.f32 %v593, %v800
      %v840 = vmul.f32 %v596, %v802
      %v841 = vmul.f32 %v601, %v804
      %v842 = vmul.f32 %v604, %v806
      %v843 = vmul.f32 %v609, %v808
      %v844 = vmul.f32 %v612, %v810
      %v845 = vmul.f32 %v617, %v812
      %v846 = vmul.f32 %v620, %v814
      %v847 = vpack.c.bf16 %v816, %v815
      %v848 = vpack.c.bf16 %v818, %v817
      %v849 = vpack.c.bf16 %v820, %v819
      %v850 = vpack.c.bf16 %v822, %v821
      %v851 = vpack.c.bf16 %v824, %v823
      %v852 = vpack.c.bf16 %v826, %v825
      %v853 = vpack.c.bf16 %v828, %v827
      %v854 = vpack.c.bf16 %v830, %v829
      %v855 = vpack.c.bf16 %v832, %v831
      %v856 = vpack.c.bf16 %v834, %v833
      %v857 = vpack.c.bf16 %v836, %v835
      %v858 = vpack.c.bf16 %v838, %v837
      %v859 = vpack.c.bf16 %v840, %v839
      %v860 = vpack.c.bf16 %v842, %v841
      %v861 = vpack.c.bf16 %v844, %v843
      %v862 = vpack.c.bf16 %v846, %v845
      %vm863 = vcmask 257024
      %864 = vst.msk [vmem:[#allocation2] sm:$0xf] %vm863, 4048220490
      %865 = vst.msk [vmem:[#allocation2 + $0x4] sm:$0xf] %vm863, 4048220490
      %vm866 = vcmask 254976
      %867 = vst.msk [vmem:[#allocation2 + $0x8] sm:$0x3] %vm866, 4048220490
      %868 = vst.msk [vmem:[#allocation2 + $0xc] sm:$0xf] %vm863, 4048220490
      %869 = vst.msk [vmem:[#allocation2 + $0x10] sm:$0xf] %vm863, 4048220490
      %870 = vst.msk [vmem:[#allocation2 + $0x14] sm:$0x3] %vm866, 4048220490
      %s871 = scalar_lea.vmem [#allocation2], 216
      %872 = vst.msk [vmem:[%s871] sm:$0xf] %vm863, 4048220490
      %873 = vst.msk [vmem:[%s871 + $0x4] sm:$0xf] %vm863, 4048220490
      %874 = vst.msk [vmem:[%s871 + $0x8] sm:$0x3] %vm866, 4048220490
      %875 = vst.msk [vmem:[%s871 + $0xc] sm:$0xf] %vm863, 4048220490
      %876 = vst.msk [vmem:[%s871 + $0x10] sm:$0xf] %vm863, 4048220490
      %877 = vst.msk [vmem:[%s871 + $0x14] sm:$0x3] %vm866, 4048220490
      %vm878 = vcmask 253952
      %879 = vst.msk [vmem:[#allocation2] sm:$0x1] %vm878, 4048220490
      %880 = vst.msk [vmem:[#allocation2 + $0xc] sm:$0x1] %vm878, 4048220490
      %881 = vst.msk [vmem:[#allocation2 + $0x18] sm:$0x1] %vm878, 4048220490
      %882 = vst.msk [vmem:[#allocation2 + $0x24] sm:$0x1] %vm878, 4048220490
      %883 = vst.msk [vmem:[#allocation2 + $0x30] sm:$0x1] %vm878, 4048220490
      %884 = vst.msk [vmem:[#allocation2 + $0x3c] sm:$0x1] %vm878, 4048220490
      %885 = vst.msk [vmem:[#allocation2 + $0x48] sm:$0x1] %vm878, 4048220490
      %886 = vst.msk [vmem:[#allocation2 + $0x54] sm:$0x1] %vm878, 4048220490
      %887 = vst.msk [vmem:[#allocation2 + $0x60] sm:$0x1] %vm878, 4048220490
      %888 = vst.msk [vmem:[#allocation2 + $0x6c] sm:$0x1] %vm878, 4048220490
      %889 = vst.msk [vmem:[#allocation2 + $0x78] sm:$0x1] %vm878, 4048220490
      %890 = vst.msk [vmem:[#allocation2 + $0x84] sm:$0x1] %vm878, 4048220490
      %891 = vst.msk [vmem:[#allocation2 + $0x90] sm:$0x1] %vm878, 4048220490
      %892 = vst.msk [vmem:[#allocation2 + $0x9c] sm:$0x1] %vm878, 4048220490
      %893 = vst.msk [vmem:[#allocation2 + $0xa8] sm:$0x1] %vm878, 4048220490
      %894 = vst.msk [vmem:[#allocation2 + $0xb4] sm:$0x1] %vm878, 4048220490
      %895 = vst.msk [vmem:[#allocation2 + $0xc0] sm:$0x1] %vm878, 4048220490
      %896 = vst.msk [vmem:[#allocation2 + $0xcc] sm:$0x1] %vm878, 4048220490
      %897 = vst.msk [vmem:[#allocation2 + $0xd8] sm:$0x1] %vm878, 4048220490
      %898 = vst.msk [vmem:[#allocation2 + $0xe4] sm:$0x1] %vm878, 4048220490
      %vm899 = vcmask 254977
      %900 = vst.msk [vmem:[#allocation2 + $0x8] sm:$0x2] %vm899, 4048220490
      %901 = vst.msk [vmem:[#allocation2 + $0x14] sm:$0x2] %vm899, 4048220490
      %902 = vst.msk [vmem:[#allocation2 + $0x20] sm:$0x2] %vm899, 4048220490
      %903 = vst.msk [vmem:[#allocation2 + $0x2c] sm:$0x2] %vm899, 4048220490
      %904 = vst.msk [vmem:[#allocation2 + $0x38] sm:$0x2] %vm899, 4048220490
      %905 = vst.msk [vmem:[#allocation2 + $0x44] sm:$0x2] %vm899, 4048220490
      %906 = vst.msk [vmem:[#allocation2 + $0x50] sm:$0x2] %vm899, 4048220490
      %907 = vst.msk [vmem:[#allocation2 + $0x5c] sm:$0x2] %vm899, 4048220490
      %908 = vst.msk [vmem:[#allocation2 + $0x68] sm:$0x2] %vm899, 4048220490
      %909 = vst.msk [vmem:[#allocation2 + $0x74] sm:$0x2] %vm899, 4048220490
      %910 = vst.msk [vmem:[#allocation2 + $0x80] sm:$0x2] %vm899, 4048220490
      %911 = vst.msk [vmem:[#allocation2 + $0x8c] sm:$0x2] %vm899, 4048220490
      %912 = vst.msk [vmem:[#allocation2 + $0x98] sm:$0x2] %vm899, 4048220490
      %913 = vst.msk [vmem:[#allocation2 + $0xa4] sm:$0x2] %vm899, 4048220490
      %914 = vst.msk [vmem:[#allocation2 + $0xb0] sm:$0x2] %vm899, 4048220490
      %915 = vst.msk [vmem:[#allocation2 + $0xbc] sm:$0x2] %vm899, 4048220490
      %916 = vst.msk [vmem:[#allocation2 + $0xc8] sm:$0x2] %vm899, 4048220490
      %917 = vst.msk [vmem:[#allocation2 + $0xd4] sm:$0x2] %vm899, 4048220490
      %918 = vst.msk [vmem:[#allocation2 + $0xe0] sm:$0x2] %vm899, 4048220490
      %919 = vst.msk [vmem:[#allocation2 + $0xec] sm:$0x2] %vm899, 4048220490
      %v936 = vunpack.c.l.b16 %v847
      %v937 = vunpack.c.h.b16 %v847
      %v938 = vunpack.c.l.b16 %v848
      %v939 = vunpack.c.h.b16 %v848
      %v940 = vunpack.c.l.b16 %v849
      %v941 = vunpack.c.h.b16 %v849
      %v942 = vunpack.c.l.b16 %v850
      %v943 = vunpack.c.h.b16 %v850
      %v944 = vunpack.c.l.b16 %v851
      %v945 = vunpack.c.h.b16 %v851
      %v946 = vunpack.c.l.b16 %v852
      %v947 = vunpack.c.h.b16 %v852
      %v948 = vunpack.c.l.b16 %v853
      %v949 = vunpack.c.h.b16 %v853
      %v950 = vunpack.c.l.b16 %v854
      %v951 = vunpack.c.h.b16 %v854
      %v952 = vunpack.c.l.b16 %v855
      %v953 = vunpack.c.h.b16 %v855
      %v954 = vunpack.c.l.b16 %v856
      %v955 = vunpack.c.h.b16 %v856
      %v956 = vunpack.c.l.b16 %v857
      %v957 = vunpack.c.h.b16 %v857
      %v958 = vunpack.c.l.b16 %v858
      %v959 = vunpack.c.h.b16 %v858
      %v960 = vunpack.c.l.b16 %v859
      %v961 = vunpack.c.h.b16 %v859
      %v962 = vunpack.c.l.b16 %v860
      %v963 = vunpack.c.h.b16 %v860
      %v964 = vunpack.c.l.b16 %v861
      %v965 = vunpack.c.h.b16 %v861
      %v966 = vunpack.c.l.b16 %v862
      %v967 = vunpack.c.h.b16 %v862
      %v968 = vpack.c.b16 %v936, %v936
      %v969 = vpack.c.b16 %v937, %v937
      %v970 = vpack.c.b16 %v938, %v938
      %v971 = vpack.c.b16 %v939, %v939
      %v972 = vpack.c.b16 %v940, %v940
      %v973 = vpack.c.b16 %v941, %v941
      %v974 = vpack.c.b16 %v942, %v942
      %v975 = vpack.c.b16 %v943, %v943
      %v976 = vpack.c.b16 %v944, %v944
      %v977 = vpack.c.b16 %v945, %v945
      %v978 = vpack.c.b16 %v946, %v946
      %v979 = vpack.c.b16 %v947, %v947
      %v980 = vpack.c.b16 %v948, %v948
      %v981 = vpack.c.b16 %v949, %v949
      %v982 = vpack.c.b16 %v950, %v950
      %v983 = vpack.c.b16 %v951, %v951
      %v984 = vpack.c.b16 %v952, %v952
      %v985 = vpack.c.b16 %v953, %v953
      %v986 = vpack.c.b16 %v954, %v954
      %v987 = vpack.c.b16 %v955, %v955
      %v988 = vpack.c.b16 %v956, %v956
      %v989 = vpack.c.b16 %v957, %v957
      %v990 = vpack.c.b16 %v958, %v958
      %v991 = vpack.c.b16 %v959, %v959
      %v992 = vpack.c.b16 %v960, %v960
      %v993 = vpack.c.b16 %v961, %v961
      %v994 = vpack.c.b16 %v962, %v962
      %v995 = vpack.c.b16 %v963, %v963
      %v996 = vpack.c.b16 %v964, %v964
      %v997 = vpack.c.b16 %v965, %v965
      %v998 = vpack.c.b16 %v966, %v966
      %v999 = vpack.c.b16 %v967, %v967
      %vm1000 = vcmask 1040384
      %vm1001 = vcmask 1044484
      %vm1002 = vmor %vm1000, %vm1001
      %v1003 = vrot.slane %v968, 7
      %v1004 = vrot.slane %v1003, 4
      %v1005 = vrot.slane %v969, 7
      %v1006 = vsel %vm1002, %v1004, %v1005
      %v1007 = vrot.slane %v1005, 4
      %v1008 = vrot.slane %v970, 7
      %v1009 = vrot.slane %v1008, 4
      %v1010 = vrot.slane %v971, 7
      %v1011 = vsel %vm1002, %v1009, %v1010
      %v1012 = vrot.slane %v1010, 4
      %v1013 = vrot.slane %v972, 7
      %v1014 = vrot.slane %v1013, 4
      %v1015 = vrot.slane %v973, 7
      %v1016 = vsel %vm1002, %v1014, %v1015
      %v1017 = vrot.slane %v1015, 4
      %v1018 = vrot.slane %v974, 7
      %v1019 = vrot.slane %v1018, 4
      %v1020 = vrot.slane %v975, 7
      %v1021 = vsel %vm1002, %v1019, %v1020
      %v1022 = vrot.slane %v1020, 4
      %v1023 = vrot.slane %v976, 7
      %v1024 = vrot.slane %v1023, 4
      %v1025 = vrot.slane %v977, 7
      %v1026 = vsel %vm1002, %v1024, %v1025
      %v1027 = vrot.slane %v1025, 4
      %v1028 = vrot.slane %v978, 7
      %v1029 = vrot.slane %v1028, 4
      %v1030 = vrot.slane %v979, 7
      %v1031 = vsel %vm1002, %v1029, %v1030
      %v1032 = vrot.slane %v1030, 4
      %v1033 = vrot.slane %v980, 7
      %v1034 = vrot.slane %v1033, 4
      %v1035 = vrot.slane %v981, 7
      %v1036 = vsel %vm1002, %v1034, %v1035
      %v1037 = vrot.slane %v1035, 4
      %v1038 = vrot.slane %v982, 7
      %v1039 = vrot.slane %v1038, 4
      %v1040 = vrot.slane %v983, 7
      %v1041 = vsel %vm1002, %v1039, %v1040
      %v1042 = vrot.slane %v1040, 4
      %v1043 = vrot.slane %v984, 7
      %v1044 = vrot.slane %v1043, 4
      %v1045 = vrot.slane %v985, 7
      %v1046 = vsel %vm1002, %v1044, %v1045
      %v1047 = vrot.slane %v1045, 4
      %v1048 = vrot.slane %v986, 7
      %v1049 = vrot.slane %v1048, 4
      %v1050 = vrot.slane %v987, 7
      %v1051 = vsel %vm1002, %v1049, %v1050
      %v1052 = vrot.slane %v1050, 4
      %v1053 = vrot.slane %v988, 7
      %v1054 = vrot.slane %v1053, 4
      %v1055 = vrot.slane %v989, 7
      %v1056 = vsel %vm1002, %v1054, %v1055
      %v1057 = vrot.slane %v1055, 4
      %v1058 = vrot.slane %v990, 7
      %v1059 = vrot.slane %v1058, 4
      %v1060 = vrot.slane %v991, 7
      %v1061 = vsel %vm1002, %v1059, %v1060
      %v1062 = vrot.slane %v1060, 4
      %v1063 = vrot.slane %v992, 7
      %v1064 = vrot.slane %v1063, 4
      %v1065 = vrot.slane %v993, 7
      %v1066 = vsel %vm1002, %v1064, %v1065
      %v1067 = vrot.slane %v1065, 4
      %v1068 = vrot.slane %v994, 7
      %v1069 = vrot.slane %v1068, 4
      %v1070 = vrot.slane %v995, 7
      %v1071 = vsel %vm1002, %v1069, %v1070
      %v1072 = vrot.slane %v1070, 4
      %v1073 = vrot.slane %v996, 7
      %v1074 = vrot.slane %v1073, 4
      %v1075 = vrot.slane %v997, 7
      %v1076 = vsel %vm1002, %v1074, %v1075
      %v1077 = vrot.slane %v1075, 4
      %v1078 = vrot.slane %v998, 7
      %v1079 = vrot.slane %v1078, 4
      %v1080 = vrot.slane %v999, 7
      %v1081 = vsel %vm1002, %v1079, %v1080
      %v1082 = vrot.slane %v1080, 4
      %s1131 = scalar_lea.vmem [#allocation2], 24
      %vm1132 = vcmask 257025
      %1133 = vst.msk [vmem:[%s1131] sm:$0xe] %vm1132, %v1003
      %1134 = vst.msk [vmem:[%s1131 + $0x4] sm:$0xf] %vm863, %v1006
      %1135 = vst.msk [vmem:[%s1131 + $0x8] sm:$0x1] %vm878, %v1007
      %1136 = vst.msk [vmem:[%s1131 + $0xc] sm:$0xe] %vm1132, %v1008
      %1137 = vst.msk [vmem:[%s1131 + $0x10] sm:$0xf] %vm863, %v1011
      %1138 = vst.msk [vmem:[%s1131 + $0x14] sm:$0x1] %vm878, %v1012
      %1139 = vst.msk [vmem:[%s1131 + $0x18] sm:$0xe] %vm1132, %v1013
      %1140 = vst.msk [vmem:[%s1131 + $0x1c] sm:$0xf] %vm863, %v1016
      %1141 = vst.msk [vmem:[%s1131 + $0x20] sm:$0x1] %vm878, %v1017
      %1142 = vst.msk [vmem:[%s1131 + $0x24] sm:$0xe] %vm1132, %v1018
      %1143 = vst.msk [vmem:[%s1131 + $0x28] sm:$0xf] %vm863, %v1021
      %1144 = vst.msk [vmem:[%s1131 + $0x2c] sm:$0x1] %vm878, %v1022
      %1145 = vst.msk [vmem:[%s1131 + $0x30] sm:$0xe] %vm1132, %v1023
      %1146 = vst.msk [vmem:[%s1131 + $0x34] sm:$0xf] %vm863, %v1026
      %1147 = vst.msk [vmem:[%s1131 + $0x38] sm:$0x1] %vm878, %v1027
      %1148 = vst.msk [vmem:[%s1131 + $0x3c] sm:$0xe] %vm1132, %v1028
      %1149 = vst.msk [vmem:[%s1131 + $0x40] sm:$0xf] %vm863, %v1031
      %1150 = vst.msk [vmem:[%s1131 + $0x44] sm:$0x1] %vm878, %v1032
      %1151 = vst.msk [vmem:[%s1131 + $0x48] sm:$0xe] %vm1132, %v1033
      %1152 = vst.msk [vmem:[%s1131 + $0x4c] sm:$0xf] %vm863, %v1036
      %1153 = vst.msk [vmem:[%s1131 + $0x50] sm:$0x1] %vm878, %v1037
      %1154 = vst.msk [vmem:[%s1131 + $0x54] sm:$0xe] %vm1132, %v1038
      %1155 = vst.msk [vmem:[%s1131 + $0x58] sm:$0xf] %vm863, %v1041
      %1156 = vst.msk [vmem:[%s1131 + $0x5c] sm:$0x1] %vm878, %v1042
      %1157 = vst.msk [vmem:[%s1131 + $0x60] sm:$0xe] %vm1132, %v1043
      %1158 = vst.msk [vmem:[%s1131 + $0x64] sm:$0xf] %vm863, %v1046
      %1159 = vst.msk [vmem:[%s1131 + $0x68] sm:$0x1] %vm878, %v1047
      %1160 = vst.msk [vmem:[%s1131 + $0x6c] sm:$0xe] %vm1132, %v1048
      %1161 = vst.msk [vmem:[%s1131 + $0x70] sm:$0xf] %vm863, %v1051
      %1162 = vst.msk [vmem:[%s1131 + $0x74] sm:$0x1] %vm878, %v1052
      %1163 = vst.msk [vmem:[%s1131 + $0x78] sm:$0xe] %vm1132, %v1053
      %1164 = vst.msk [vmem:[%s1131 + $0x7c] sm:$0xf] %vm863, %v1056
      %1165 = vst.msk [vmem:[%s1131 + $0x80] sm:$0x1] %vm878, %v1057
      %1166 = vst.msk [vmem:[%s1131 + $0x84] sm:$0xe] %vm1132, %v1058
      %1167 = vst.msk [vmem:[%s1131 + $0x88] sm:$0xf] %vm863, %v1061
      %1168 = vst.msk [vmem:[%s1131 + $0x8c] sm:$0x1] %vm878, %v1062
      %1169 = vst.msk [vmem:[%s1131 + $0x90] sm:$0xe] %vm1132, %v1063
      %1170 = vst.msk [vmem:[%s1131 + $0x94] sm:$0xf] %vm863, %v1066
      %1171 = vst.msk [vmem:[%s1131 + $0x98] sm:$0x1] %vm878, %v1067
      %1172 = vst.msk [vmem:[%s1131 + $0x9c] sm:$0xe] %vm1132, %v1068
      %1173 = vst.msk [vmem:[%s1131 + $0xa0] sm:$0xf] %vm863, %v1071
      %1174 = vst.msk [vmem:[%s1131 + $0xa4] sm:$0x1] %vm878, %v1072
      %1175 = vst.msk [vmem:[%s1131 + $0xa8] sm:$0xe] %vm1132, %v1073
      %1176 = vst.msk [vmem:[%s1131 + $0xac] sm:$0xf] %vm863, %v1076
      %1177 = vst.msk [vmem:[%s1131 + $0xb0] sm:$0x1] %vm878, %v1077
      %1178 = vst.msk [vmem:[%s1131 + $0xb4] sm:$0xe] %vm1132, %v1078
      %1179 = vst.msk [vmem:[%s1131 + $0xb8] sm:$0xf] %vm863, %v1081
      %1180 = vst.msk [vmem:[%s1131 + $0xbc] sm:$0x1] %vm878, %v1082
      %s1181 = sadd.s32 %s258, 2
      %s1182 = smul.u32 %s1181, 3
      %s1183 = smul.addr %s1182, 4
      %s1184 = scalar_lea.vmem [#allocation2], %s1183
      %v1185 = vld [vmem:[%s1184] sm:$0xe]
      %v1186 = vld [vmem:[%s1184 + $0x4] sm:$0xf]
      %v1187 = vld [vmem:[%s1184 + $0x8] sm:$0x1]
      %v1188 = vld [vmem:[%s1184 + $0xc] sm:$0xe]
      %v1189 = vld [vmem:[%s1184 + $0x10] sm:$0xf]
      %v1190 = vld [vmem:[%s1184 + $0x14] sm:$0x1]
      %v1191 = vld [vmem:[%s1184 + $0x18] sm:$0xe]
      %v1192 = vld [vmem:[%s1184 + $0x1c] sm:$0xf]
      %v1193 = vld [vmem:[%s1184 + $0x20] sm:$0x1]
      %v1194 = vld [vmem:[%s1184 + $0x24] sm:$0xe]
      %v1195 = vld [vmem:[%s1184 + $0x28] sm:$0xf]
      %v1196 = vld [vmem:[%s1184 + $0x2c] sm:$0x1]
      %vm1209 = vcmask 1042432
      %vm1210 = vcmask 1046532
      %vm1211 = vmor %vm1209, %vm1210
      %v1212 = vrot.slane %v1185, 5
      %v1213 = vrot.slane %v1212, 4
      %v1214 = vrot.slane %v1186, 5
      %v1215 = vsel %vm1211, %v1213, %v1214
      %v1216 = vrot.slane %v1214, 4
      %v1217 = vrot.slane %v1187, 5
      %v1218 = vsel %vm1211, %v1216, %v1217
      %v1219 = vrot.slane %v1188, 5
      %v1220 = vrot.slane %v1219, 4
      %v1221 = vrot.slane %v1189, 5
      %v1222 = vsel %vm1211, %v1220, %v1221
      %v1223 = vrot.slane %v1221, 4
      %v1224 = vrot.slane %v1190, 5
      %v1225 = vsel %vm1211, %v1223, %v1224
      %v1226 = vrot.slane %v1191, 5
      %v1227 = vrot.slane %v1226, 4
      %v1228 = vrot.slane %v1192, 5
      %v1229 = vsel %vm1211, %v1227, %v1228
      %v1230 = vrot.slane %v1228, 4
      %v1231 = vrot.slane %v1193, 5
      %v1232 = vsel %vm1211, %v1230, %v1231
      %v1233 = vrot.slane %v1194, 5
      %v1234 = vrot.slane %v1233, 4
      %v1235 = vrot.slane %v1195, 5
      %v1236 = vsel %vm1211, %v1234, %v1235
      %v1237 = vrot.slane %v1235, 4
      %v1238 = vrot.slane %v1196, 5
      %v1239 = vsel %vm1211, %v1237, %v1238
      %v1240 = vld [vmem:[%s3] sm:$0xf]
      %v1241 = vld [vmem:[%s3 + $0x4] sm:$0xf]
      %v1242 = vld [vmem:[%s3 + $0x8] sm:$0xf]
      %v1243 = vld [vmem:[%s3 + $0xc] sm:$0xf]
      %v1244 = vld [vmem:[#allocation2] sm:$0xf]
      %v1245 = vld [vmem:[#allocation2 + $0x4] sm:$0xf]
      %v1246 = vld [vmem:[#allocation2 + $0x8] sm:$0x3]
      %v1247 = vld [vmem:[#allocation2 + $0xc] sm:$0xf]
      %v1248 = vld [vmem:[#allocation2 + $0x10] sm:$0xf]
      %v1249 = vld [vmem:[#allocation2 + $0x14] sm:$0x3]
      %v1250 = vld [vmem:[#allocation2 + $0x18] sm:$0xf]
      %v1251 = vld [vmem:[#allocation2 + $0x1c] sm:$0xf]
      %v1252 = vld [vmem:[#allocation2 + $0x20] sm:$0x3]
      %v1253 = vld [vmem:[#allocation2 + $0x24] sm:$0xf]
      %v1254 = vld [vmem:[#allocation2 + $0x28] sm:$0xf]
      %v1255 = vld [vmem:[#allocation2 + $0x2c] sm:$0x3]
      %v1256 = vld [vmem:[#allocation2 + $0x30] sm:$0xf]
      %v1257 = vld [vmem:[#allocation2 + $0x34] sm:$0xf]
      %v1258 = vld [vmem:[#allocation2 + $0x38] sm:$0x3]
      %v1259 = vld [vmem:[#allocation2 + $0x3c] sm:$0xf]
      %v1260 = vld [vmem:[#allocation2 + $0x40] sm:$0xf]
      %v1261 = vld [vmem:[#allocation2 + $0x44] sm:$0x3]
      %v1262 = vld [vmem:[#allocation2 + $0x48] sm:$0xf]
      %v1263 = vld [vmem:[#allocation2 + $0x4c] sm:$0xf]
      %v1264 = vld [vmem:[#allocation2 + $0x50] sm:$0x3]
      %v1265 = vld [vmem:[#allocation2 + $0x54] sm:$0xf]
      %v1266 = vld [vmem:[#allocation2 + $0x58] sm:$0xf]
      %v1267 = vld [vmem:[#allocation2 + $0x5c] sm:$0x3]
      %v1268 = vld [vmem:[#allocation2 + $0x60] sm:$0xf]
      %v1269 = vld [vmem:[#allocation2 + $0x64] sm:$0xf]
      %v1270 = vld [vmem:[#allocation2 + $0x68] sm:$0x3]
      %v1271 = vld [vmem:[#allocation2 + $0x6c] sm:$0xf]
      %v1272 = vld [vmem:[#allocation2 + $0x70] sm:$0xf]
      %v1273 = vld [vmem:[#allocation2 + $0x74] sm:$0x3]
      %v1274 = vld [vmem:[#allocation2 + $0x78] sm:$0xf]
      %v1275 = vld [vmem:[#allocation2 + $0x7c] sm:$0xf]
      %v1276 = vld [vmem:[#allocation2 + $0x80] sm:$0x3]
      %v1277 = vld [vmem:[#allocation2 + $0x84] sm:$0xf]
      %v1278 = vld [vmem:[#allocation2 + $0x88] sm:$0xf]
      %v1279 = vld [vmem:[#allocation2 + $0x8c] sm:$0x3]
      %v1280 = vld [vmem:[#allocation2 + $0x90] sm:$0xf]
      %v1281 = vld [vmem:[#allocation2 + $0x94] sm:$0xf]
      %v1282 = vld [vmem:[#allocation2 + $0x98] sm:$0x3]
      %v1283 = vld [vmem:[#allocation2 + $0x9c] sm:$0xf]
      %v1284 = vld [vmem:[#allocation2 + $0xa0] sm:$0xf]
      %v1285 = vld [vmem:[#allocation2 + $0xa4] sm:$0x3]
      %v1286 = vld [vmem:[#allocation2 + $0xa8] sm:$0xf]
      %v1287 = vld [vmem:[#allocation2 + $0xac] sm:$0xf]
      %v1288 = vld [vmem:[#allocation2 + $0xb0] sm:$0x3]
      %v1289 = vld [vmem:[#allocation2 + $0xb4] sm:$0xf]
      %v1290 = vld [vmem:[#allocation2 + $0xb8] sm:$0xf]
      %v1291 = vld [vmem:[#allocation2 + $0xbc] sm:$0x3]
      %v1292 = vld [vmem:[#allocation2 + $0xc0] sm:$0xf]
      %v1293 = vld [vmem:[#allocation2 + $0xc4] sm:$0xf]
      %v1294 = vld [vmem:[#allocation2 + $0xc8] sm:$0x3]
      %v1295 = vld [vmem:[#allocation2 + $0xcc] sm:$0xf]
      %v1296 = vld [vmem:[#allocation2 + $0xd0] sm:$0xf]
      %v1297 = vld [vmem:[#allocation2 + $0xd4] sm:$0x3]
      %v1298 = vld [vmem:[#allocation2 + $0xd8] sm:$0xf]
      %v1299 = vld [vmem:[#allocation2 + $0xdc] sm:$0xf]
      %v1300 = vld [vmem:[#allocation2 + $0xe0] sm:$0x3]
      %v1301 = vld [vmem:[#allocation2 + $0xe4] sm:$0xf]
      %v1302 = vld [vmem:[#allocation2 + $0xe8] sm:$0xf]
      %v1303 = vld [vmem:[#allocation2 + $0xec] sm:$0x3]
      %v1304 = vmax.bf16 %v1244, %v1247
      %v1305 = vmax.bf16 %v1245, %v1248
      %v1306 = vmax.bf16 %v1246, %v1249
      %v1307 = vmax.bf16 %v1247, %v1250
      %v1308 = vmax.bf16 %v1248, %v1251
      %v1309 = vmax.bf16 %v1249, %v1252
      %v1310 = vmax.bf16 %v1250, %v1253
      %v1311 = vmax.bf16 %v1251, %v1254
      %v1312 = vmax.bf16 %v1252, %v1255
      %v1313 = vmax.bf16 %v1253, %v1256
      %v1314 = vmax.bf16 %v1254, %v1257
      %v1315 = vmax.bf16 %v1255, %v1258
      %v1316 = vmax.bf16 %v1256, %v1259
      %v1317 = vmax.bf16 %v1257, %v1260
      %v1318 = vmax.bf16 %v1258, %v1261
      %v1319 = vmax.bf16 %v1259, %v1262
      %v1320 = vmax.bf16 %v1260, %v1263
      %v1321 = vmax.bf16 %v1261, %v1264
      %v1322 = vmax.bf16 %v1262, %v1265
      %v1323 = vmax.bf16 %v1263, %v1266
      %v1324 = vmax.bf16 %v1264, %v1267
      %v1325 = vmax.bf16 %v1265, %v1268
      %v1326 = vmax.bf16 %v1266, %v1269
      %v1327 = vmax.bf16 %v1267, %v1270
      %v1328 = vmax.bf16 %v1268, %v1271
      %v1329 = vmax.bf16 %v1269, %v1272
      %v1330 = vmax.bf16 %v1270, %v1273
      %v1331 = vmax.bf16 %v1271, %v1274
      %v1332 = vmax.bf16 %v1272, %v1275
      %v1333 = vmax.bf16 %v1273, %v1276
      %v1334 = vmax.bf16 %v1274, %v1277
      %v1335 = vmax.bf16 %v1275, %v1278
      %v1336 = vmax.bf16 %v1276, %v1279
      %v1337 = vmax.bf16 %v1277, %v1280
      %v1338 = vmax.bf16 %v1278, %v1281
      %v1339 = vmax.bf16 %v1279, %v1282
      %v1340 = vmax.bf16 %v1280, %v1283
      %v1341 = vmax.bf16 %v1281, %v1284
      %v1342 = vmax.bf16 %v1282, %v1285
      %v1343 = vmax.bf16 %v1283, %v1286
      %v1344 = vmax.bf16 %v1284, %v1287
      %v1345 = vmax.bf16 %v1285, %v1288
      %v1346 = vmax.bf16 %v1286, %v1289
      %v1347 = vmax.bf16 %v1287, %v1290
      %v1348 = vmax.bf16 %v1288, %v1291
      %v1349 = vmax.bf16 %v1289, %v1292
      %v1350 = vmax.bf16 %v1290, %v1293
      %v1351 = vmax.bf16 %v1291, %v1294
      %v1352 = vmax.bf16 %v1304, %v1250
      %v1353 = vmax.bf16 %v1305, %v1251
      %v1354 = vmax.bf16 %v1306, %v1252
      %v1355 = vmax.bf16 %v1307, %v1253
      %v1356 = vmax.bf16 %v1308, %v1254
      %v1357 = vmax.bf16 %v1309, %v1255
      %v1358 = vmax.bf16 %v1310, %v1256
      %v1359 = vmax.bf16 %v1311, %v1257
      %v1360 = vmax.bf16 %v1312, %v1258
      %v1361 = vmax.bf16 %v1313, %v1259
      %v1362 = vmax.bf16 %v1314, %v1260
      %v1363 = vmax.bf16 %v1315, %v1261
      %v1364 = vmax.bf16 %v1316, %v1262
      %v1365 = vmax.bf16 %v1317, %v1263
      %v1366 = vmax.bf16 %v1318, %v1264
      %v1367 = vmax.bf16 %v1319, %v1265
      %v1368 = vmax.bf16 %v1320, %v1266
      %v1369 = vmax.bf16 %v1321, %v1267
      %v1370 = vmax.bf16 %v1322, %v1268
      %v1371 = vmax.bf16 %v1323, %v1269
      %v1372 = vmax.bf16 %v1324, %v1270
      %v1373 = vmax.bf16 %v1325, %v1271
      %v1374 = vmax.bf16 %v1326, %v1272
      %v1375 = vmax.bf16 %v1327, %v1273
      %v1376 = vmax.bf16 %v1328, %v1274
      %v1377 = vmax.bf16 %v1329, %v1275
      %v1378 = vmax.bf16 %v1330, %v1276
      %v1379 = vmax.bf16 %v1331, %v1277
      %v1380 = vmax.bf16 %v1332, %v1278
      %v1381 = vmax.bf16 %v1333, %v1279
      %v1382 = vmax.bf16 %v1334, %v1280
      %v1383 = vmax.bf16 %v1335, %v1281
      %v1384 = vmax.bf16 %v1336, %v1282
      %v1385 = vmax.bf16 %v1337, %v1283
      %v1386 = vmax.bf16 %v1338, %v1284
      %v1387 = vmax.bf16 %v1339, %v1285
      %v1388 = vmax.bf16 %v1340, %v1286
      %v1389 = vmax.bf16 %v1341, %v1287
      %v1390 = vmax.bf16 %v1342, %v1288
      %v1391 = vmax.bf16 %v1343, %v1289
      %v1392 = vmax.bf16 %v1344, %v1290
      %v1393 = vmax.bf16 %v1345, %v1291
      %v1394 = vmax.bf16 %v1346, %v1292
      %v1395 = vmax.bf16 %v1347, %v1293
      %v1396 = vmax.bf16 %v1348, %v1294
      %v1397 = vmax.bf16 %v1349, %v1295
      %v1398 = vmax.bf16 %v1350, %v1296
      %v1399 = vmax.bf16 %v1351, %v1297
      %v1400 = vmax.bf16 %v1352, %v1253
      %v1401 = vmax.bf16 %v1353, %v1254
      %v1402 = vmax.bf16 %v1354, %v1255
      %v1403 = vmax.bf16 %v1355, %v1256
      %v1404 = vmax.bf16 %v1356, %v1257
      %v1405 = vmax.bf16 %v1357, %v1258
      %v1406 = vmax.bf16 %v1358, %v1259
      %v1407 = vmax.bf16 %v1359, %v1260
      %v1408 = vmax.bf16 %v1360, %v1261
      %v1409 = vmax.bf16 %v1361, %v1262
      %v1410 = vmax.bf16 %v1362, %v1263
      %v1411 = vmax.bf16 %v1363, %v1264
      %v1412 = vmax.bf16 %v1364, %v1265
      %v1413 = vmax.bf16 %v1365, %v1266
      %v1414 = vmax.bf16 %v1366, %v1267
      %v1415 = vmax.bf16 %v1367, %v1268
      %v1416 = vmax.bf16 %v1368, %v1269
      %v1417 = vmax.bf16 %v1369, %v1270
      %v1418 = vmax.bf16 %v1370, %v1271
      %v1419 = vmax.bf16 %v1371, %v1272
      %v1420 = vmax.bf16 %v1372, %v1273
      %v1421 = vmax.bf16 %v1373, %v1274
      %v1422 = vmax.bf16 %v1374, %v1275
      %v1423 = vmax.bf16 %v1375, %v1276
      %v1424 = vmax.bf16 %v1376, %v1277
      %v1425 = vmax.bf16 %v1377, %v1278
      %v1426 = vmax.bf16 %v1378, %v1279
      %v1427 = vmax.bf16 %v1379, %v1280
      %v1428 = vmax.bf16 %v1380, %v1281
      %v1429 = vmax.bf16 %v1381, %v1282
      %v1430 = vmax.bf16 %v1382, %v1283
      %v1431 = vmax.bf16 %v1383, %v1284
      %v1432 = vmax.bf16 %v1384, %v1285
      %v1433 = vmax.bf16 %v1385, %v1286
      %v1434 = vmax.bf16 %v1386, %v1287
      %v1435 = vmax.bf16 %v1387, %v1288
      %v1436 = vmax.bf16 %v1388, %v1289
      %v1437 = vmax.bf16 %v1389, %v1290
      %v1438 = vmax.bf16 %v1390, %v1291
      %v1439 = vmax.bf16 %v1391, %v1292
      %v1440 = vmax.bf16 %v1392, %v1293
      %v1441 = vmax.bf16 %v1393, %v1294
      %v1442 = vmax.bf16 %v1394, %v1295
      %v1443 = vmax.bf16 %v1395, %v1296
      %v1444 = vmax.bf16 %v1396, %v1297
      %v1445 = vmax.bf16 %v1397, %v1298
      %v1446 = vmax.bf16 %v1398, %v1299
      %v1447 = vmax.bf16 %v1399, %v1300
      %v1448 = vmax.bf16 %v1400, %v1256
      %v1449 = vmax.bf16 %v1401, %v1257
      %v1450 = vmax.bf16 %v1402, %v1258
      %v1451 = vmax.bf16 %v1403, %v1259
      %v1452 = vmax.bf16 %v1404, %v1260
      %v1453 = vmax.bf16 %v1405, %v1261
      %v1454 = vmax.bf16 %v1406, %v1262
      %v1455 = vmax.bf16 %v1407, %v1263
      %v1456 = vmax.bf16 %v1408, %v1264
      %v1457 = vmax.bf16 %v1409, %v1265
      %v1458 = vmax.bf16 %v1410, %v1266
      %v1459 = vmax.bf16 %v1411, %v1267
      %v1460 = vmax.bf16 %v1412, %v1268
      %v1461 = vmax.bf16 %v1413, %v1269
      %v1462 = vmax.bf16 %v1414, %v1270
      %v1463 = vmax.bf16 %v1415, %v1271
      %v1464 = vmax.bf16 %v1416, %v1272
      %v1465 = vmax.bf16 %v1417, %v1273
      %v1466 = vmax.bf16 %v1418, %v1274
      %v1467 = vmax.bf16 %v1419, %v1275
      %v1468 = vmax.bf16 %v1420, %v1276
      %v1469 = vmax.bf16 %v1421, %v1277
      %v1470 = vmax.bf16 %v1422, %v1278
      %v1471 = vmax.bf16 %v1423, %v1279
      %v1472 = vmax.bf16 %v1424, %v1280
      %v1473 = vmax.bf16 %v1425, %v1281
      %v1474 = vmax.bf16 %v1426, %v1282
      %v1475 = vmax.bf16 %v1427, %v1283
      %v1476 = vmax.bf16 %v1428, %v1284
      %v1477 = vmax.bf16 %v1429, %v1285
      %v1478 = vmax.bf16 %v1430, %v1286
      %v1479 = vmax.bf16 %v1431, %v1287
      %v1480 = vmax.bf16 %v1432, %v1288
      %v1481 = vmax.bf16 %v1433, %v1289
      %v1482 = vmax.bf16 %v1434, %v1290
      %v1483 = vmax.bf16 %v1435, %v1291
      %v1484 = vmax.bf16 %v1436, %v1292
      %v1485 = vmax.bf16 %v1437, %v1293
      %v1486 = vmax.bf16 %v1438, %v1294
      %v1487 = vmax.bf16 %v1439, %v1295
      %v1488 = vmax.bf16 %v1440, %v1296
      %v1489 = vmax.bf16 %v1441, %v1297
      %v1490 = vmax.bf16 %v1442, %v1298
      %v1491 = vmax.bf16 %v1443, %v1299
      %v1492 = vmax.bf16 %v1444, %v1300
      %v1493 = vmax.bf16 %v1445, %v1301
      %v1494 = vmax.bf16 %v1446, %v1302
      %v1495 = vmax.bf16 %v1447, %v1303
      %vm1496 = vsmask.f32 3328
      %vm1497 = vsmask.f32 7440
      %vm1498 = vmor %vm1496, %vm1497
      %v1500 = vshrl.u32 %v1448, 16
      %v1502 = vrot.slane %v1500, 4
      %v1503 = vshll.u32 %v1448, 16
      %v1505 = vrot.slane %v1503, 5
      %v1506 = vor.u32 %v1502, %v1505
      %v1507 = vrot.slane %v1506, 4
      %v1509 = vshll.u32 %v1449, 16
      %v1511 = vrot.slane %v1509, 5
      %v1512 = vsel %vm1498, %v1507, %v1511
      %v1513 = vshrl.u32 %v1449, 16
      %v1515 = vrot.slane %v1513, 4
      %v1516 = vor.u32 %v1515, %v1511
      %v1517 = vrot.slane %v1516, 4
      %v1519 = vshll.u32 %v1450, 16
      %v1521 = vrot.slane %v1519, 5
      %v1522 = vsel %vm1498, %v1517, %v1521
      %v1524 = vshrl.u32 %v1451, 16
      %v1526 = vrot.slane %v1524, 4
      %v1527 = vshll.u32 %v1451, 16
      %v1529 = vrot.slane %v1527, 5
      %v1530 = vor.u32 %v1526, %v1529
      %v1531 = vrot.slane %v1530, 4
      %v1533 = vshll.u32 %v1452, 16
      %v1535 = vrot.slane %v1533, 5
      %v1536 = vsel %vm1498, %v1531, %v1535
      %v1537 = vshrl.u32 %v1452, 16
      %v1539 = vrot.slane %v1537, 4
      %v1540 = vor.u32 %v1539, %v1535
      %v1541 = vrot.slane %v1540, 4
      %v1543 = vshll.u32 %v1453, 16
      %v1545 = vrot.slane %v1543, 5
      %v1546 = vsel %vm1498, %v1541, %v1545
      %v1548 = vshrl.u32 %v1454, 16
      %v1550 = vrot.slane %v1548, 4
      %v1551 = vshll.u32 %v1454, 16
      %v1553 = vrot.slane %v1551, 5
      %v1554 = vor.u32 %v1550, %v1553
      %v1555 = vrot.slane %v1554, 4
      %v1557 = vshll.u32 %v1455, 16
      %v1559 = vrot.slane %v1557, 5
      %v1560 = vsel %vm1498, %v1555, %v1559
      %v1561 = vshrl.u32 %v1455, 16
      %v1563 = vrot.slane %v1561, 4
      %v1564 = vor.u32 %v1563, %v1559
      %v1565 = vrot.slane %v1564, 4
      %v1567 = vshll.u32 %v1456, 16
      %v1569 = vrot.slane %v1567, 5
      %v1570 = vsel %vm1498, %v1565, %v1569
      %v1572 = vshrl.u32 %v1457, 16
      %v1574 = vrot.slane %v1572, 4
      %v1575 = vshll.u32 %v1457, 16
      %v1577 = vrot.slane %v1575, 5
      %v1578 = vor.u32 %v1574, %v1577
      %v1579 = vrot.slane %v1578, 4
      %v1581 = vshll.u32 %v1458, 16
      %v1583 = vrot.slane %v1581, 5
      %v1584 = vsel %vm1498, %v1579, %v1583
      %v1585 = vshrl.u32 %v1458, 16
      %v1587 = vrot.slane %v1585, 4
      %v1588 = vor.u32 %v1587, %v1583
      %v1589 = vrot.slane %v1588, 4
      %v1591 = vshll.u32 %v1459, 16
      %v1593 = vrot.slane %v1591, 5
      %v1594 = vsel %vm1498, %v1589, %v1593
      %v1596 = vshrl.u32 %v1460, 16
      %v1598 = vrot.slane %v1596, 4
      %v1599 = vshll.u32 %v1460, 16
      %v1601 = vrot.slane %v1599, 5
      %v1602 = vor.u32 %v1598, %v1601
      %v1603 = vrot.slane %v1602, 4
      %v1605 = vshll.u32 %v1461, 16
      %v1607 = vrot.slane %v1605, 5
      %v1608 = vsel %vm1498, %v1603, %v1607
      %v1609 = vshrl.u32 %v1461, 16
      %v1611 = vrot.slane %v1609, 4
      %v1612 = vor.u32 %v1611, %v1607
      %v1613 = vrot.slane %v1612, 4
      %v1615 = vshll.u32 %v1462, 16
      %v1617 = vrot.slane %v1615, 5
      %v1618 = vsel %vm1498, %v1613, %v1617
      %v1620 = vshrl.u32 %v1463, 16
      %v1622 = vrot.slane %v1620, 4
      %v1623 = vshll.u32 %v1463, 16
      %v1625 = vrot.slane %v1623, 5
      %v1626 = vor.u32 %v1622, %v1625
      %v1627 = vrot.slane %v1626, 4
      %v1629 = vshll.u32 %v1464, 16
      %v1631 = vrot.slane %v1629, 5
      %v1632 = vsel %vm1498, %v1627, %v1631
      %v1633 = vshrl.u32 %v1464, 16
      %v1635 = vrot.slane %v1633, 4
      %v1636 = vor.u32 %v1635, %v1631
      %v1637 = vrot.slane %v1636, 4
      %v1639 = vshll.u32 %v1465, 16
      %v1641 = vrot.slane %v1639, 5
      %v1642 = vsel %vm1498, %v1637, %v1641
      %v1644 = vshrl.u32 %v1466, 16
      %v1646 = vrot.slane %v1644, 4
      %v1647 = vshll.u32 %v1466, 16
      %v1649 = vrot.slane %v1647, 5
      %v1650 = vor.u32 %v1646, %v1649
      %v1651 = vrot.slane %v1650, 4
      %v1653 = vshll.u32 %v1467, 16
      %v1655 = vrot.slane %v1653, 5
      %v1656 = vsel %vm1498, %v1651, %v1655
      %v1657 = vshrl.u32 %v1467, 16
      %v1659 = vrot.slane %v1657, 4
      %v1660 = vor.u32 %v1659, %v1655
      %v1661 = vrot.slane %v1660, 4
      %v1663 = vshll.u32 %v1468, 16
      %v1665 = vrot.slane %v1663, 5
      %v1666 = vsel %vm1498, %v1661, %v1665
      %v1668 = vshrl.u32 %v1469, 16
      %v1670 = vrot.slane %v1668, 4
      %v1671 = vshll.u32 %v1469, 16
      %v1673 = vrot.slane %v1671, 5
      %v1674 = vor.u32 %v1670, %v1673
      %v1675 = vrot.slane %v1674, 4
      %v1677 = vshll.u32 %v1470, 16
      %v1679 = vrot.slane %v1677, 5
      %v1680 = vsel %vm1498, %v1675, %v1679
      %v1681 = vshrl.u32 %v1470, 16
      %v1683 = vrot.slane %v1681, 4
      %v1684 = vor.u32 %v1683, %v1679
      %v1685 = vrot.slane %v1684, 4
      %v1687 = vshll.u32 %v1471, 16
      %v1689 = vrot.slane %v1687, 5
      %v1690 = vsel %vm1498, %v1685, %v1689
      %v1692 = vshrl.u32 %v1472, 16
      %v1694 = vrot.slane %v1692, 4
      %v1695 = vshll.u32 %v1472, 16
      %v1697 = vrot.slane %v1695, 5
      %v1698 = vor.u32 %v1694, %v1697
      %v1699 = vrot.slane %v1698, 4
      %v1701 = vshll.u32 %v1473, 16
      %v1703 = vrot.slane %v1701, 5
      %v1704 = vsel %vm1498, %v1699, %v1703
      %v1705 = vshrl.u32 %v1473, 16
      %v1707 = vrot.slane %v1705, 4
      %v1708 = vor.u32 %v1707, %v1703
      %v1709 = vrot.slane %v1708, 4
      %v1711 = vshll.u32 %v1474, 16
      %v1713 = vrot.slane %v1711, 5
      %v1714 = vsel %vm1498, %v1709, %v1713
      %v1716 = vshrl.u32 %v1475, 16
      %v1718 = vrot.slane %v1716, 4
      %v1719 = vshll.u32 %v1475, 16
      %v1721 = vrot.slane %v1719, 5
      %v1722 = vor.u32 %v1718, %v1721
      %v1723 = vrot.slane %v1722, 4
      %v1725 = vshll.u32 %v1476, 16
      %v1727 = vrot.slane %v1725, 5
      %v1728 = vsel %vm1498, %v1723, %v1727
      %v1729 = vshrl.u32 %v1476, 16
      %v1731 = vrot.slane %v1729, 4
      %v1732 = vor.u32 %v1731, %v1727
      %v1733 = vrot.slane %v1732, 4
      %v1735 = vshll.u32 %v1477, 16
      %v1737 = vrot.slane %v1735, 5
      %v1738 = vsel %vm1498, %v1733, %v1737
      %v1740 = vshrl.u32 %v1478, 16
      %v1742 = vrot.slane %v1740, 4
      %v1743 = vshll.u32 %v1478, 16
      %v1745 = vrot.slane %v1743, 5
      %v1746 = vor.u32 %v1742, %v1745
      %v1747 = vrot.slane %v1746, 4
      %v1749 = vshll.u32 %v1479, 16
      %v1751 = vrot.slane %v1749, 5
      %v1752 = vsel %vm1498, %v1747, %v1751
      %v1753 = vshrl.u32 %v1479, 16
      %v1755 = vrot.slane %v1753, 4
      %v1756 = vor.u32 %v1755, %v1751
      %v1757 = vrot.slane %v1756, 4
      %v1759 = vshll.u32 %v1480, 16
      %v1761 = vrot.slane %v1759, 5
      %v1762 = vsel %vm1498, %v1757, %v1761
      %v1764 = vshrl.u32 %v1481, 16
      %v1766 = vrot.slane %v1764, 4
      %v1767 = vshll.u32 %v1481, 16
      %v1769 = vrot.slane %v1767, 5
      %v1770 = vor.u32 %v1766, %v1769
      %v1771 = vrot.slane %v1770, 4
      %v1773 = vshll.u32 %v1482, 16
      %v1775 = vrot.slane %v1773, 5
      %v1776 = vsel %vm1498, %v1771, %v1775
      %v1777 = vshrl.u32 %v1482, 16
      %v1779 = vrot.slane %v1777, 4
      %v1780 = vor.u32 %v1779, %v1775
      %v1781 = vrot.slane %v1780, 4
      %v1783 = vshll.u32 %v1483, 16
      %v1785 = vrot.slane %v1783, 5
      %v1786 = vsel %vm1498, %v1781, %v1785
      %v1788 = vshrl.u32 %v1484, 16
      %v1790 = vrot.slane %v1788, 4
      %v1791 = vshll.u32 %v1484, 16
      %v1793 = vrot.slane %v1791, 5
      %v1794 = vor.u32 %v1790, %v1793
      %v1795 = vrot.slane %v1794, 4
      %v1797 = vshll.u32 %v1485, 16
      %v1799 = vrot.slane %v1797, 5
      %v1800 = vsel %vm1498, %v1795, %v1799
      %v1801 = vshrl.u32 %v1485, 16
      %v1803 = vrot.slane %v1801, 4
      %v1804 = vor.u32 %v1803, %v1799
      %v1805 = vrot.slane %v1804, 4
      %v1807 = vshll.u32 %v1486, 16
      %v1809 = vrot.slane %v1807, 5
      %v1810 = vsel %vm1498, %v1805, %v1809
      %v1812 = vshrl.u32 %v1487, 16
      %v1814 = vrot.slane %v1812, 4
      %v1815 = vshll.u32 %v1487, 16
      %v1817 = vrot.slane %v1815, 5
      %v1818 = vor.u32 %v1814, %v1817
      %v1819 = vrot.slane %v1818, 4
      %v1821 = vshll.u32 %v1488, 16
      %v1823 = vrot.slane %v1821, 5
      %v1824 = vsel %vm1498, %v1819, %v1823
      %v1825 = vshrl.u32 %v1488, 16
      %v1827 = vrot.slane %v1825, 4
      %v1828 = vor.u32 %v1827, %v1823
      %v1829 = vrot.slane %v1828, 4
      %v1831 = vshll.u32 %v1489, 16
      %v1833 = vrot.slane %v1831, 5
      %v1834 = vsel %vm1498, %v1829, %v1833
      %v1836 = vshrl.u32 %v1490, 16
      %v1838 = vrot.slane %v1836, 4
      %v1839 = vshll.u32 %v1490, 16
      %v1841 = vrot.slane %v1839, 5
      %v1842 = vor.u32 %v1838, %v1841
      %v1843 = vrot.slane %v1842, 4
      %v1845 = vshll.u32 %v1491, 16
      %v1847 = vrot.slane %v1845, 5
      %v1848 = vsel %vm1498, %v1843, %v1847
      %v1849 = vshrl.u32 %v1491, 16
      %v1851 = vrot.slane %v1849, 4
      %v1852 = vor.u32 %v1851, %v1847
      %v1853 = vrot.slane %v1852, 4
      %v1855 = vshll.u32 %v1492, 16
      %v1857 = vrot.slane %v1855, 5
      %v1858 = vsel %vm1498, %v1853, %v1857
      %v1860 = vshrl.u32 %v1493, 16
      %v1862 = vrot.slane %v1860, 4
      %v1863 = vshll.u32 %v1493, 16
      %v1865 = vrot.slane %v1863, 5
      %v1866 = vor.u32 %v1862, %v1865
      %v1867 = vrot.slane %v1866, 4
      %v1869 = vshll.u32 %v1494, 16
      %v1871 = vrot.slane %v1869, 5
      %v1872 = vsel %vm1498, %v1867, %v1871
      %v1873 = vshrl.u32 %v1494, 16
      %v1875 = vrot.slane %v1873, 4
      %v1876 = vor.u32 %v1875, %v1871
      %v1877 = vrot.slane %v1876, 4
      %v1879 = vshll.u32 %v1495, 16
      %v1881 = vrot.slane %v1879, 5
      %v1882 = vsel %vm1498, %v1877, %v1881
      %v1915 = vmax.bf16 %v1448, %v1512
      %v1916 = vmax.bf16 %v1449, %v1522
      %v1917 = vmax.bf16 %v1451, %v1536
      %v1918 = vmax.bf16 %v1452, %v1546
      %v1919 = vmax.bf16 %v1454, %v1560
      %v1920 = vmax.bf16 %v1455, %v1570
      %v1921 = vmax.bf16 %v1457, %v1584
      %v1922 = vmax.bf16 %v1458, %v1594
      %v1923 = vmax.bf16 %v1460, %v1608
      %v1924 = vmax.bf16 %v1461, %v1618
      %v1925 = vmax.bf16 %v1463, %v1632
      %v1926 = vmax.bf16 %v1464, %v1642
      %v1927 = vmax.bf16 %v1466, %v1656
      %v1928 = vmax.bf16 %v1467, %v1666
      %v1929 = vmax.bf16 %v1469, %v1680
      %v1930 = vmax.bf16 %v1470, %v1690
      %v1931 = vmax.bf16 %v1472, %v1704
      %v1932 = vmax.bf16 %v1473, %v1714
      %v1933 = vmax.bf16 %v1475, %v1728
      %v1934 = vmax.bf16 %v1476, %v1738
      %v1935 = vmax.bf16 %v1478, %v1752
      %v1936 = vmax.bf16 %v1479, %v1762
      %v1937 = vmax.bf16 %v1481, %v1776
      %v1938 = vmax.bf16 %v1482, %v1786
      %v1939 = vmax.bf16 %v1484, %v1800
      %v1940 = vmax.bf16 %v1485, %v1810
      %v1941 = vmax.bf16 %v1487, %v1824
      %v1942 = vmax.bf16 %v1488, %v1834
      %v1943 = vmax.bf16 %v1490, %v1848
      %v1944 = vmax.bf16 %v1491, %v1858
      %v1945 = vmax.bf16 %v1493, %v1872
      %v1946 = vmax.bf16 %v1494, %v1882
      %v1995 = vrot.slane %v1448, 5
      %v1996 = vrot.slane %v1995, 4
      %v1997 = vrot.slane %v1449, 5
      %v1998 = vsel %vm1211, %v1996, %v1997
      %v1999 = vrot.slane %v1997, 4
      %v2000 = vrot.slane %v1450, 5
      %v2001 = vsel %vm1211, %v1999, %v2000
      %v2002 = vrot.slane %v1451, 5
      %v2003 = vrot.slane %v2002, 4
      %v2004 = vrot.slane %v1452, 5
      %v2005 = vsel %vm1211, %v2003, %v2004
      %v2006 = vrot.slane %v2004, 4
      %v2007 = vrot.slane %v1453, 5
      %v2008 = vsel %vm1211, %v2006, %v2007
      %v2009 = vrot.slane %v1454, 5
      %v2010 = vrot.slane %v2009, 4
      %v2011 = vrot.slane %v1455, 5
      %v2012 = vsel %vm1211, %v2010, %v2011
      %v2013 = vrot.slane %v2011, 4
      %v2014 = vrot.slane %v1456, 5
      %v2015 = vsel %vm1211, %v2013, %v2014
      %v2016 = vrot.slane %v1457, 5
      %v2017 = vrot.slane %v2016, 4
      %v2018 = vrot.slane %v1458, 5
      %v2019 = vsel %vm1211, %v2017, %v2018
      %v2020 = vrot.slane %v2018, 4
      %v2021 = vrot.slane %v1459, 5
      %v2022 = vsel %vm1211, %v2020, %v2021
      %v2023 = vrot.slane %v1460, 5
      %v2024 = vrot.slane %v2023, 4
      %v2025 = vrot.slane %v1461, 5
      %v2026 = vsel %vm1211, %v2024, %v2025
      %v2027 = vrot.slane %v2025, 4
      %v2028 = vrot.slane %v1462, 5
      %v2029 = vsel %vm1211, %v2027, %v2028
      %v2030 = vrot.slane %v1463, 5
      %v2031 = vrot.slane %v2030, 4
      %v2032 = vrot.slane %v1464, 5
      %v2033 = vsel %vm1211, %v2031, %v2032
      %v2034 = vrot.slane %v2032, 4
      %v2035 = vrot.slane %v1465, 5
      %v2036 = vsel %vm1211, %v2034, %v2035
      %v2037 = vrot.slane %v1466, 5
      %v2038 = vrot.slane %v2037, 4
      %v2039 = vrot.slane %v1467, 5
      %v2040 = vsel %vm1211, %v2038, %v2039
      %v2041 = vrot.slane %v2039, 4
      %v2042 = vrot.slane %v1468, 5
      %v2043 = vsel %vm1211, %v2041, %v2042
      %v2044 = vrot.slane %v1469, 5
      %v2045 = vrot.slane %v2044, 4
      %v2046 = vrot.slane %v1470, 5
      %v2047 = vsel %vm1211, %v2045, %v2046
      %v2048 = vrot.slane %v2046, 4
      %v2049 = vrot.slane %v1471, 5
      %v2050 = vsel %vm1211, %v2048, %v2049
      %v2051 = vrot.slane %v1472, 5
      %v2052 = vrot.slane %v2051, 4
      %v2053 = vrot.slane %v1473, 5
      %v2054 = vsel %vm1211, %v2052, %v2053
      %v2055 = vrot.slane %v2053, 4
      %v2056 = vrot.slane %v1474, 5
      %v2057 = vsel %vm1211, %v2055, %v2056
      %v2058 = vrot.slane %v1475, 5
      %v2059 = vrot.slane %v2058, 4
      %v2060 = vrot.slane %v1476, 5
      %v2061 = vsel %vm1211, %v2059, %v2060
      %v2062 = vrot.slane %v2060, 4
      %v2063 = vrot.slane %v1477, 5
      %v2064 = vsel %vm1211, %v2062, %v2063
      %v2065 = vrot.slane %v1478, 5
      %v2066 = vrot.slane %v2065, 4
      %v2067 = vrot.slane %v1479, 5
      %v2068 = vsel %vm1211, %v2066, %v2067
      %v2069 = vrot.slane %v2067, 4
      %v2070 = vrot.slane %v1480, 5
      %v2071 = vsel %vm1211, %v2069, %v2070
      %v2072 = vrot.slane %v1481, 5
      %v2073 = vrot.slane %v2072, 4
      %v2074 = vrot.slane %v1482, 5
      %v2075 = vsel %vm1211, %v2073, %v2074
      %v2076 = vrot.slane %v2074, 4
      %v2077 = vrot.slane %v1483, 5
      %v2078 = vsel %vm1211, %v2076, %v2077
      %v2079 = vrot.slane %v1484, 5
      %v2080 = vrot.slane %v2079, 4
      %v2081 = vrot.slane %v1485, 5
      %v2082 = vsel %vm1211, %v2080, %v2081
      %v2083 = vrot.slane %v2081, 4
      %v2084 = vrot.slane %v1486, 5
      %v2085 = vsel %vm1211, %v2083, %v2084
      %v2086 = vrot.slane %v1487, 5
      %v2087 = vrot.slane %v2086, 4
      %v2088 = vrot.slane %v1488, 5
      %v2089 = vsel %vm1211, %v2087, %v2088
      %v2090 = vrot.slane %v2088, 4
      %v2091 = vrot.slane %v1489, 5
      %v2092 = vsel %vm1211, %v2090, %v2091
      %v2093 = vrot.slane %v1490, 5
      %v2094 = vrot.slane %v2093, 4
      %v2095 = vrot.slane %v1491, 5
      %v2096 = vsel %vm1211, %v2094, %v2095
      %v2097 = vrot.slane %v2095, 4
      %v2098 = vrot.slane %v1492, 5
      %v2099 = vsel %vm1211, %v2097, %v2098
      %v2100 = vrot.slane %v1493, 5
      %v2101 = vrot.slane %v2100, 4
      %v2102 = vrot.slane %v1494, 5
      %v2103 = vsel %vm1211, %v2101, %v2102
      %v2104 = vrot.slane %v2102, 4
      %v2105 = vrot.slane %v1495, 5
      %v2106 = vsel %vm1211, %v2104, %v2105
      %v2139 = vmax.bf16 %v1915, %v1998
      %v2140 = vmax.bf16 %v1916, %v2001
      %v2141 = vmax.bf16 %v1917, %v2005
      %v2142 = vmax.bf16 %v1918, %v2008
      %v2143 = vmax.bf16 %v1919, %v2012
      %v2144 = vmax.bf16 %v1920, %v2015
      %v2145 = vmax.bf16 %v1921, %v2019
      %v2146 = vmax.bf16 %v1922, %v2022
      %v2147 = vmax.bf16 %v1923, %v2026
      %v2148 = vmax.bf16 %v1924, %v2029
      %v2149 = vmax.bf16 %v1925, %v2033
      %v2150 = vmax.bf16 %v1926, %v2036
      %v2151 = vmax.bf16 %v1927, %v2040
      %v2152 = vmax.bf16 %v1928, %v2043
      %v2153 = vmax.bf16 %v1929, %v2047
      %v2154 = vmax.bf16 %v1930, %v2050
      %v2155 = vmax.bf16 %v1931, %v2054
      %v2156 = vmax.bf16 %v1932, %v2057
      %v2157 = vmax.bf16 %v1933, %v2061
      %v2158 = vmax.bf16 %v1934, %v2064
      %v2159 = vmax.bf16 %v1935, %v2068
      %v2160 = vmax.bf16 %v1936, %v2071
      %v2161 = vmax.bf16 %v1937, %v2075
      %v2162 = vmax.bf16 %v1938, %v2078
      %v2163 = vmax.bf16 %v1939, %v2082
      %v2164 = vmax.bf16 %v1940, %v2085
      %v2165 = vmax.bf16 %v1941, %v2089
      %v2166 = vmax.bf16 %v1942, %v2092
      %v2167 = vmax.bf16 %v1943, %v2096
      %v2168 = vmax.bf16 %v1944, %v2099
      %v2169 = vmax.bf16 %v1945, %v2103
      %v2170 = vmax.bf16 %v1946, %v2106
      %vm2171 = vsmask.f32 2304
      %vm2172 = vsmask.f32 6416
      %vm2173 = vmor %vm2171, %vm2172
      %v2174 = vrot.slane %v1500, 5
      %v2175 = vrot.slane %v1503, 6
      %v2176 = vor.u32 %v2174, %v2175
      %v2177 = vrot.slane %v2176, 4
      %v2178 = vrot.slane %v1513, 5
      %v2179 = vrot.slane %v1509, 6
      %v2180 = vor.u32 %v2178, %v2179
      %v2181 = vsel %vm2173, %v2177, %v2180
      %v2182 = vrot.slane %v2180, 4
      %v2183 = vshrl.u32 %v1450, 16
      %v2185 = vrot.slane %v2183, 5
      %v2186 = vrot.slane %v1519, 6
      %v2187 = vor.u32 %v2185, %v2186
      %v2188 = vsel %vm2173, %v2182, %v2187
      %v2189 = vrot.slane %v1524, 5
      %v2190 = vrot.slane %v1527, 6
      %v2191 = vor.u32 %v2189, %v2190
      %v2192 = vrot.slane %v2191, 4
      %v2193 = vrot.slane %v1537, 5
      %v2194 = vrot.slane %v1533, 6
      %v2195 = vor.u32 %v2193, %v2194
      %v2196 = vsel %vm2173, %v2192, %v2195
      %v2197 = vrot.slane %v2195, 4
      %v2198 = vshrl.u32 %v1453, 16
      %v2200 = vrot.slane %v2198, 5
      %v2201 = vrot.slane %v1543, 6
      %v2202 = vor.u32 %v2200, %v2201
      %v2203 = vsel %vm2173, %v2197, %v2202
      %v2204 = vrot.slane %v1548, 5
      %v2205 = vrot.slane %v1551, 6
      %v2206 = vor.u32 %v2204, %v2205
      %v2207 = vrot.slane %v2206, 4
      %v2208 = vrot.slane %v1561, 5
      %v2209 = vrot.slane %v1557, 6
      %v2210 = vor.u32 %v2208, %v2209
      %v2211 = vsel %vm2173, %v2207, %v2210
      %v2212 = vrot.slane %v2210, 4
      %v2213 = vshrl.u32 %v1456, 16
      %v2215 = vrot.slane %v2213, 5
      %v2216 = vrot.slane %v1567, 6
      %v2217 = vor.u32 %v2215, %v2216
      %v2218 = vsel %vm2173, %v2212, %v2217
      %v2219 = vrot.slane %v1572, 5
      %v2220 = vrot.slane %v1575, 6
      %v2221 = vor.u32 %v2219, %v2220
      %v2222 = vrot.slane %v2221, 4
      %v2223 = vrot.slane %v1585, 5
      %v2224 = vrot.slane %v1581, 6
      %v2225 = vor.u32 %v2223, %v2224
      %v2226 = vsel %vm2173, %v2222, %v2225
      %v2227 = vrot.slane %v2225, 4
      %v2228 = vshrl.u32 %v1459, 16
      %v2230 = vrot.slane %v2228, 5
      %v2231 = vrot.slane %v1591, 6
      %v2232 = vor.u32 %v2230, %v2231
      %v2233 = vsel %vm2173, %v2227, %v2232
      %v2234 = vrot.slane %v1596, 5
      %v2235 = vrot.slane %v1599, 6
      %v2236 = vor.u32 %v2234, %v2235
      %v2237 = vrot.slane %v2236, 4
      %v2238 = vrot.slane %v1609, 5
      %v2239 = vrot.slane %v1605, 6
      %v2240 = vor.u32 %v2238, %v2239
      %v2241 = vsel %vm2173, %v2237, %v2240
      %v2242 = vrot.slane %v2240, 4
      %v2243 = vshrl.u32 %v1462, 16
      %v2245 = vrot.slane %v2243, 5
      %v2246 = vrot.slane %v1615, 6
      %v2247 = vor.u32 %v2245, %v2246
      %v2248 = vsel %vm2173, %v2242, %v2247
      %v2249 = vrot.slane %v1620, 5
      %v2250 = vrot.slane %v1623, 6
      %v2251 = vor.u32 %v2249, %v2250
      %v2252 = vrot.slane %v2251, 4
      %v2253 = vrot.slane %v1633, 5
      %v2254 = vrot.slane %v1629, 6
      %v2255 = vor.u32 %v2253, %v2254
      %v2256 = vsel %vm2173, %v2252, %v2255
      %v2257 = vrot.slane %v2255, 4
      %v2258 = vshrl.u32 %v1465, 16
      %v2260 = vrot.slane %v2258, 5
      %v2261 = vrot.slane %v1639, 6
      %v2262 = vor.u32 %v2260, %v2261
      %v2263 = vsel %vm2173, %v2257, %v2262
      %v2264 = vrot.slane %v1644, 5
      %v2265 = vrot.slane %v1647, 6
      %v2266 = vor.u32 %v2264, %v2265
      %v2267 = vrot.slane %v2266, 4
      %v2268 = vrot.slane %v1657, 5
      %v2269 = vrot.slane %v1653, 6
      %v2270 = vor.u32 %v2268, %v2269
      %v2271 = vsel %vm2173, %v2267, %v2270
      %v2272 = vrot.slane %v2270, 4
      %v2273 = vshrl.u32 %v1468, 16
      %v2275 = vrot.slane %v2273, 5
      %v2276 = vrot.slane %v1663, 6
      %v2277 = vor.u32 %v2275, %v2276
      %v2278 = vsel %vm2173, %v2272, %v2277
      %v2279 = vrot.slane %v1668, 5
      %v2280 = vrot.slane %v1671, 6
      %v2281 = vor.u32 %v2279, %v2280
      %v2282 = vrot.slane %v2281, 4
      %v2283 = vrot.slane %v1681, 5
      %v2284 = vrot.slane %v1677, 6
      %v2285 = vor.u32 %v2283, %v2284
      %v2286 = vsel %vm2173, %v2282, %v2285
      %v2287 = vrot.slane %v2285, 4
      %v2288 = vshrl.u32 %v1471, 16
      %v2290 = vrot.slane %v2288, 5
      %v2291 = vrot.slane %v1687, 6
      %v2292 = vor.u32 %v2290, %v2291
      %v2293 = vsel %vm2173, %v2287, %v2292
      %v2294 = vrot.slane %v1692, 5
      %v2295 = vrot.slane %v1695, 6
      %v2296 = vor.u32 %v2294, %v2295
      %v2297 = vrot.slane %v2296, 4
      %v2298 = vrot.slane %v1705, 5
      %v2299 = vrot.slane %v1701, 6
      %v2300 = vor.u32 %v2298, %v2299
      %v2301 = vsel %vm2173, %v2297, %v2300
      %v2302 = vrot.slane %v2300, 4
      %v2303 = vshrl.u32 %v1474, 16
      %v2305 = vrot.slane %v2303, 5
      %v2306 = vrot.slane %v1711, 6
      %v2307 = vor.u32 %v2305, %v2306
      %v2308 = vsel %vm2173, %v2302, %v2307
      %v2309 = vrot.slane %v1716, 5
      %v2310 = vrot.slane %v1719, 6
      %v2311 = vor.u32 %v2309, %v2310
      %v2312 = vrot.slane %v2311, 4
      %v2313 = vrot.slane %v1729, 5
      %v2314 = vrot.slane %v1725, 6
      %v2315 = vor.u32 %v2313, %v2314
      %v2316 = vsel %vm2173, %v2312, %v2315
      %v2317 = vrot.slane %v2315, 4
      %v2318 = vshrl.u32 %v1477, 16
      %v2320 = vrot.slane %v2318, 5
      %v2321 = vrot.slane %v1735, 6
      %v2322 = vor.u32 %v2320, %v2321
      %v2323 = vsel %vm2173, %v2317, %v2322
      %v2324 = vrot.slane %v1740, 5
      %v2325 = vrot.slane %v1743, 6
      %v2326 = vor.u32 %v2324, %v2325
      %v2327 = vrot.slane %v2326, 4
      %v2328 = vrot.slane %v1753, 5
      %v2329 = vrot.slane %v1749, 6
      %v2330 = vor.u32 %v2328, %v2329
      %v2331 = vsel %vm2173, %v2327, %v2330
      %v2332 = vrot.slane %v2330, 4
      %v2333 = vshrl.u32 %v1480, 16
      %v2335 = vrot.slane %v2333, 5
      %v2336 = vrot.slane %v1759, 6
      %v2337 = vor.u32 %v2335, %v2336
      %v2338 = vsel %vm2173, %v2332, %v2337
      %v2339 = vrot.slane %v1764, 5
      %v2340 = vrot.slane %v1767, 6
      %v2341 = vor.u32 %v2339, %v2340
      %v2342 = vrot.slane %v2341, 4
      %v2343 = vrot.slane %v1777, 5
      %v2344 = vrot.slane %v1773, 6
      %v2345 = vor.u32 %v2343, %v2344
      %v2346 = vsel %vm2173, %v2342, %v2345
      %v2347 = vrot.slane %v2345, 4
      %v2348 = vshrl.u32 %v1483, 16
      %v2350 = vrot.slane %v2348, 5
      %v2351 = vrot.slane %v1783, 6
      %v2352 = vor.u32 %v2350, %v2351
      %v2353 = vsel %vm2173, %v2347, %v2352
      %v2354 = vrot.slane %v1788, 5
      %v2355 = vrot.slane %v1791, 6
      %v2356 = vor.u32 %v2354, %v2355
      %v2357 = vrot.slane %v2356, 4
      %v2358 = vrot.slane %v1801, 5
      %v2359 = vrot.slane %v1797, 6
      %v2360 = vor.u32 %v2358, %v2359
      %v2361 = vsel %vm2173, %v2357, %v2360
      %v2362 = vrot.slane %v2360, 4
      %v2363 = vshrl.u32 %v1486, 16
      %v2365 = vrot.slane %v2363, 5
      %v2366 = vrot.slane %v1807, 6
      %v2367 = vor.u32 %v2365, %v2366
      %v2368 = vsel %vm2173, %v2362, %v2367
      %v2369 = vrot.slane %v1812, 5
      %v2370 = vrot.slane %v1815, 6
      %v2371 = vor.u32 %v2369, %v2370
      %v2372 = vrot.slane %v2371, 4
      %v2373 = vrot.slane %v1825, 5
      %v2374 = vrot.slane %v1821, 6
      %v2375 = vor.u32 %v2373, %v2374
      %v2376 = vsel %vm2173, %v2372, %v2375
      %v2377 = vrot.slane %v2375, 4
      %v2378 = vshrl.u32 %v1489, 16
      %v2380 = vrot.slane %v2378, 5
      %v2381 = vrot.slane %v1831, 6
      %v2382 = vor.u32 %v2380, %v2381
      %v2383 = vsel %vm2173, %v2377, %v2382
      %v2384 = vrot.slane %v1836, 5
      %v2385 = vrot.slane %v1839, 6
      %v2386 = vor.u32 %v2384, %v2385
      %v2387 = vrot.slane %v2386, 4
      %v2388 = vrot.slane %v1849, 5
      %v2389 = vrot.slane %v1845, 6
      %v2390 = vor.u32 %v2388, %v2389
      %v2391 = vsel %vm2173, %v2387, %v2390
      %v2392 = vrot.slane %v2390, 4
      %v2393 = vshrl.u32 %v1492, 16
      %v2395 = vrot.slane %v2393, 5
      %v2396 = vrot.slane %v1855, 6
      %v2397 = vor.u32 %v2395, %v2396
      %v2398 = vsel %vm2173, %v2392, %v2397
      %v2399 = vrot.slane %v1860, 5
      %v2400 = vrot.slane %v1863, 6
      %v2401 = vor.u32 %v2399, %v2400
      %v2402 = vrot.slane %v2401, 4
      %v2403 = vrot.slane %v1873, 5
      %v2404 = vrot.slane %v1869, 6
      %v2405 = vor.u32 %v2403, %v2404
      %v2406 = vsel %vm2173, %v2402, %v2405
      %v2407 = vrot.slane %v2405, 4
      %v2408 = vshrl.u32 %v1495, 16
      %v2410 = vrot.slane %v2408, 5
      %v2411 = vrot.slane %v1879, 6
      %v2412 = vor.u32 %v2410, %v2411
      %v2413 = vsel %vm2173, %v2407, %v2412
      %v2446 = vmax.bf16 %v2139, %v2181
      %v2447 = vmax.bf16 %v2140, %v2188
      %v2448 = vmax.bf16 %v2141, %v2196
      %v2449 = vmax.bf16 %v2142, %v2203
      %v2450 = vmax.bf16 %v2143, %v2211
      %v2451 = vmax.bf16 %v2144, %v2218
      %v2452 = vmax.bf16 %v2145, %v2226
      %v2453 = vmax.bf16 %v2146, %v2233
      %v2454 = vmax.bf16 %v2147, %v2241
      %v2455 = vmax.bf16 %v2148, %v2248
      %v2456 = vmax.bf16 %v2149, %v2256
      %v2457 = vmax.bf16 %v2150, %v2263
      %v2458 = vmax.bf16 %v2151, %v2271
      %v2459 = vmax.bf16 %v2152, %v2278
      %v2460 = vmax.bf16 %v2153, %v2286
      %v2461 = vmax.bf16 %v2154, %v2293
      %v2462 = vmax.bf16 %v2155, %v2301
      %v2463 = vmax.bf16 %v2156, %v2308
      %v2464 = vmax.bf16 %v2157, %v2316
      %v2465 = vmax.bf16 %v2158, %v2323
      %v2466 = vmax.bf16 %v2159, %v2331
      %v2467 = vmax.bf16 %v2160, %v2338
      %v2468 = vmax.bf16 %v2161, %v2346
      %v2469 = vmax.bf16 %v2162, %v2353
      %v2470 = vmax.bf16 %v2163, %v2361
      %v2471 = vmax.bf16 %v2164, %v2368
      %v2472 = vmax.bf16 %v2165, %v2376
      %v2473 = vmax.bf16 %v2166, %v2383
      %v2474 = vmax.bf16 %v2167, %v2391
      %v2475 = vmax.bf16 %v2168, %v2398
      %v2476 = vmax.bf16 %v2169, %v2406
      %v2477 = vmax.bf16 %v2170, %v2413
      %vm2478 = vcmask 1041408
      %vm2479 = vcmask 1045508
      %vm2480 = vmor %vm2478, %vm2479
      %v2481 = vrot.slane %v1448, 6
      %v2482 = vrot.slane %v2481, 4
      %v2483 = vrot.slane %v1449, 6
      %v2484 = vsel %vm2480, %v2482, %v2483
      %v2485 = vrot.slane %v2483, 4
      %v2486 = vrot.slane %v1450, 6
      %v2487 = vsel %vm2480, %v2485, %v2486
      %v2488 = vrot.slane %v1451, 6
      %v2489 = vrot.slane %v2488, 4
      %v2490 = vrot.slane %v1452, 6
      %v2491 = vsel %vm2480, %v2489, %v2490
      %v2492 = vrot.slane %v2490, 4
      %v2493 = vrot.slane %v1453, 6
      %v2494 = vsel %vm2480, %v2492, %v2493
      %v2495 = vrot.slane %v1454, 6
      %v2496 = vrot.slane %v2495, 4
      %v2497 = vrot.slane %v1455, 6
      %v2498 = vsel %vm2480, %v2496, %v2497
      %v2499 = vrot.slane %v2497, 4
      %v2500 = vrot.slane %v1456, 6
      %v2501 = vsel %vm2480, %v2499, %v2500
      %v2502 = vrot.slane %v1457, 6
      %v2503 = vrot.slane %v2502, 4
      %v2504 = vrot.slane %v1458, 6
      %v2505 = vsel %vm2480, %v2503, %v2504
      %v2506 = vrot.slane %v2504, 4
      %v2507 = vrot.slane %v1459, 6
      %v2508 = vsel %vm2480, %v2506, %v2507
      %v2509 = vrot.slane %v1460, 6
      %v2510 = vrot.slane %v2509, 4
      %v2511 = vrot.slane %v1461, 6
      %v2512 = vsel %vm2480, %v2510, %v2511
      %v2513 = vrot.slane %v2511, 4
      %v2514 = vrot.slane %v1462, 6
      %v2515 = vsel %vm2480, %v2513, %v2514
      %v2516 = vrot.slane %v1463, 6
      %v2517 = vrot.slane %v2516, 4
      %v2518 = vrot.slane %v1464, 6
      %v2519 = vsel %vm2480, %v2517, %v2518
      %v2520 = vrot.slane %v2518, 4
      %v2521 = vrot.slane %v1465, 6
      %v2522 = vsel %vm2480, %v2520, %v2521
      %v2523 = vrot.slane %v1466, 6
      %v2524 = vrot.slane %v2523, 4
      %v2525 = vrot.slane %v1467, 6
      %v2526 = vsel %vm2480, %v2524, %v2525
      %v2527 = vrot.slane %v2525, 4
      %v2528 = vrot.slane %v1468, 6
      %v2529 = vsel %vm2480, %v2527, %v2528
      %v2530 = vrot.slane %v1469, 6
      %v2531 = vrot.slane %v2530, 4
      %v2532 = vrot.slane %v1470, 6
      %v2533 = vsel %vm2480, %v2531, %v2532
      %v2534 = vrot.slane %v2532, 4
      %v2535 = vrot.slane %v1471, 6
      %v2536 = vsel %vm2480, %v2534, %v2535
      %v2537 = vrot.slane %v1472, 6
      %v2538 = vrot.slane %v2537, 4
      %v2539 = vrot.slane %v1473, 6
      %v2540 = vsel %vm2480, %v2538, %v2539
      %v2541 = vrot.slane %v2539, 4
      %v2542 = vrot.slane %v1474, 6
      %v2543 = vsel %vm2480, %v2541, %v2542
      %v2544 = vrot.slane %v1475, 6
      %v2545 = vrot.slane %v2544, 4
      %v2546 = vrot.slane %v1476, 6
      %v2547 = vsel %vm2480, %v2545, %v2546
      %v2548 = vrot.slane %v2546, 4
      %v2549 = vrot.slane %v1477, 6
      %v2550 = vsel %vm2480, %v2548, %v2549
      %v2551 = vrot.slane %v1478, 6
      %v2552 = vrot.slane %v2551, 4
      %v2553 = vrot.slane %v1479, 6
      %v2554 = vsel %vm2480, %v2552, %v2553
      %v2555 = vrot.slane %v2553, 4
      %v2556 = vrot.slane %v1480, 6
      %v2557 = vsel %vm2480, %v2555, %v2556
      %v2558 = vrot.slane %v1481, 6
      %v2559 = vrot.slane %v2558, 4
      %v2560 = vrot.slane %v1482, 6
      %v2561 = vsel %vm2480, %v2559, %v2560
      %v2562 = vrot.slane %v2560, 4
      %v2563 = vrot.slane %v1483, 6
      %v2564 = vsel %vm2480, %v2562, %v2563
      %v2565 = vrot.slane %v1484, 6
      %v2566 = vrot.slane %v2565, 4
      %v2567 = vrot.slane %v1485, 6
      %v2568 = vsel %vm2480, %v2566, %v2567
      %v2569 = vrot.slane %v2567, 4
      %v2570 = vrot.slane %v1486, 6
      %v2571 = vsel %vm2480, %v2569, %v2570
      %v2572 = vrot.slane %v1487, 6
      %v2573 = vrot.slane %v2572, 4
      %v2574 = vrot.slane %v1488, 6
      %v2575 = vsel %vm2480, %v2573, %v2574
      %v2576 = vrot.slane %v2574, 4
      %v2577 = vrot.slane %v1489, 6
      %v2578 = vsel %vm2480, %v2576, %v2577
      %v2579 = vrot.slane %v1490, 6
      %v2580 = vrot.slane %v2579, 4
      %v2581 = vrot.slane %v1491, 6
      %v2582 = vsel %vm2480, %v2580, %v2581
      %v2583 = vrot.slane %v2581, 4
      %v2584 = vrot.slane %v1492, 6
      %v2585 = vsel %vm2480, %v2583, %v2584
      %v2586 = vrot.slane %v1493, 6
      %v2587 = vrot.slane %v2586, 4
      %v2588 = vrot.slane %v1494, 6
      %v2589 = vsel %vm2480, %v2587, %v2588
      %v2590 = vrot.slane %v2588, 4
      %v2591 = vrot.slane %v1495, 6
      %v2592 = vsel %vm2480, %v2590, %v2591
      %v2625 = vmax.bf16 %v2446, %v2484
      %v2626 = vmax.bf16 %v2447, %v2487
      %v2627 = vmax.bf16 %v2448, %v2491
      %v2628 = vmax.bf16 %v2449, %v2494
      %v2629 = vmax.bf16 %v2450, %v2498
      %v2630 = vmax.bf16 %v2451, %v2501
      %v2631 = vmax.bf16 %v2452, %v2505
      %v2632 = vmax.bf16 %v2453, %v2508
      %v2633 = vmax.bf16 %v2454, %v2512
      %v2634 = vmax.bf16 %v2455, %v2515
      %v2635 = vmax.bf16 %v2456, %v2519
      %v2636 = vmax.bf16 %v2457, %v2522
      %v2637 = vmax.bf16 %v2458, %v2526
      %v2638 = vmax.bf16 %v2459, %v2529
      %v2639 = vmax.bf16 %v2460, %v2533
      %v2640 = vmax.bf16 %v2461, %v2536
      %v2641 = vmax.bf16 %v2462, %v2540
      %v2642 = vmax.bf16 %v2463, %v2543
      %v2643 = vmax.bf16 %v2464, %v2547
      %v2644 = vmax.bf16 %v2465, %v2550
      %v2645 = vmax.bf16 %v2466, %v2554
      %v2646 = vmax.bf16 %v2467, %v2557
      %v2647 = vmax.bf16 %v2468, %v2561
      %v2648 = vmax.bf16 %v2469, %v2564
      %v2649 = vmax.bf16 %v2470, %v2568
      %v2650 = vmax.bf16 %v2471, %v2571
      %v2651 = vmax.bf16 %v2472, %v2575
      %v2652 = vmax.bf16 %v2473, %v2578
      %v2653 = vmax.bf16 %v2474, %v2582
      %v2654 = vmax.bf16 %v2475, %v2585
      %v2655 = vmax.bf16 %v2476, %v2589
      %v2656 = vmax.bf16 %v2477, %v2592
      %v2689 = vrot.slane %v2625, 7
      %v2690 = vrot.slane %v2689, 4
      %v2691 = vrot.slane %v2626, 7
      %v2692 = vsel %vm1002, %v2690, %v2691
      %v2693 = vrot.slane %v2691, 4
      %v2694 = vrot.slane %v2627, 7
      %v2695 = vrot.slane %v2694, 4
      %v2696 = vrot.slane %v2628, 7
      %v2697 = vsel %vm1002, %v2695, %v2696
      %v2698 = vrot.slane %v2696, 4
      %v2699 = vrot.slane %v2629, 7
      %v2700 = vrot.slane %v2699, 4
      %v2701 = vrot.slane %v2630, 7
      %v2702 = vsel %vm1002, %v2700, %v2701
      %v2703 = vrot.slane %v2701, 4
      %v2704 = vrot.slane %v2631, 7
      %v2705 = vrot.slane %v2704, 4
      %v2706 = vrot.slane %v2632, 7
      %v2707 = vsel %vm1002, %v2705, %v2706
      %v2708 = vrot.slane %v2706, 4
      %v2709 = vrot.slane %v2633, 7
      %v2710 = vrot.slane %v2709, 4
      %v2711 = vrot.slane %v2634, 7
      %v2712 = vsel %vm1002, %v2710, %v2711
      %v2713 = vrot.slane %v2711, 4
      %v2714 = vrot.slane %v2635, 7
      %v2715 = vrot.slane %v2714, 4
      %v2716 = vrot.slane %v2636, 7
      %v2717 = vsel %vm1002, %v2715, %v2716
      %v2718 = vrot.slane %v2716, 4
      %v2719 = vrot.slane %v2637, 7
      %v2720 = vrot.slane %v2719, 4
      %v2721 = vrot.slane %v2638, 7
      %v2722 = vsel %vm1002, %v2720, %v2721
      %v2723 = vrot.slane %v2721, 4
      %v2724 = vrot.slane %v2639, 7
      %v2725 = vrot.slane %v2724, 4
      %v2726 = vrot.slane %v2640, 7
      %v2727 = vsel %vm1002, %v2725, %v2726
      %v2728 = vrot.slane %v2726, 4
      %v2729 = vrot.slane %v2641, 7
      %v2730 = vrot.slane %v2729, 4
      %v2731 = vrot.slane %v2642, 7
      %v2732 = vsel %vm1002, %v2730, %v2731
      %v2733 = vrot.slane %v2731, 4
      %v2734 = vrot.slane %v2643, 7
      %v2735 = vrot.slane %v2734, 4
      %v2736 = vrot.slane %v2644, 7
      %v2737 = vsel %vm1002, %v2735, %v2736
      %v2738 = vrot.slane %v2736, 4
      %v2739 = vrot.slane %v2645, 7
      %v2740 = vrot.slane %v2739, 4
      %v2741 = vrot.slane %v2646, 7
      %v2742 = vsel %vm1002, %v2740, %v2741
      %v2743 = vrot.slane %v2741, 4
      %v2744 = vrot.slane %v2647, 7
      %v2745 = vrot.slane %v2744, 4
      %v2746 = vrot.slane %v2648, 7
      %v2747 = vsel %vm1002, %v2745, %v2746
      %v2748 = vrot.slane %v2746, 4
      %v2749 = vrot.slane %v2649, 7
      %v2750 = vrot.slane %v2749, 4
      %v2751 = vrot.slane %v2650, 7
      %v2752 = vsel %vm1002, %v2750, %v2751
      %v2753 = vrot.slane %v2751, 4
      %v2754 = vrot.slane %v2651, 7
      %v2755 = vrot.slane %v2754, 4
      %v2756 = vrot.slane %v2652, 7
      %v2757 = vsel %vm1002, %v2755, %v2756
      %v2758 = vrot.slane %v2756, 4
      %v2759 = vrot.slane %v2653, 7
      %v2760 = vrot.slane %v2759, 4
      %v2761 = vrot.slane %v2654, 7
      %v2762 = vsel %vm1002, %v2760, %v2761
      %v2763 = vrot.slane %v2761, 4
      %v2764 = vrot.slane %v2655, 7
      %v2765 = vrot.slane %v2764, 4
      %v2766 = vrot.slane %v2656, 7
      %v2767 = vsel %vm1002, %v2765, %v2766
      %v2768 = vrot.slane %v2766, 4
      %2817 = vst.msk [vmem:[%s1131] sm:$0xe] %vm1132, %v2689
      %2818 = vst.msk [vmem:[%s1131 + $0x4] sm:$0xf] %vm863, %v2692
      %2819 = vst.msk [vmem:[%s1131 + $0x8] sm:$0x1] %vm878, %v2693
      %2820 = vst.msk [vmem:[%s1131 + $0xc] sm:$0xe] %vm1132, %v2694
      %2821 = vst.msk [vmem:[%s1131 + $0x10] sm:$0xf] %vm863, %v2697
      %2822 = vst.msk [vmem:[%s1131 + $0x14] sm:$0x1] %vm878, %v2698
      %2823 = vst.msk [vmem:[%s1131 + $0x18] sm:$0xe] %vm1132, %v2699
      %2824 = vst.msk [vmem:[%s1131 + $0x1c] sm:$0xf] %vm863, %v2702
      %2825 = vst.msk [vmem:[%s1131 + $0x20] sm:$0x1] %vm878, %v2703
      %2826 = vst.msk [vmem:[%s1131 + $0x24] sm:$0xe] %vm1132, %v2704
      %2827 = vst.msk [vmem:[%s1131 + $0x28] sm:$0xf] %vm863, %v2707
      %2828 = vst.msk [vmem:[%s1131 + $0x2c] sm:$0x1] %vm878, %v2708
      %2829 = vst.msk [vmem:[%s1131 + $0x30] sm:$0xe] %vm1132, %v2709
      %2830 = vst.msk [vmem:[%s1131 + $0x34] sm:$0xf] %vm863, %v2712
      %2831 = vst.msk [vmem:[%s1131 + $0x38] sm:$0x1] %vm878, %v2713
      %2832 = vst.msk [vmem:[%s1131 + $0x3c] sm:$0xe] %vm1132, %v2714
      %2833 = vst.msk [vmem:[%s1131 + $0x40] sm:$0xf] %vm863, %v2717
      %2834 = vst.msk [vmem:[%s1131 + $0x44] sm:$0x1] %vm878, %v2718
      %2835 = vst.msk [vmem:[%s1131 + $0x48] sm:$0xe] %vm1132, %v2719
      %2836 = vst.msk [vmem:[%s1131 + $0x4c] sm:$0xf] %vm863, %v2722
      %2837 = vst.msk [vmem:[%s1131 + $0x50] sm:$0x1] %vm878, %v2723
      %2838 = vst.msk [vmem:[%s1131 + $0x54] sm:$0xe] %vm1132, %v2724
      %2839 = vst.msk [vmem:[%s1131 + $0x58] sm:$0xf] %vm863, %v2727
      %2840 = vst.msk [vmem:[%s1131 + $0x5c] sm:$0x1] %vm878, %v2728
      %2841 = vst.msk [vmem:[%s1131 + $0x60] sm:$0xe] %vm1132, %v2729
      %2842 = vst.msk [vmem:[%s1131 + $0x64] sm:$0xf] %vm863, %v2732
      %2843 = vst.msk [vmem:[%s1131 + $0x68] sm:$0x1] %vm878, %v2733
      %2844 = vst.msk [vmem:[%s1131 + $0x6c] sm:$0xe] %vm1132, %v2734
      %2845 = vst.msk [vmem:[%s1131 + $0x70] sm:$0xf] %vm863, %v2737
      %2846 = vst.msk [vmem:[%s1131 + $0x74] sm:$0x1] %vm878, %v2738
      %2847 = vst.msk [vmem:[%s1131 + $0x78] sm:$0xe] %vm1132, %v2739
      %2848 = vst.msk [vmem:[%s1131 + $0x7c] sm:$0xf] %vm863, %v2742
      %2849 = vst.msk [vmem:[%s1131 + $0x80] sm:$0x1] %vm878, %v2743
      %2850 = vst.msk [vmem:[%s1131 + $0x84] sm:$0xe] %vm1132, %v2744
      %2851 = vst.msk [vmem:[%s1131 + $0x88] sm:$0xf] %vm863, %v2747
      %2852 = vst.msk [vmem:[%s1131 + $0x8c] sm:$0x1] %vm878, %v2748
      %2853 = vst.msk [vmem:[%s1131 + $0x90] sm:$0xe] %vm1132, %v2749
      %2854 = vst.msk [vmem:[%s1131 + $0x94] sm:$0xf] %vm863, %v2752
      %2855 = vst.msk [vmem:[%s1131 + $0x98] sm:$0x1] %vm878, %v2753
      %2856 = vst.msk [vmem:[%s1131 + $0x9c] sm:$0xe] %vm1132, %v2754
      %2857 = vst.msk [vmem:[%s1131 + $0xa0] sm:$0xf] %vm863, %v2757
      %2858 = vst.msk [vmem:[%s1131 + $0xa4] sm:$0x1] %vm878, %v2758
      %2859 = vst.msk [vmem:[%s1131 + $0xa8] sm:$0xe] %vm1132, %v2759
      %2860 = vst.msk [vmem:[%s1131 + $0xac] sm:$0xf] %vm863, %v2762
      %2861 = vst.msk [vmem:[%s1131 + $0xb0] sm:$0x1] %vm878, %v2763
      %2862 = vst.msk [vmem:[%s1131 + $0xb4] sm:$0xe] %vm1132, %v2764
      %2863 = vst.msk [vmem:[%s1131 + $0xb8] sm:$0xf] %vm863, %v2767
      %2864 = vst.msk [vmem:[%s1131 + $0xbc] sm:$0x1] %vm878, %v2768
      %v2865 = vld [vmem:[%s1184] sm:$0xe]
      %v2866 = vld [vmem:[%s1184 + $0x4] sm:$0xf]
      %v2867 = vld [vmem:[%s1184 + $0x8] sm:$0x1]
      %v2868 = vld [vmem:[%s1184 + $0xc] sm:$0xe]
      %v2869 = vld [vmem:[%s1184 + $0x10] sm:$0xf]
      %v2870 = vld [vmem:[%s1184 + $0x14] sm:$0x1]
      %v2871 = vld [vmem:[%s1184 + $0x18] sm:$0xe]
      %v2872 = vld [vmem:[%s1184 + $0x1c] sm:$0xf]
      %v2873 = vld [vmem:[%s1184 + $0x20] sm:$0x1]
      %v2874 = vld [vmem:[%s1184 + $0x24] sm:$0xe]
      %v2875 = vld [vmem:[%s1184 + $0x28] sm:$0xf]
      %v2876 = vld [vmem:[%s1184 + $0x2c] sm:$0x1]
      %v2889 = vrot.slane %v2865, 5
      %v2890 = vrot.slane %v2889, 4
      %v2891 = vrot.slane %v2866, 5
      %v2892 = vsel %vm1211, %v2890, %v2891
      %v2893 = vrot.slane %v2891, 4
      %v2894 = vrot.slane %v2867, 5
      %v2895 = vsel %vm1211, %v2893, %v2894
      %v2896 = vrot.slane %v2868, 5
      %v2897 = vrot.slane %v2896, 4
      %v2898 = vrot.slane %v2869, 5
      %v2899 = vsel %vm1211, %v2897, %v2898
      %v2900 = vrot.slane %v2898, 4
      %v2901 = vrot.slane %v2870, 5
      %v2902 = vsel %vm1211, %v2900, %v2901
      %v2903 = vrot.slane %v2871, 5
      %v2904 = vrot.slane %v2903, 4
      %v2905 = vrot.slane %v2872, 5
      %v2906 = vsel %vm1211, %v2904, %v2905
      %v2907 = vrot.slane %v2905, 4
      %v2908 = vrot.slane %v2873, 5
      %v2909 = vsel %vm1211, %v2907, %v2908
      %v2910 = vrot.slane %v2874, 5
      %v2911 = vrot.slane %v2910, 4
      %v2912 = vrot.slane %v2875, 5
      %v2913 = vsel %vm1211, %v2911, %v2912
      %v2914 = vrot.slane %v2912, 4
      %v2915 = vrot.slane %v2876, 5
      %v2916 = vsel %vm1211, %v2914, %v2915
      %s2917 = scalar_lea.vmem %s3, 16
      %v2918 = vld [vmem:[%s2917] sm:$0xf]
      %v2919 = vld [vmem:[%s2917 + $0x4] sm:$0xf]
      %v2920 = vld [vmem:[%s2917 + $0x8] sm:$0xf]
      %v2921 = vld [vmem:[%s2917 + $0xc] sm:$0xf]
      %v2922 = vunpack.c.l.b16 %v2892
      %v2923 = vunpack.c.l.b16 %v2895
      %v2924 = vunpack.c.l.b16 %v2899
      %v2925 = vunpack.c.l.b16 %v2902
      %v2926 = vunpack.c.l.b16 %v2906
      %v2927 = vunpack.c.l.b16 %v2909
      %v2928 = vunpack.c.l.b16 %v2913
      %v2929 = vunpack.c.l.b16 %v2916
      %v2930 = vpack.c.b16 %v2923, %v2922
      %v2931 = vpack.c.b16 %v2925, %v2924
      %v2932 = vpack.c.b16 %v2927, %v2926
      %v2933 = vpack.c.b16 %v2929, %v2928
      %v2938 = vunpack.c.l.b16 %v2918
      %v2939 = vunpack.c.l.b16 %v2919
      %v2940 = vunpack.c.l.b16 %v2920
      %v2941 = vunpack.c.l.b16 %v2921
      %v2942 = vpack.c.b16 %v2939, %v2938
      %v2943 = vpack.c.b16 %v2941, %v2940
      %vm2946 = vcmask 261120
      %v2948 = vsel %vm2946, %v2930, 0
      %v2951 = vsel %vm2946, %v2931, 0
      %v2954 = vsel %vm2946, %v2932, 0
      %v2957 = vsel %vm2946, %v2933, 0
      %2959 = vmatprep.subr.bf16.mxu0 0
      %2960 = vmatpush1.bf16.msra.mxu0 %v2942
      %2961 = vmatprep.subr.bf16.mxu0 0
      %2962 = vmatpush1.bf16.msra.mxu0 %v2943
      %2963 = vmatprep.subr.bf16.mxu0 0
      %2964 = vmatpush1.bf16.msra.mxu0 0
      %2965 = vmatprep.subr.bf16.mxu0 0
      %2966 = vmatpush1.bf16.msra.mxu0 0
      %2967 = vmatprep.subr.bf16.mxu0 0
      %2968 = vmatpush1.bf16.msra.mxu0 0
      %2969 = vmatprep.subr.bf16.mxu0 0
      %2970 = vmatpush1.bf16.msra.mxu0 0
      %2971 = vmatprep.subr.bf16.mxu0 0
      %2972 = vmatpush1.bf16.msra.mxu0 0
      %2973 = vmatprep.subr.bf16.mxu0 0
      %2974 = vmatpush1.bf16.msra.mxu0 0
      %2975 = vmatprep.subr.bf16.mxu0 0
      %2976 = vmatpush1.bf16.msra.mxu0 0
      %2977 = vmatprep.subr.bf16.mxu0 0
      %2978 = vmatpush1.bf16.msra.mxu0 0
      %2979 = vmatprep.subr.bf16.mxu0 0
      %2980 = vmatpush1.bf16.msra.mxu0 0
      %2981 = vmatprep.subr.bf16.mxu0 0
      %2982 = vmatpush1.bf16.msra.mxu0 0
      %2983 = vmatprep.subr.bf16.mxu0 0
      %2984 = vmatpush1.bf16.msra.mxu0 0
      %2985 = vmatprep.subr.bf16.mxu0 0
      %2986 = vmatpush1.bf16.msra.mxu0 0
      %2987 = vmatprep.subr.bf16.mxu0 0
      %2988 = vmatpush1.bf16.msra.mxu0 0
      %2989 = vmatprep.subr.bf16.mxu0 0
      %2990 = vmatpush1.bf16.msra.mxu0 0
      %2991 = vmatprep.mubr.bf16.mxu0 0
      %2992 = vmatmul.mubr.bf16.gmra.mrb[0].mxu0 %v2948
      %v2993 = vpop.f32.mrb[0].mxu0
      %v2994 = vadd.f32 0.0, %v2993
      %v2995 = vpop.f32.mrb[0].mxu0
      %v2996 = vpop.f32.mrb[0].mxu0
      %v2997 = vadd.f32 0.0, %v2996
      %v2998 = vpop.f32.mrb[0].mxu0
      %2999 = vmatprep.mubr.bf16.mxu0 0
      %3000 = vmatmul.mubr.bf16.gmra.mrb[0].mxu0 %v2951
      %v3001 = vpop.f32.mrb[0].mxu0
      %v3002 = vadd.f32 0.0, %v3001
      %v3003 = vpop.f32.mrb[0].mxu0
      %v3004 = vpop.f32.mrb[0].mxu0
      %v3005 = vadd.f32 0.0, %v3004
      %v3006 = vpop.f32.mrb[0].mxu0
      %3007 = vmatprep.mubr.bf16.mxu0 0
      %3008 = vmatmul.mubr.bf16.gmra.mrb[0].mxu0 %v2954
      %v3009 = vpop.f32.mrb[0].mxu0
      %v3010 = vadd.f32 0.0, %v3009
      %v3011 = vpop.f32.mrb[0].mxu0
      %v3012 = vpop.f32.mrb[0].mxu0
      %v3013 = vadd.f32 0.0, %v3012
      %v3014 = vpop.f32.mrb[0].mxu0
      %3015 = vmatprep.mubr.bf16.mxu0 0
      %3016 = vmatmul.mubr.bf16.gmra.mrb[0].mxu0 %v2957
      %v3017 = vpop.f32.mrb[0].mxu0
      %v3018 = vadd.f32 0.0, %v3017
      %v3019 = vpop.f32.mrb[0].mxu0
      %v3020 = vpop.f32.mrb[0].mxu0
      %v3021 = vadd.f32 0.0, %v3020
      %v3022 = vpop.f32.mrb[0].mxu0
      %3023 = vdwg.mxu0
      %v3024 = vunpack.c.l.b16 %v1215
      %v3025 = vunpack.c.l.b16 %v1218
      %v3026 = vunpack.c.l.b16 %v1222
      %v3027 = vunpack.c.l.b16 %v1225
      %v3028 = vunpack.c.l.b16 %v1229
      %v3029 = vunpack.c.l.b16 %v1232
      %v3030 = vunpack.c.l.b16 %v1236
      %v3031 = vunpack.c.l.b16 %v1239
      %v3032 = vpack.c.b16 %v3025, %v3024
      %v3033 = vpack.c.b16 %v3027, %v3026
      %v3034 = vpack.c.b16 %v3029, %v3028
      %v3035 = vpack.c.b16 %v3031, %v3030
      %v3040 = vunpack.c.l.b16 %v1240
      %v3041 = vunpack.c.l.b16 %v1241
      %v3042 = vunpack.c.l.b16 %v1242
      %v3043 = vunpack.c.l.b16 %v1243
      %v3044 = vpack.c.b16 %v3041, %v3040
      %v3045 = vpack.c.b16 %v3043, %v3042
      %v3049 = vsel %vm2946, %v3032, 0
      %v3052 = vsel %vm2946, %v3033, 0
      %v3055 = vsel %vm2946, %v3034, 0
      %v3058 = vsel %vm2946, %v3035, 0
      %3060 = vmatprep.subr.bf16.mxu0 0
      %3061 = vmatpush1.bf16.msra.mxu0 %v3044
      %3062 = vmatprep.subr.bf16.mxu0 0
      %3063 = vmatpush1.bf16.msra.mxu0 %v3045
      %3064 = vmatprep.subr.bf16.mxu0 0
      %3065 = vmatpush1.bf16.msra.mxu0 0
      %3066 = vmatprep.subr.bf16.mxu0 0
      %3067 = vmatpush1.bf16.msra.mxu0 0
      %3068 = vmatprep.subr.bf16.mxu0 0
      %3069 = vmatpush1.bf16.msra.mxu0 0
      %3070 = vmatprep.subr.bf16.mxu0 0
      %3071 = vmatpush1.bf16.msra.mxu0 0
      %3072 = vmatprep.subr.bf16.mxu0 0
      %3073 = vmatpush1.bf16.msra.mxu0 0
      %3074 = vmatprep.subr.bf16.mxu0 0
      %3075 = vmatpush1.bf16.msra.mxu0 0
      %3076 = vmatprep.subr.bf16.mxu0 0
      %3077 = vmatpush1.bf16.msra.mxu0 0
      %3078 = vmatprep.subr.bf16.mxu0 0
      %3079 = vmatpush1.bf16.msra.mxu0 0
      %3080 = vmatprep.subr.bf16.mxu0 0
      %3081 = vmatpush1.bf16.msra.mxu0 0
      %3082 = vmatprep.subr.bf16.mxu0 0
      %3083 = vmatpush1.bf16.msra.mxu0 0
      %3084 = vmatprep.subr.bf16.mxu0 0
      %3085 = vmatpush1.bf16.msra.mxu0 0
      %3086 = vmatprep.subr.bf16.mxu0 0
      %3087 = vmatpush1.bf16.msra.mxu0 0
      %3088 = vmatprep.subr.bf16.mxu0 0
      %3089 = vmatpush1.bf16.msra.mxu0 0
      %3090 = vmatprep.subr.bf16.mxu0 0
      %3091 = vmatpush1.bf16.msra.mxu0 0
      %3092 = vmatprep.mubr.bf16.mxu0 0
      %3093 = vmatmul.mubr.bf16.gmra.mrb[0].mxu0 %v3049
      %v3094 = vpop.f32.mrb[0].mxu0
      %v3095 = vadd.f32 %v2994, %v3094
      %v3096 = vpop.f32.mrb[0].mxu0
      %v3097 = vpop.f32.mrb[0].mxu0
      %v3098 = vadd.f32 %v2997, %v3097
      %v3099 = vpop.f32.mrb[0].mxu0
      %3100 = vmatprep.mubr.bf16.mxu0 0
      %3101 = vmatmul.mubr.bf16.gmra.mrb[0].mxu0 %v3052
      %v3102 = vpop.f32.mrb[0].mxu0
      %v3103 = vadd.f32 %v3002, %v3102
      %v3104 = vpop.f32.mrb[0].mxu0
      %v3105 = vpop.f32.mrb[0].mxu0
      %v3106 = vadd.f32 %v3005, %v3105
      %v3107 = vpop.f32.mrb[0].mxu0
      %3108 = vmatprep.mubr.bf16.mxu0 0
      %3109 = vmatmul.mubr.bf16.gmra.mrb[0].mxu0 %v3055
      %v3110 = vpop.f32.mrb[0].mxu0
      %v3111 = vadd.f32 %v3010, %v3110
      %v3112 = vpop.f32.mrb[0].mxu0
      %v3113 = vpop.f32.mrb[0].mxu0
      %v3114 = vadd.f32 %v3013, %v3113
      %v3115 = vpop.f32.mrb[0].mxu0
      %3116 = vmatprep.mubr.bf16.mxu0 0
      %3117 = vmatmul.mubr.bf16.gmra.mrb[0].mxu0 %v3058
      %v3118 = vpop.f32.mrb[0].mxu0
      %v3119 = vadd.f32 %v3018, %v3118
      %v3120 = vpop.f32.mrb[0].mxu0
      %v3121 = vpop.f32.mrb[0].mxu0
      %v3122 = vadd.f32 %v3021, %v3121
      %v3123 = vpop.f32.mrb[0].mxu0
      %3124 = vdwg.mxu0
      %v3125 = vld [vmem:[#allocation2] sm:$0xf]
      %v3126 = vld [vmem:[#allocation2 + $0x4] sm:$0xf]
      %v3127 = vld [vmem:[#allocation2 + $0x8] sm:$0x3]
      %v3128 = vld [vmem:[#allocation2 + $0xc] sm:$0xf]
      %v3129 = vld [vmem:[#allocation2 + $0x10] sm:$0xf]
      %v3130 = vld [vmem:[#allocation2 + $0x14] sm:$0x3]
      %v3131 = vld [vmem:[#allocation2 + $0x18] sm:$0xf]
      %v3132 = vld [vmem:[#allocation2 + $0x1c] sm:$0xf]
      %v3133 = vld [vmem:[#allocation2 + $0x20] sm:$0x3]
      %v3134 = vld [vmem:[#allocation2 + $0x24] sm:$0xf]
      %v3135 = vld [vmem:[#allocation2 + $0x28] sm:$0xf]
      %v3136 = vld [vmem:[#allocation2 + $0x2c] sm:$0x3]
      %v3137 = vld [vmem:[#allocation2 + $0x30] sm:$0xf]
      %v3138 = vld [vmem:[#allocation2 + $0x34] sm:$0xf]
      %v3139 = vld [vmem:[#allocation2 + $0x38] sm:$0x3]
      %v3140 = vld [vmem:[#allocation2 + $0x3c] sm:$0xf]
      %v3141 = vld [vmem:[#allocation2 + $0x40] sm:$0xf]
      %v3142 = vld [vmem:[#allocation2 + $0x44] sm:$0x3]
      %v3143 = vld [vmem:[#allocation2 + $0x48] sm:$0xf]
      %v3144 = vld [vmem:[#allocation2 + $0x4c] sm:$0xf]
      %v3145 = vld [vmem:[#allocation2 + $0x50] sm:$0x3]
      %v3146 = vld [vmem:[#allocation2 + $0x54] sm:$0xf]
      %v3147 = vld [vmem:[#allocation2 + $0x58] sm:$0xf]
      %v3148 = vld [vmem:[#allocation2 + $0x5c] sm:$0x3]
      %v3149 = vld [vmem:[#allocation2 + $0x60] sm:$0xf]
      %v3150 = vld [vmem:[#allocation2 + $0x64] sm:$0xf]
      %v3151 = vld [vmem:[#allocation2 + $0x68] sm:$0x3]
      %v3152 = vld [vmem:[#allocation2 + $0x6c] sm:$0xf]
      %v3153 = vld [vmem:[#allocation2 + $0x70] sm:$0xf]
      %v3154 = vld [vmem:[#allocation2 + $0x74] sm:$0x3]
      %v3155 = vld [vmem:[#allocation2 + $0x78] sm:$0xf]
      %v3156 = vld [vmem:[#allocation2 + $0x7c] sm:$0xf]
      %v3157 = vld [vmem:[#allocation2 + $0x80] sm:$0x3]
      %v3158 = vld [vmem:[#allocation2 + $0x84] sm:$0xf]
      %v3159 = vld [vmem:[#allocation2 + $0x88] sm:$0xf]
      %v3160 = vld [vmem:[#allocation2 + $0x8c] sm:$0x3]
      %v3161 = vld [vmem:[#allocation2 + $0x90] sm:$0xf]
      %v3162 = vld [vmem:[#allocation2 + $0x94] sm:$0xf]
      %v3163 = vld [vmem:[#allocation2 + $0x98] sm:$0x3]
      %v3164 = vld [vmem:[#allocation2 + $0x9c] sm:$0xf]
      %v3165 = vld [vmem:[#allocation2 + $0xa0] sm:$0xf]
      %v3166 = vld [vmem:[#allocation2 + $0xa4] sm:$0x3]
      %v3167 = vld [vmem:[#allocation2 + $0xa8] sm:$0xf]
      %v3168 = vld [vmem:[#allocation2 + $0xac] sm:$0xf]
      %v3169 = vld [vmem:[#allocation2 + $0xb0] sm:$0x3]
      %v3170 = vld [vmem:[#allocation2 + $0xb4] sm:$0xf]
      %v3171 = vld [vmem:[#allocation2 + $0xb8] sm:$0xf]
      %v3172 = vld [vmem:[#allocation2 + $0xbc] sm:$0x3]
      %v3173 = vld [vmem:[#allocation2 + $0xc0] sm:$0xf]
      %v3174 = vld [vmem:[#allocation2 + $0xc4] sm:$0xf]
      %v3175 = vld [vmem:[#allocation2 + $0xc8] sm:$0x3]
      %v3176 = vld [vmem:[#allocation2 + $0xcc] sm:$0xf]
      %v3177 = vld [vmem:[#allocation2 + $0xd0] sm:$0xf]
      %v3178 = vld [vmem:[#allocation2 + $0xd4] sm:$0x3]
      %v3179 = vld [vmem:[#allocation2 + $0xd8] sm:$0xf]
      %v3180 = vld [vmem:[#allocation2 + $0xdc] sm:$0xf]
      %v3181 = vld [vmem:[#allocation2 + $0xe0] sm:$0x3]
      %v3182 = vld [vmem:[#allocation2 + $0xe4] sm:$0xf]
      %v3183 = vld [vmem:[#allocation2 + $0xe8] sm:$0xf]
      %v3184 = vld [vmem:[#allocation2 + $0xec] sm:$0x3]
      %v3185 = vmax.bf16 %v3125, %v3128
      %v3186 = vmax.bf16 %v3126, %v3129
      %v3187 = vmax.bf16 %v3127, %v3130
      %v3188 = vmax.bf16 %v3128, %v3131
      %v3189 = vmax.bf16 %v3129, %v3132
      %v3190 = vmax.bf16 %v3130, %v3133
      %v3191 = vmax.bf16 %v3131, %v3134
      %v3192 = vmax.bf16 %v3132, %v3135
      %v3193 = vmax.bf16 %v3133, %v3136
      %v3194 = vmax.bf16 %v3134, %v3137
      %v3195 = vmax.bf16 %v3135, %v3138
      %v3196 = vmax.bf16 %v3136, %v3139
      %v3197 = vmax.bf16 %v3137, %v3140
      %v3198 = vmax.bf16 %v3138, %v3141
      %v3199 = vmax.bf16 %v3139, %v3142
      %v3200 = vmax.bf16 %v3140, %v3143
      %v3201 = vmax.bf16 %v3141, %v3144
      %v3202 = vmax.bf16 %v3142, %v3145
      %v3203 = vmax.bf16 %v3143, %v3146
      %v3204 = vmax.bf16 %v3144, %v3147
      %v3205 = vmax.bf16 %v3145, %v3148
      %v3206 = vmax.bf16 %v3146, %v3149
      %v3207 = vmax.bf16 %v3147, %v3150
      %v3208 = vmax.bf16 %v3148, %v3151
      %v3209 = vmax.bf16 %v3149, %v3152
      %v3210 = vmax.bf16 %v3150, %v3153
      %v3211 = vmax.bf16 %v3151, %v3154
      %v3212 = vmax.bf16 %v3152, %v3155
      %v3213 = vmax.bf16 %v3153, %v3156
      %v3214 = vmax.bf16 %v3154, %v3157
      %v3215 = vmax.bf16 %v3155, %v3158
      %v3216 = vmax.bf16 %v3156, %v3159
      %v3217 = vmax.bf16 %v3157, %v3160
      %v3218 = vmax.bf16 %v3158, %v3161
      %v3219 = vmax.bf16 %v3159, %v3162
      %v3220 = vmax.bf16 %v3160, %v3163
      %v3221 = vmax.bf16 %v3161, %v3164
      %v3222 = vmax.bf16 %v3162, %v3165
      %v3223 = vmax.bf16 %v3163, %v3166
      %v3224 = vmax.bf16 %v3164, %v3167
      %v3225 = vmax.bf16 %v3165, %v3168
      %v3226 = vmax.bf16 %v3166, %v3169
      %v3227 = vmax.bf16 %v3167, %v3170
      %v3228 = vmax.bf16 %v3168, %v3171
      %v3229 = vmax.bf16 %v3169, %v3172
      %v3230 = vmax.bf16 %v3170, %v3173
      %v3231 = vmax.bf16 %v3171, %v3174
      %v3232 = vmax.bf16 %v3172, %v3175
      %v3233 = vmax.bf16 %v3185, %v3131
      %v3234 = vmax.bf16 %v3186, %v3132
      %v3235 = vmax.bf16 %v3187, %v3133
      %v3236 = vmax.bf16 %v3188, %v3134
      %v3237 = vmax.bf16 %v3189, %v3135
      %v3238 = vmax.bf16 %v3190, %v3136
      %v3239 = vmax.bf16 %v3191, %v3137
      %v3240 = vmax.bf16 %v3192, %v3138
      %v3241 = vmax.bf16 %v3193, %v3139
      %v3242 = vmax.bf16 %v3194, %v3140
      %v3243 = vmax.bf16 %v3195, %v3141
      %v3244 = vmax.bf16 %v3196, %v3142
      %v3245 = vmax.bf16 %v3197, %v3143
      %v3246 = vmax.bf16 %v3198, %v3144
      %v3247 = vmax.bf16 %v3199, %v3145
      %v3248 = vmax.bf16 %v3200, %v3146
      %v3249 = vmax.bf16 %v3201, %v3147
      %v3250 = vmax.bf16 %v3202, %v3148
      %v3251 = vmax.bf16 %v3203, %v3149
      %v3252 = vmax.bf16 %v3204, %v3150
      %v3253 = vmax.bf16 %v3205, %v3151
      %v3254 = vmax.bf16 %v3206, %v3152
      %v3255 = vmax.bf16 %v3207, %v3153
      %v3256 = vmax.bf16 %v3208, %v3154
      %v3257 = vmax.bf16 %v3209, %v3155
      %v3258 = vmax.bf16 %v3210, %v3156
      %v3259 = vmax.bf16 %v3211, %v3157
      %v3260 = vmax.bf16 %v3212, %v3158
      %v3261 = vmax.bf16 %v3213, %v3159
      %v3262 = vmax.bf16 %v3214, %v3160
      %v3263 = vmax.bf16 %v3215, %v3161
      %v3264 = vmax.bf16 %v3216, %v3162
      %v3265 = vmax.bf16 %v3217, %v3163
      %v3266 = vmax.bf16 %v3218, %v3164
      %v3267 = vmax.bf16 %v3219, %v3165
      %v3268 = vmax.bf16 %v3220, %v3166
      %v3269 = vmax.bf16 %v3221, %v3167
      %v3270 = vmax.bf16 %v3222, %v3168
      %v3271 = vmax.bf16 %v3223, %v3169
      %v3272 = vmax.bf16 %v3224, %v3170
      %v3273 = vmax.bf16 %v3225, %v3171
      %v3274 = vmax.bf16 %v3226, %v3172
      %v3275 = vmax.bf16 %v3227, %v3173
      %v3276 = vmax.bf16 %v3228, %v3174
      %v3277 = vmax.bf16 %v3229, %v3175
      %v3278 = vmax.bf16 %v3230, %v3176
      %v3279 = vmax.bf16 %v3231, %v3177
      %v3280 = vmax.bf16 %v3232, %v3178
      %v3281 = vmax.bf16 %v3233, %v3134
      %v3282 = vmax.bf16 %v3234, %v3135
      %v3283 = vmax.bf16 %v3235, %v3136
      %v3284 = vmax.bf16 %v3236, %v3137
      %v3285 = vmax.bf16 %v3237, %v3138
      %v3286 = vmax.bf16 %v3238, %v3139
      %v3287 = vmax.bf16 %v3239, %v3140
      %v3288 = vmax.bf16 %v3240, %v3141
      %v3289 = vmax.bf16 %v3241, %v3142
      %v3290 = vmax.bf16 %v3242, %v3143
      %v3291 = vmax.bf16 %v3243, %v3144
      %v3292 = vmax.bf16 %v3244, %v3145
      %v3293 = vmax.bf16 %v3245, %v3146
      %v3294 = vmax.bf16 %v3246, %v3147
      %v3295 = vmax.bf16 %v3247, %v3148
      %v3296 = vmax.bf16 %v3248, %v3149
      %v3297 = vmax.bf16 %v3249, %v3150
      %v3298 = vmax.bf16 %v3250, %v3151
      %v3299 = vmax.bf16 %v3251, %v3152
      %v3300 = vmax.bf16 %v3252, %v3153
      %v3301 = vmax.bf16 %v3253, %v3154
      %v3302 = vmax.bf16 %v3254, %v3155
      %v3303 = vmax.bf16 %v3255, %v3156
      %v3304 = vmax.bf16 %v3256, %v3157
      %v3305 = vmax.bf16 %v3257, %v3158
      %v3306 = vmax.bf16 %v3258, %v3159
      %v3307 = vmax.bf16 %v3259, %v3160
      %v3308 = vmax.bf16 %v3260, %v3161
      %v3309 = vmax.bf16 %v3261, %v3162
      %v3310 = vmax.bf16 %v3262, %v3163
      %v3311 = vmax.bf16 %v3263, %v3164
      %v3312 = vmax.bf16 %v3264, %v3165
      %v3313 = vmax.bf16 %v3265, %v3166
      %v3314 = vmax.bf16 %v3266, %v3167
      %v3315 = vmax.bf16 %v3267, %v3168
      %v3316 = vmax.bf16 %v3268, %v3169
      %v3317 = vmax.bf16 %v3269, %v3170
      %v3318 = vmax.bf16 %v3270, %v3171
      %v3319 = vmax.bf16 %v3271, %v3172
      %v3320 = vmax.bf16 %v3272, %v3173
      %v3321 = vmax.bf16 %v3273, %v3174
      %v3322 = vmax.bf16 %v3274, %v3175
      %v3323 = vmax.bf16 %v3275, %v3176
      %v3324 = vmax.bf16 %v3276, %v3177
      %v3325 = vmax.bf16 %v3277, %v3178
      %v3326 = vmax.bf16 %v3278, %v3179
      %v3327 = vmax.bf16 %v3279, %v3180
      %v3328 = vmax.bf16 %v3280, %v3181
      %v3329 = vmax.bf16 %v3281, %v3137
      %v3330 = vmax.bf16 %v3282, %v3138
      %v3331 = vmax.bf16 %v3283, %v3139
      %v3332 = vmax.bf16 %v3284, %v3140
      %v3333 = vmax.bf16 %v3285, %v3141
      %v3334 = vmax.bf16 %v3286, %v3142
      %v3335 = vmax.bf16 %v3287, %v3143
      %v3336 = vmax.bf16 %v3288, %v3144
      %v3337 = vmax.bf16 %v3289, %v3145
      %v3338 = vmax.bf16 %v3290, %v3146
      %v3339 = vmax.bf16 %v3291, %v3147
      %v3340 = vmax.bf16 %v3292, %v3148
      %v3341 = vmax.bf16 %v3293, %v3149
      %v3342 = vmax.bf16 %v3294, %v3150
      %v3343 = vmax.bf16 %v3295, %v3151
      %v3344 = vmax.bf16 %v3296, %v3152
      %v3345 = vmax.bf16 %v3297, %v3153
      %v3346 = vmax.bf16 %v3298, %v3154
      %v3347 = vmax.bf16 %v3299, %v3155
      %v3348 = vmax.bf16 %v3300, %v3156
      %v3349 = vmax.bf16 %v3301, %v3157
      %v3350 = vmax.bf16 %v3302, %v3158
      %v3351 = vmax.bf16 %v3303, %v3159
      %v3352 = vmax.bf16 %v3304, %v3160
      %v3353 = vmax.bf16 %v3305, %v3161
      %v3354 = vmax.bf16 %v3306, %v3162
      %v3355 = vmax.bf16 %v3307, %v3163
      %v3356 = vmax.bf16 %v3308, %v3164
      %v3357 = vmax.bf16 %v3309, %v3165
      %v3358 = vmax.bf16 %v3310, %v3166
      %v3359 = vmax.bf16 %v3311, %v3167
      %v3360 = vmax.bf16 %v3312, %v3168
      %v3361 = vmax.bf16 %v3313, %v3169
      %v3362 = vmax.bf16 %v3314, %v3170
      %v3363 = vmax.bf16 %v3315, %v3171
      %v3364 = vmax.bf16 %v3316, %v3172
      %v3365 = vmax.bf16 %v3317, %v3173
      %v3366 = vmax.bf16 %v3318, %v3174
      %v3367 = vmax.bf16 %v3319, %v3175
      %v3368 = vmax.bf16 %v3320, %v3176
      %v3369 = vmax.bf16 %v3321, %v3177
      %v3370 = vmax.bf16 %v3322, %v3178
      %v3371 = vmax.bf16 %v3323, %v3179
      %v3372 = vmax.bf16 %v3324, %v3180
      %v3373 = vmax.bf16 %v3325, %v3181
      %v3374 = vmax.bf16 %v3326, %v3182
      %v3375 = vmax.bf16 %v3327, %v3183
      %v3376 = vmax.bf16 %v3328, %v3184
      %v3378 = vshrl.u32 %v3329, 16
      %v3380 = vrot.slane %v3378, 4
      %v3381 = vshll.u32 %v3329, 16
      %v3383 = vrot.slane %v3381, 5
      %v3384 = vor.u32 %v3380, %v3383
      %v3385 = vrot.slane %v3384, 4
      %v3387 = vshll.u32 %v3330, 16
      %v3389 = vrot.slane %v3387, 5
      %v3390 = vsel %vm1498, %v3385, %v3389
      %v3391 = vshrl.u32 %v3330, 16
      %v3393 = vrot.slane %v3391, 4
      %v3394 = vor.u32 %v3393, %v3389
      %v3395 = vrot.slane %v3394, 4
      %v3397 = vshll.u32 %v3331, 16
      %v3399 = vrot.slane %v3397, 5
      %v3400 = vsel %vm1498, %v3395, %v3399
      %v3402 = vshrl.u32 %v3332, 16
      %v3404 = vrot.slane %v3402, 4
      %v3405 = vshll.u32 %v3332, 16
      %v3407 = vrot.slane %v3405, 5
      %v3408 = vor.u32 %v3404, %v3407
      %v3409 = vrot.slane %v3408, 4
      %v3411 = vshll.u32 %v3333, 16
      %v3413 = vrot.slane %v3411, 5
      %v3414 = vsel %vm1498, %v3409, %v3413
      %v3415 = vshrl.u32 %v3333, 16
      %v3417 = vrot.slane %v3415, 4
      %v3418 = vor.u32 %v3417, %v3413
      %v3419 = vrot.slane %v3418, 4
      %v3421 = vshll.u32 %v3334, 16
      %v3423 = vrot.slane %v3421, 5
      %v3424 = vsel %vm1498, %v3419, %v3423
      %v3426 = vshrl.u32 %v3335, 16
      %v3428 = vrot.slane %v3426, 4
      %v3429 = vshll.u32 %v3335, 16
      %v3431 = vrot.slane %v3429, 5
      %v3432 = vor.u32 %v3428, %v3431
      %v3433 = vrot.slane %v3432, 4
      %v3435 = vshll.u32 %v3336, 16
      %v3437 = vrot.slane %v3435, 5
      %v3438 = vsel %vm1498, %v3433, %v3437
      %v3439 = vshrl.u32 %v3336, 16
      %v3441 = vrot.slane %v3439, 4
      %v3442 = vor.u32 %v3441, %v3437
      %v3443 = vrot.slane %v3442, 4
      %v3445 = vshll.u32 %v3337, 16
      %v3447 = vrot.slane %v3445, 5
      %v3448 = vsel %vm1498, %v3443, %v3447
      %v3450 = vshrl.u32 %v3338, 16
      %v3452 = vrot.slane %v3450, 4
      %v3453 = vshll.u32 %v3338, 16
      %v3455 = vrot.slane %v3453, 5
      %v3456 = vor.u32 %v3452, %v3455
      %v3457 = vrot.slane %v3456, 4
      %v3459 = vshll.u32 %v3339, 16
      %v3461 = vrot.slane %v3459, 5
      %v3462 = vsel %vm1498, %v3457, %v3461
      %v3463 = vshrl.u32 %v3339, 16
      %v3465 = vrot.slane %v3463, 4
      %v3466 = vor.u32 %v3465, %v3461
      %v3467 = vrot.slane %v3466, 4
      %v3469 = vshll.u32 %v3340, 16
      %v3471 = vrot.slane %v3469, 5
      %v3472 = vsel %vm1498, %v3467, %v3471
      %v3474 = vshrl.u32 %v3341, 16
      %v3476 = vrot.slane %v3474, 4
      %v3477 = vshll.u32 %v3341, 16
      %v3479 = vrot.slane %v3477, 5
      %v3480 = vor.u32 %v3476, %v3479
      %v3481 = vrot.slane %v3480, 4
      %v3483 = vshll.u32 %v3342, 16
      %v3485 = vrot.slane %v3483, 5
      %v3486 = vsel %vm1498, %v3481, %v3485
      %v3487 = vshrl.u32 %v3342, 16
      %v3489 = vrot.slane %v3487, 4
      %v3490 = vor.u32 %v3489, %v3485
      %v3491 = vrot.slane %v3490, 4
      %v3493 = vshll.u32 %v3343, 16
      %v3495 = vrot.slane %v3493, 5
      %v3496 = vsel %vm1498, %v3491, %v3495
      %v3498 = vshrl.u32 %v3344, 16
      %v3500 = vrot.slane %v3498, 4
      %v3501 = vshll.u32 %v3344, 16
      %v3503 = vrot.slane %v3501, 5
      %v3504 = vor.u32 %v3500, %v3503
      %v3505 = vrot.slane %v3504, 4
      %v3507 = vshll.u32 %v3345, 16
      %v3509 = vrot.slane %v3507, 5
      %v3510 = vsel %vm1498, %v3505, %v3509
      %v3511 = vshrl.u32 %v3345, 16
      %v3513 = vrot.slane %v3511, 4
      %v3514 = vor.u32 %v3513, %v3509
      %v3515 = vrot.slane %v3514, 4
      %v3517 = vshll.u32 %v3346, 16
      %v3519 = vrot.slane %v3517, 5
      %v3520 = vsel %vm1498, %v3515, %v3519
      %v3522 = vshrl.u32 %v3347, 16
      %v3524 = vrot.slane %v3522, 4
      %v3525 = vshll.u32 %v3347, 16
      %v3527 = vrot.slane %v3525, 5
      %v3528 = vor.u32 %v3524, %v3527
      %v3529 = vrot.slane %v3528, 4
      %v3531 = vshll.u32 %v3348, 16
      %v3533 = vrot.slane %v3531, 5
      %v3534 = vsel %vm1498, %v3529, %v3533
      %v3535 = vshrl.u32 %v3348, 16
      %v3537 = vrot.slane %v3535, 4
      %v3538 = vor.u32 %v3537, %v3533
      %v3539 = vrot.slane %v3538, 4
      %v3541 = vshll.u32 %v3349, 16
      %v3543 = vrot.slane %v3541, 5
      %v3544 = vsel %vm1498, %v3539, %v3543
      %v3546 = vshrl.u32 %v3350, 16
      %v3548 = vrot.slane %v3546, 4
      %v3549 = vshll.u32 %v3350, 16
      %v3551 = vrot.slane %v3549, 5
      %v3552 = vor.u32 %v3548, %v3551
      %v3553 = vrot.slane %v3552, 4
      %v3555 = vshll.u32 %v3351, 16
      %v3557 = vrot.slane %v3555, 5
      %v3558 = vsel %vm1498, %v3553, %v3557
      %v3559 = vshrl.u32 %v3351, 16
      %v3561 = vrot.slane %v3559, 4
      %v3562 = vor.u32 %v3561, %v3557
      %v3563 = vrot.slane %v3562, 4
      %v3565 = vshll.u32 %v3352, 16
      %v3567 = vrot.slane %v3565, 5
      %v3568 = vsel %vm1498, %v3563, %v3567
      %v3570 = vshrl.u32 %v3353, 16
      %v3572 = vrot.slane %v3570, 4
      %v3573 = vshll.u32 %v3353, 16
      %v3575 = vrot.slane %v3573, 5
      %v3576 = vor.u32 %v3572, %v3575
      %v3577 = vrot.slane %v3576, 4
      %v3579 = vshll.u32 %v3354, 16
      %v3581 = vrot.slane %v3579, 5
      %v3582 = vsel %vm1498, %v3577, %v3581
      %v3583 = vshrl.u32 %v3354, 16
      %v3585 = vrot.slane %v3583, 4
      %v3586 = vor.u32 %v3585, %v3581
      %v3587 = vrot.slane %v3586, 4
      %v3589 = vshll.u32 %v3355, 16
      %v3591 = vrot.slane %v3589, 5
      %v3592 = vsel %vm1498, %v3587, %v3591
      %v3594 = vshrl.u32 %v3356, 16
      %v3596 = vrot.slane %v3594, 4
      %v3597 = vshll.u32 %v3356, 16
      %v3599 = vrot.slane %v3597, 5
      %v3600 = vor.u32 %v3596, %v3599
      %v3601 = vrot.slane %v3600, 4
      %v3603 = vshll.u32 %v3357, 16
      %v3605 = vrot.slane %v3603, 5
      %v3606 = vsel %vm1498, %v3601, %v3605
      %v3607 = vshrl.u32 %v3357, 16
      %v3609 = vrot.slane %v3607, 4
      %v3610 = vor.u32 %v3609, %v3605
      %v3611 = vrot.slane %v3610, 4
      %v3613 = vshll.u32 %v3358, 16
      %v3615 = vrot.slane %v3613, 5
      %v3616 = vsel %vm1498, %v3611, %v3615
      %v3618 = vshrl.u32 %v3359, 16
      %v3620 = vrot.slane %v3618, 4
      %v3621 = vshll.u32 %v3359, 16
      %v3623 = vrot.slane %v3621, 5
      %v3624 = vor.u32 %v3620, %v3623
      %v3625 = vrot.slane %v3624, 4
      %v3627 = vshll.u32 %v3360, 16
      %v3629 = vrot.slane %v3627, 5
      %v3630 = vsel %vm1498, %v3625, %v3629
      %v3631 = vshrl.u32 %v3360, 16
      %v3633 = vrot.slane %v3631, 4
      %v3634 = vor.u32 %v3633, %v3629
      %v3635 = vrot.slane %v3634, 4
      %v3637 = vshll.u32 %v3361, 16
      %v3639 = vrot.slane %v3637, 5
      %v3640 = vsel %vm1498, %v3635, %v3639
      %v3642 = vshrl.u32 %v3362, 16
      %v3644 = vrot.slane %v3642, 4
      %v3645 = vshll.u32 %v3362, 16
      %v3647 = vrot.slane %v3645, 5
      %v3648 = vor.u32 %v3644, %v3647
      %v3649 = vrot.slane %v3648, 4
      %v3651 = vshll.u32 %v3363, 16
      %v3653 = vrot.slane %v3651, 5
      %v3654 = vsel %vm1498, %v3649, %v3653
      %v3655 = vshrl.u32 %v3363, 16
      %v3657 = vrot.slane %v3655, 4
      %v3658 = vor.u32 %v3657, %v3653
      %v3659 = vrot.slane %v3658, 4
      %v3661 = vshll.u32 %v3364, 16
      %v3663 = vrot.slane %v3661, 5
      %v3664 = vsel %vm1498, %v3659, %v3663
      %v3666 = vshrl.u32 %v3365, 16
      %v3668 = vrot.slane %v3666, 4
      %v3669 = vshll.u32 %v3365, 16
      %v3671 = vrot.slane %v3669, 5
      %v3672 = vor.u32 %v3668, %v3671
      %v3673 = vrot.slane %v3672, 4
      %v3675 = vshll.u32 %v3366, 16
      %v3677 = vrot.slane %v3675, 5
      %v3678 = vsel %vm1498, %v3673, %v3677
      %v3679 = vshrl.u32 %v3366, 16
      %v3681 = vrot.slane %v3679, 4
      %v3682 = vor.u32 %v3681, %v3677
      %v3683 = vrot.slane %v3682, 4
      %v3685 = vshll.u32 %v3367, 16
      %v3687 = vrot.slane %v3685, 5
      %v3688 = vsel %vm1498, %v3683, %v3687
      %v3690 = vshrl.u32 %v3368, 16
      %v3692 = vrot.slane %v3690, 4
      %v3693 = vshll.u32 %v3368, 16
      %v3695 = vrot.slane %v3693, 5
      %v3696 = vor.u32 %v3692, %v3695
      %v3697 = vrot.slane %v3696, 4
      %v3699 = vshll.u32 %v3369, 16
      %v3701 = vrot.slane %v3699, 5
      %v3702 = vsel %vm1498, %v3697, %v3701
      %v3703 = vshrl.u32 %v3369, 16
      %v3705 = vrot.slane %v3703, 4
      %v3706 = vor.u32 %v3705, %v3701
      %v3707 = vrot.slane %v3706, 4
      %v3709 = vshll.u32 %v3370, 16
      %v3711 = vrot.slane %v3709, 5
      %v3712 = vsel %vm1498, %v3707, %v3711
      %v3714 = vshrl.u32 %v3371, 16
      %v3716 = vrot.slane %v3714, 4
      %v3717 = vshll.u32 %v3371, 16
      %v3719 = vrot.slane %v3717, 5
      %v3720 = vor.u32 %v3716, %v3719
      %v3721 = vrot.slane %v3720, 4
      %v3723 = vshll.u32 %v3372, 16
      %v3725 = vrot.slane %v3723, 5
      %v3726 = vsel %vm1498, %v3721, %v3725
      %v3727 = vshrl.u32 %v3372, 16
      %v3729 = vrot.slane %v3727, 4
      %v3730 = vor.u32 %v3729, %v3725
      %v3731 = vrot.slane %v3730, 4
      %v3733 = vshll.u32 %v3373, 16
      %v3735 = vrot.slane %v3733, 5
      %v3736 = vsel %vm1498, %v3731, %v3735
      %v3738 = vshrl.u32 %v3374, 16
      %v3740 = vrot.slane %v3738, 4
      %v3741 = vshll.u32 %v3374, 16
      %v3743 = vrot.slane %v3741, 5
      %v3744 = vor.u32 %v3740, %v3743
      %v3745 = vrot.slane %v3744, 4
      %v3747 = vshll.u32 %v3375, 16
      %v3749 = vrot.slane %v3747, 5
      %v3750 = vsel %vm1498, %v3745, %v3749
      %v3751 = vshrl.u32 %v3375, 16
      %v3753 = vrot.slane %v3751, 4
      %v3754 = vor.u32 %v3753, %v3749
      %v3755 = vrot.slane %v3754, 4
      %v3757 = vshll.u32 %v3376, 16
      %v3759 = vrot.slane %v3757, 5
      %v3760 = vsel %vm1498, %v3755, %v3759
      %v3793 = vmax.bf16 %v3329, %v3390
      %v3794 = vmax.bf16 %v3330, %v3400
      %v3795 = vmax.bf16 %v3332, %v3414
      %v3796 = vmax.bf16 %v3333, %v3424
      %v3797 = vmax.bf16 %v3335, %v3438
      %v3798 = vmax.bf16 %v3336, %v3448
      %v3799 = vmax.bf16 %v3338, %v3462
      %v3800 = vmax.bf16 %v3339, %v3472
      %v3801 = vmax.bf16 %v3341, %v3486
      %v3802 = vmax.bf16 %v3342, %v3496
      %v3803 = vmax.bf16 %v3344, %v3510
      %v3804 = vmax.bf16 %v3345, %v3520
      %v3805 = vmax.bf16 %v3347, %v3534
      %v3806 = vmax.bf16 %v3348, %v3544
      %v3807 = vmax.bf16 %v3350, %v3558
      %v3808 = vmax.bf16 %v3351, %v3568
      %v3809 = vmax.bf16 %v3353, %v3582
      %v3810 = vmax.bf16 %v3354, %v3592
      %v3811 = vmax.bf16 %v3356, %v3606
      %v3812 = vmax.bf16 %v3357, %v3616
      %v3813 = vmax.bf16 %v3359, %v3630
      %v3814 = vmax.bf16 %v3360, %v3640
      %v3815 = vmax.bf16 %v3362, %v3654
      %v3816 = vmax.bf16 %v3363, %v3664
      %v3817 = vmax.bf16 %v3365, %v3678
      %v3818 = vmax.bf16 %v3366, %v3688
      %v3819 = vmax.bf16 %v3368, %v3702
      %v3820 = vmax.bf16 %v3369, %v3712
      %v3821 = vmax.bf16 %v3371, %v3726
      %v3822 = vmax.bf16 %v3372, %v3736
      %v3823 = vmax.bf16 %v3374, %v3750
      %v3824 = vmax.bf16 %v3375, %v3760
      %v3873 = vrot.slane %v3329, 5
      %v3874 = vrot.slane %v3873, 4
      %v3875 = vrot.slane %v3330, 5
      %v3876 = vsel %vm1211, %v3874, %v3875
      %v3877 = vrot.slane %v3875, 4
      %v3878 = vrot.slane %v3331, 5
      %v3879 = vsel %vm1211, %v3877, %v3878
      %v3880 = vrot.slane %v3332, 5
      %v3881 = vrot.slane %v3880, 4
      %v3882 = vrot.slane %v3333, 5
      %v3883 = vsel %vm1211, %v3881, %v3882
      %v3884 = vrot.slane %v3882, 4
      %v3885 = vrot.slane %v3334, 5
      %v3886 = vsel %vm1211, %v3884, %v3885
      %v3887 = vrot.slane %v3335, 5
      %v3888 = vrot.slane %v3887, 4
      %v3889 = vrot.slane %v3336, 5
      %v3890 = vsel %vm1211, %v3888, %v3889
      %v3891 = vrot.slane %v3889, 4
      %v3892 = vrot.slane %v3337, 5
      %v3893 = vsel %vm1211, %v3891, %v3892
      %v3894 = vrot.slane %v3338, 5
      %v3895 = vrot.slane %v3894, 4
      %v3896 = vrot.slane %v3339, 5
      %v3897 = vsel %vm1211, %v3895, %v3896
      %v3898 = vrot.slane %v3896, 4
      %v3899 = vrot.slane %v3340, 5
      %v3900 = vsel %vm1211, %v3898, %v3899
      %v3901 = vrot.slane %v3341, 5
      %v3902 = vrot.slane %v3901, 4
      %v3903 = vrot.slane %v3342, 5
      %v3904 = vsel %vm1211, %v3902, %v3903
      %v3905 = vrot.slane %v3903, 4
      %v3906 = vrot.slane %v3343, 5
      %v3907 = vsel %vm1211, %v3905, %v3906
      %v3908 = vrot.slane %v3344, 5
      %v3909 = vrot.slane %v3908, 4
      %v3910 = vrot.slane %v3345, 5
      %v3911 = vsel %vm1211, %v3909, %v3910
      %v3912 = vrot.slane %v3910, 4
      %v3913 = vrot.slane %v3346, 5
      %v3914 = vsel %vm1211, %v3912, %v3913
      %v3915 = vrot.slane %v3347, 5
      %v3916 = vrot.slane %v3915, 4
      %v3917 = vrot.slane %v3348, 5
      %v3918 = vsel %vm1211, %v3916, %v3917
      %v3919 = vrot.slane %v3917, 4
      %v3920 = vrot.slane %v3349, 5
      %v3921 = vsel %vm1211, %v3919, %v3920
      %v3922 = vrot.slane %v3350, 5
      %v3923 = vrot.slane %v3922, 4
      %v3924 = vrot.slane %v3351, 5
      %v3925 = vsel %vm1211, %v3923, %v3924
      %v3926 = vrot.slane %v3924, 4
      %v3927 = vrot.slane %v3352, 5
      %v3928 = vsel %vm1211, %v3926, %v3927
      %v3929 = vrot.slane %v3353, 5
      %v3930 = vrot.slane %v3929, 4
      %v3931 = vrot.slane %v3354, 5
      %v3932 = vsel %vm1211, %v3930, %v3931
      %v3933 = vrot.slane %v3931, 4
      %v3934 = vrot.slane %v3355, 5
      %v3935 = vsel %vm1211, %v3933, %v3934
      %v3936 = vrot.slane %v3356, 5
      %v3937 = vrot.slane %v3936, 4
      %v3938 = vrot.slane %v3357, 5
      %v3939 = vsel %vm1211, %v3937, %v3938
      %v3940 = vrot.slane %v3938, 4
      %v3941 = vrot.slane %v3358, 5
      %v3942 = vsel %vm1211, %v3940, %v3941
      %v3943 = vrot.slane %v3359, 5
      %v3944 = vrot.slane %v3943, 4
      %v3945 = vrot.slane %v3360, 5
      %v3946 = vsel %vm1211, %v3944, %v3945
      %v3947 = vrot.slane %v3945, 4
      %v3948 = vrot.slane %v3361, 5
      %v3949 = vsel %vm1211, %v3947, %v3948
      %v3950 = vrot.slane %v3362, 5
      %v3951 = vrot.slane %v3950, 4
      %v3952 = vrot.slane %v3363, 5
      %v3953 = vsel %vm1211, %v3951, %v3952
      %v3954 = vrot.slane %v3952, 4
      %v3955 = vrot.slane %v3364, 5
      %v3956 = vsel %vm1211, %v3954, %v3955
      %v3957 = vrot.slane %v3365, 5
      %v3958 = vrot.slane %v3957, 4
      %v3959 = vrot.slane %v3366, 5
      %v3960 = vsel %vm1211, %v3958, %v3959
      %v3961 = vrot.slane %v3959, 4
      %v3962 = vrot.slane %v3367, 5
      %v3963 = vsel %vm1211, %v3961, %v3962
      %v3964 = vrot.slane %v3368, 5
      %v3965 = vrot.slane %v3964, 4
      %v3966 = vrot.slane %v3369, 5
      %v3967 = vsel %vm1211, %v3965, %v3966
      %v3968 = vrot.slane %v3966, 4
      %v3969 = vrot.slane %v3370, 5
      %v3970 = vsel %vm1211, %v3968, %v3969
      %v3971 = vrot.slane %v3371, 5
      %v3972 = vrot.slane %v3971, 4
      %v3973 = vrot.slane %v3372, 5
      %v3974 = vsel %vm1211, %v3972, %v3973
      %v3975 = vrot.slane %v3973, 4
      %v3976 = vrot.slane %v3373, 5
      %v3977 = vsel %vm1211, %v3975, %v3976
      %v3978 = vrot.slane %v3374, 5
      %v3979 = vrot.slane %v3978, 4
      %v3980 = vrot.slane %v3375, 5
      %v3981 = vsel %vm1211, %v3979, %v3980
      %v3982 = vrot.slane %v3980, 4
      %v3983 = vrot.slane %v3376, 5
      %v3984 = vsel %vm1211, %v3982, %v3983
      %v4017 = vmax.bf16 %v3793, %v3876
      %v4018 = vmax.bf16 %v3794, %v3879
      %v4019 = vmax.bf16 %v3795, %v3883
      %v4020 = vmax.bf16 %v3796, %v3886
      %v4021 = vmax.bf16 %v3797, %v3890
      %v4022 = vmax.bf16 %v3798, %v3893
      %v4023 = vmax.bf16 %v3799, %v3897
      %v4024 = vmax.bf16 %v3800, %v3900
      %v4025 = vmax.bf16 %v3801, %v3904
      %v4026 = vmax.bf16 %v3802, %v3907
      %v4027 = vmax.bf16 %v3803, %v3911
      %v4028 = vmax.bf16 %v3804, %v3914
      %v4029 = vmax.bf16 %v3805, %v3918
      %v4030 = vmax.bf16 %v3806, %v3921
      %v4031 = vmax.bf16 %v3807, %v3925
      %v4032 = vmax.bf16 %v3808, %v3928
      %v4033 = vmax.bf16 %v3809, %v3932
      %v4034 = vmax.bf16 %v3810, %v3935
      %v4035 = vmax.bf16 %v3811, %v3939
      %v4036 = vmax.bf16 %v3812, %v3942
      %v4037 = vmax.bf16 %v3813, %v3946
      %v4038 = vmax.bf16 %v3814, %v3949
      %v4039 = vmax.bf16 %v3815, %v3953
      %v4040 = vmax.bf16 %v3816, %v3956
      %v4041 = vmax.bf16 %v3817, %v3960
      %v4042 = vmax.bf16 %v3818, %v3963
      %v4043 = vmax.bf16 %v3819, %v3967
      %v4044 = vmax.bf16 %v3820, %v3970
      %v4045 = vmax.bf16 %v3821, %v3974
      %v4046 = vmax.bf16 %v3822, %v3977
      %v4047 = vmax.bf16 %v3823, %v3981
      %v4048 = vmax.bf16 %v3824, %v3984
      %v4049 = vrot.slane %v3378, 5
      %v4050 = vrot.slane %v3381, 6
      %v4051 = vor.u32 %v4049, %v4050
      %v4052 = vrot.slane %v4051, 4
      %v4053 = vrot.slane %v3391, 5
      %v4054 = vrot.slane %v3387, 6
      %v4055 = vor.u32 %v4053, %v4054
      %v4056 = vsel %vm2173, %v4052, %v4055
      %v4057 = vrot.slane %v4055, 4
      %v4058 = vshrl.u32 %v3331, 16
      %v4060 = vrot.slane %v4058, 5
      %v4061 = vrot.slane %v3397, 6
      %v4062 = vor.u32 %v4060, %v4061
      %v4063 = vsel %vm2173, %v4057, %v4062
      %v4064 = vrot.slane %v3402, 5
      %v4065 = vrot.slane %v3405, 6
      %v4066 = vor.u32 %v4064, %v4065
      %v4067 = vrot.slane %v4066, 4
      %v4068 = vrot.slane %v3415, 5
      %v4069 = vrot.slane %v3411, 6
      %v4070 = vor.u32 %v4068, %v4069
      %v4071 = vsel %vm2173, %v4067, %v4070
      %v4072 = vrot.slane %v4070, 4
      %v4073 = vshrl.u32 %v3334, 16
      %v4075 = vrot.slane %v4073, 5
      %v4076 = vrot.slane %v3421, 6
      %v4077 = vor.u32 %v4075, %v4076
      %v4078 = vsel %vm2173, %v4072, %v4077
      %v4079 = vrot.slane %v3426, 5
      %v4080 = vrot.slane %v3429, 6
      %v4081 = vor.u32 %v4079, %v4080
      %v4082 = vrot.slane %v4081, 4
      %v4083 = vrot.slane %v3439, 5
      %v4084 = vrot.slane %v3435, 6
      %v4085 = vor.u32 %v4083, %v4084
      %v4086 = vsel %vm2173, %v4082, %v4085
      %v4087 = vrot.slane %v4085, 4
      %v4088 = vshrl.u32 %v3337, 16
      %v4090 = vrot.slane %v4088, 5
      %v4091 = vrot.slane %v3445, 6
      %v4092 = vor.u32 %v4090, %v4091
      %v4093 = vsel %vm2173, %v4087, %v4092
      %v4094 = vrot.slane %v3450, 5
      %v4095 = vrot.slane %v3453, 6
      %v4096 = vor.u32 %v4094, %v4095
      %v4097 = vrot.slane %v4096, 4
      %v4098 = vrot.slane %v3463, 5
      %v4099 = vrot.slane %v3459, 6
      %v4100 = vor.u32 %v4098, %v4099
      %v4101 = vsel %vm2173, %v4097, %v4100
      %v4102 = vrot.slane %v4100, 4
      %v4103 = vshrl.u32 %v3340, 16
      %v4105 = vrot.slane %v4103, 5
      %v4106 = vrot.slane %v3469, 6
      %v4107 = vor.u32 %v4105, %v4106
      %v4108 = vsel %vm2173, %v4102, %v4107
      %v4109 = vrot.slane %v3474, 5
      %v4110 = vrot.slane %v3477, 6
      %v4111 = vor.u32 %v4109, %v4110
      %v4112 = vrot.slane %v4111, 4
      %v4113 = vrot.slane %v3487, 5
      %v4114 = vrot.slane %v3483, 6
      %v4115 = vor.u32 %v4113, %v4114
      %v4116 = vsel %vm2173, %v4112, %v4115
      %v4117 = vrot.slane %v4115, 4
      %v4118 = vshrl.u32 %v3343, 16
      %v4120 = vrot.slane %v4118, 5
      %v4121 = vrot.slane %v3493, 6
      %v4122 = vor.u32 %v4120, %v4121
      %v4123 = vsel %vm2173, %v4117, %v4122
      %v4124 = vrot.slane %v3498, 5
      %v4125 = vrot.slane %v3501, 6
      %v4126 = vor.u32 %v4124, %v4125
      %v4127 = vrot.slane %v4126, 4
      %v4128 = vrot.slane %v3511, 5
      %v4129 = vrot.slane %v3507, 6
      %v4130 = vor.u32 %v4128, %v4129
      %v4131 = vsel %vm2173, %v4127, %v4130
      %v4132 = vrot.slane %v4130, 4
      %v4133 = vshrl.u32 %v3346, 16
      %v4135 = vrot.slane %v4133, 5
      %v4136 = vrot.slane %v3517, 6
      %v4137 = vor.u32 %v4135, %v4136
      %v4138 = vsel %vm2173, %v4132, %v4137
      %v4139 = vrot.slane %v3522, 5
      %v4140 = vrot.slane %v3525, 6
      %v4141 = vor.u32 %v4139, %v4140
      %v4142 = vrot.slane %v4141, 4
      %v4143 = vrot.slane %v3535, 5
      %v4144 = vrot.slane %v3531, 6
      %v4145 = vor.u32 %v4143, %v4144
      %v4146 = vsel %vm2173, %v4142, %v4145
      %v4147 = vrot.slane %v4145, 4
      %v4148 = vshrl.u32 %v3349, 16
      %v4150 = vrot.slane %v4148, 5
      %v4151 = vrot.slane %v3541, 6
      %v4152 = vor.u32 %v4150, %v4151
      %v4153 = vsel %vm2173, %v4147, %v4152
      %v4154 = vrot.slane %v3546, 5
      %v4155 = vrot.slane %v3549, 6
      %v4156 = vor.u32 %v4154, %v4155
      %v4157 = vrot.slane %v4156, 4
      %v4158 = vrot.slane %v3559, 5
      %v4159 = vrot.slane %v3555, 6
      %v4160 = vor.u32 %v4158, %v4159
      %v4161 = vsel %vm2173, %v4157, %v4160
      %v4162 = vrot.slane %v4160, 4
      %v4163 = vshrl.u32 %v3352, 16
      %v4165 = vrot.slane %v4163, 5
      %v4166 = vrot.slane %v3565, 6
      %v4167 = vor.u32 %v4165, %v4166
      %v4168 = vsel %vm2173, %v4162, %v4167
      %v4169 = vrot.slane %v3570, 5
      %v4170 = vrot.slane %v3573, 6
      %v4171 = vor.u32 %v4169, %v4170
      %v4172 = vrot.slane %v4171, 4
      %v4173 = vrot.slane %v3583, 5
      %v4174 = vrot.slane %v3579, 6
      %v4175 = vor.u32 %v4173, %v4174
      %v4176 = vsel %vm2173, %v4172, %v4175
      %v4177 = vrot.slane %v4175, 4
      %v4178 = vshrl.u32 %v3355, 16
      %v4180 = vrot.slane %v4178, 5
      %v4181 = vrot.slane %v3589, 6
      %v4182 = vor.u32 %v4180, %v4181
      %v4183 = vsel %vm2173, %v4177, %v4182
      %v4184 = vrot.slane %v3594, 5
      %v4185 = vrot.slane %v3597, 6
      %v4186 = vor.u32 %v4184, %v4185
      %v4187 = vrot.slane %v4186, 4
      %v4188 = vrot.slane %v3607, 5
      %v4189 = vrot.slane %v3603, 6
      %v4190 = vor.u32 %v4188, %v4189
      %v4191 = vsel %vm2173, %v4187, %v4190
      %v4192 = vrot.slane %v4190, 4
      %v4193 = vshrl.u32 %v3358, 16
      %v4195 = vrot.slane %v4193, 5
      %v4196 = vrot.slane %v3613, 6
      %v4197 = vor.u32 %v4195, %v4196
      %v4198 = vsel %vm2173, %v4192, %v4197
      %v4199 = vrot.slane %v3618, 5
      %v4200 = vrot.slane %v3621, 6
      %v4201 = vor.u32 %v4199, %v4200
      %v4202 = vrot.slane %v4201, 4
      %v4203 = vrot.slane %v3631, 5
      %v4204 = vrot.slane %v3627, 6
      %v4205 = vor.u32 %v4203, %v4204
      %v4206 = vsel %vm2173, %v4202, %v4205
      %v4207 = vrot.slane %v4205, 4
      %v4208 = vshrl.u32 %v3361, 16
      %v4210 = vrot.slane %v4208, 5
      %v4211 = vrot.slane %v3637, 6
      %v4212 = vor.u32 %v4210, %v4211
      %v4213 = vsel %vm2173, %v4207, %v4212
      %v4214 = vrot.slane %v3642, 5
      %v4215 = vrot.slane %v3645, 6
      %v4216 = vor.u32 %v4214, %v4215
      %v4217 = vrot.slane %v4216, 4
      %v4218 = vrot.slane %v3655, 5
      %v4219 = vrot.slane %v3651, 6
      %v4220 = vor.u32 %v4218, %v4219
      %v4221 = vsel %vm2173, %v4217, %v4220
      %v4222 = vrot.slane %v4220, 4
      %v4223 = vshrl.u32 %v3364, 16
      %v4225 = vrot.slane %v4223, 5
      %v4226 = vrot.slane %v3661, 6
      %v4227 = vor.u32 %v4225, %v4226
      %v4228 = vsel %vm2173, %v4222, %v4227
      %v4229 = vrot.slane %v3666, 5
      %v4230 = vrot.slane %v3669, 6
      %v4231 = vor.u32 %v4229, %v4230
      %v4232 = vrot.slane %v4231, 4
      %v4233 = vrot.slane %v3679, 5
      %v4234 = vrot.slane %v3675, 6
      %v4235 = vor.u32 %v4233, %v4234
      %v4236 = vsel %vm2173, %v4232, %v4235
      %v4237 = vrot.slane %v4235, 4
      %v4238 = vshrl.u32 %v3367, 16
      %v4240 = vrot.slane %v4238, 5
      %v4241 = vrot.slane %v3685, 6
      %v4242 = vor.u32 %v4240, %v4241
      %v4243 = vsel %vm2173, %v4237, %v4242
      %v4244 = vrot.slane %v3690, 5
      %v4245 = vrot.slane %v3693, 6
      %v4246 = vor.u32 %v4244, %v4245
      %v4247 = vrot.slane %v4246, 4
      %v4248 = vrot.slane %v3703, 5
      %v4249 = vrot.slane %v3699, 6
      %v4250 = vor.u32 %v4248, %v4249
      %v4251 = vsel %vm2173, %v4247, %v4250
      %v4252 = vrot.slane %v4250, 4
      %v4253 = vshrl.u32 %v3370, 16
      %v4255 = vrot.slane %v4253, 5
      %v4256 = vrot.slane %v3709, 6
      %v4257 = vor.u32 %v4255, %v4256
      %v4258 = vsel %vm2173, %v4252, %v4257
      %v4259 = vrot.slane %v3714, 5
      %v4260 = vrot.slane %v3717, 6
      %v4261 = vor.u32 %v4259, %v4260
      %v4262 = vrot.slane %v4261, 4
      %v4263 = vrot.slane %v3727, 5
      %v4264 = vrot.slane %v3723, 6
      %v4265 = vor.u32 %v4263, %v4264
      %v4266 = vsel %vm2173, %v4262, %v4265
      %v4267 = vrot.slane %v4265, 4
      %v4268 = vshrl.u32 %v3373, 16
      %v4270 = vrot.slane %v4268, 5
      %v4271 = vrot.slane %v3733, 6
      %v4272 = vor.u32 %v4270, %v4271
      %v4273 = vsel %vm2173, %v4267, %v4272
      %v4274 = vrot.slane %v3738, 5
      %v4275 = vrot.slane %v3741, 6
      %v4276 = vor.u32 %v4274, %v4275
      %v4277 = vrot.slane %v4276, 4
      %v4278 = vrot.slane %v3751, 5
      %v4279 = vrot.slane %v3747, 6
      %v4280 = vor.u32 %v4278, %v4279
      %v4281 = vsel %vm2173, %v4277, %v4280
      %v4282 = vrot.slane %v4280, 4
      %v4283 = vshrl.u32 %v3376, 16
      %v4285 = vrot.slane %v4283, 5
      %v4286 = vrot.slane %v3757, 6
      %v4287 = vor.u32 %v4285, %v4286
      %v4288 = vsel %vm2173, %v4282, %v4287
      %v4321 = vmax.bf16 %v4017, %v4056
      %v4322 = vmax.bf16 %v4018, %v4063
      %v4323 = vmax.bf16 %v4019, %v4071
      %v4324 = vmax.bf16 %v4020, %v4078
      %v4325 = vmax.bf16 %v4021, %v4086
      %v4326 = vmax.bf16 %v4022, %v4093
      %v4327 = vmax.bf16 %v4023, %v4101
      %v4328 = vmax.bf16 %v4024, %v4108
      %v4329 = vmax.bf16 %v4025, %v4116
      %v4330 = vmax.bf16 %v4026, %v4123
      %v4331 = vmax.bf16 %v4027, %v4131
      %v4332 = vmax.bf16 %v4028, %v4138
      %v4333 = vmax.bf16 %v4029, %v4146
      %v4334 = vmax.bf16 %v4030, %v4153
      %v4335 = vmax.bf16 %v4031, %v4161
      %v4336 = vmax.bf16 %v4032, %v4168
      %v4337 = vmax.bf16 %v4033, %v4176
      %v4338 = vmax.bf16 %v4034, %v4183
      %v4339 = vmax.bf16 %v4035, %v4191
      %v4340 = vmax.bf16 %v4036, %v4198
      %v4341 = vmax.bf16 %v4037, %v4206
      %v4342 = vmax.bf16 %v4038, %v4213
      %v4343 = vmax.bf16 %v4039, %v4221
      %v4344 = vmax.bf16 %v4040, %v4228
      %v4345 = vmax.bf16 %v4041, %v4236
      %v4346 = vmax.bf16 %v4042, %v4243
      %v4347 = vmax.bf16 %v4043, %v4251
      %v4348 = vmax.bf16 %v4044, %v4258
      %v4349 = vmax.bf16 %v4045, %v4266
      %v4350 = vmax.bf16 %v4046, %v4273
      %v4351 = vmax.bf16 %v4047, %v4281
      %v4352 = vmax.bf16 %v4048, %v4288
      %v4353 = vrot.slane %v3329, 6
      %v4354 = vrot.slane %v4353, 4
      %v4355 = vrot.slane %v3330, 6
      %v4356 = vsel %vm2480, %v4354, %v4355
      %v4357 = vrot.slane %v4355, 4
      %v4358 = vrot.slane %v3331, 6
      %v4359 = vsel %vm2480, %v4357, %v4358
      %v4360 = vrot.slane %v3332, 6
      %v4361 = vrot.slane %v4360, 4
      %v4362 = vrot.slane %v3333, 6
      %v4363 = vsel %vm2480, %v4361, %v4362
      %v4364 = vrot.slane %v4362, 4
      %v4365 = vrot.slane %v3334, 6
      %v4366 = vsel %vm2480, %v4364, %v4365
      %v4367 = vrot.slane %v3335, 6
      %v4368 = vrot.slane %v4367, 4
      %v4369 = vrot.slane %v3336, 6
      %v4370 = vsel %vm2480, %v4368, %v4369
      %v4371 = vrot.slane %v4369, 4
      %v4372 = vrot.slane %v3337, 6
      %v4373 = vsel %vm2480, %v4371, %v4372
      %v4374 = vrot.slane %v3338, 6
      %v4375 = vrot.slane %v4374, 4
      %v4376 = vrot.slane %v3339, 6
      %v4377 = vsel %vm2480, %v4375, %v4376
      %v4378 = vrot.slane %v4376, 4
      %v4379 = vrot.slane %v3340, 6
      %v4380 = vsel %vm2480, %v4378, %v4379
      %v4381 = vrot.slane %v3341, 6
      %v4382 = vrot.slane %v4381, 4
      %v4383 = vrot.slane %v3342, 6
      %v4384 = vsel %vm2480, %v4382, %v4383
      %v4385 = vrot.slane %v4383, 4
      %v4386 = vrot.slane %v3343, 6
      %v4387 = vsel %vm2480, %v4385, %v4386
      %v4388 = vrot.slane %v3344, 6
      %v4389 = vrot.slane %v4388, 4
      %v4390 = vrot.slane %v3345, 6
      %v4391 = vsel %vm2480, %v4389, %v4390
      %v4392 = vrot.slane %v4390, 4
      %v4393 = vrot.slane %v3346, 6
      %v4394 = vsel %vm2480, %v4392, %v4393
      %v4395 = vrot.slane %v3347, 6
      %v4396 = vrot.slane %v4395, 4
      %v4397 = vrot.slane %v3348, 6
      %v4398 = vsel %vm2480, %v4396, %v4397
      %v4399 = vrot.slane %v4397, 4
      %v4400 = vrot.slane %v3349, 6
      %v4401 = vsel %vm2480, %v4399, %v4400
      %v4402 = vrot.slane %v3350, 6
      %v4403 = vrot.slane %v4402, 4
      %v4404 = vrot.slane %v3351, 6
      %v4405 = vsel %vm2480, %v4403, %v4404
      %v4406 = vrot.slane %v4404, 4
      %v4407 = vrot.slane %v3352, 6
      %v4408 = vsel %vm2480, %v4406, %v4407
      %v4409 = vrot.slane %v3353, 6
      %v4410 = vrot.slane %v4409, 4
      %v4411 = vrot.slane %v3354, 6
      %v4412 = vsel %vm2480, %v4410, %v4411
      %v4413 = vrot.slane %v4411, 4
      %v4414 = vrot.slane %v3355, 6
      %v4415 = vsel %vm2480, %v4413, %v4414
      %v4416 = vrot.slane %v3356, 6
      %v4417 = vrot.slane %v4416, 4
      %v4418 = vrot.slane %v3357, 6
      %v4419 = vsel %vm2480, %v4417, %v4418
      %v4420 = vrot.slane %v4418, 4
      %v4421 = vrot.slane %v3358, 6
      %v4422 = vsel %vm2480, %v4420, %v4421
      %v4423 = vrot.slane %v3359, 6
      %v4424 = vrot.slane %v4423, 4
      %v4425 = vrot.slane %v3360, 6
      %v4426 = vsel %vm2480, %v4424, %v4425
      %v4427 = vrot.slane %v4425, 4
      %v4428 = vrot.slane %v3361, 6
      %v4429 = vsel %vm2480, %v4427, %v4428
      %v4430 = vrot.slane %v3362, 6
      %v4431 = vrot.slane %v4430, 4
      %v4432 = vrot.slane %v3363, 6
      %v4433 = vsel %vm2480, %v4431, %v4432
      %v4434 = vrot.slane %v4432, 4
      %v4435 = vrot.slane %v3364, 6
      %v4436 = vsel %vm2480, %v4434, %v4435
      %v4437 = vrot.slane %v3365, 6
      %v4438 = vrot.slane %v4437, 4
      %v4439 = vrot.slane %v3366, 6
      %v4440 = vsel %vm2480, %v4438, %v4439
      %v4441 = vrot.slane %v4439, 4
      %v4442 = vrot.slane %v3367, 6
      %v4443 = vsel %vm2480, %v4441, %v4442
      %v4444 = vrot.slane %v3368, 6
      %v4445 = vrot.slane %v4444, 4
      %v4446 = vrot.slane %v3369, 6
      %v4447 = vsel %vm2480, %v4445, %v4446
      %v4448 = vrot.slane %v4446, 4
      %v4449 = vrot.slane %v3370, 6
      %v4450 = vsel %vm2480, %v4448, %v4449
      %v4451 = vrot.slane %v3371, 6
      %v4452 = vrot.slane %v4451, 4
      %v4453 = vrot.slane %v3372, 6
      %v4454 = vsel %vm2480, %v4452, %v4453
      %v4455 = vrot.slane %v4453, 4
      %v4456 = vrot.slane %v3373, 6
      %v4457 = vsel %vm2480, %v4455, %v4456
      %v4458 = vrot.slane %v3374, 6
      %v4459 = vrot.slane %v4458, 4
      %v4460 = vrot.slane %v3375, 6
      %v4461 = vsel %vm2480, %v4459, %v4460
      %v4462 = vrot.slane %v4460, 4
      %v4463 = vrot.slane %v3376, 6
      %v4464 = vsel %vm2480, %v4462, %v4463
      %v4497 = vmax.bf16 %v4321, %v4356
      %v4498 = vmax.bf16 %v4322, %v4359
      %v4499 = vmax.bf16 %v4323, %v4363
      %v4500 = vmax.bf16 %v4324, %v4366
      %v4501 = vmax.bf16 %v4325, %v4370
      %v4502 = vmax.bf16 %v4326, %v4373
      %v4503 = vmax.bf16 %v4327, %v4377
      %v4504 = vmax.bf16 %v4328, %v4380
      %v4505 = vmax.bf16 %v4329, %v4384
      %v4506 = vmax.bf16 %v4330, %v4387
      %v4507 = vmax.bf16 %v4331, %v4391
      %v4508 = vmax.bf16 %v4332, %v4394
      %v4509 = vmax.bf16 %v4333, %v4398
      %v4510 = vmax.bf16 %v4334, %v4401
      %v4511 = vmax.bf16 %v4335, %v4405
      %v4512 = vmax.bf16 %v4336, %v4408
      %v4513 = vmax.bf16 %v4337, %v4412
      %v4514 = vmax.bf16 %v4338, %v4415
      %v4515 = vmax.bf16 %v4339, %v4419
      %v4516 = vmax.bf16 %v4340, %v4422
      %v4517 = vmax.bf16 %v4341, %v4426
      %v4518 = vmax.bf16 %v4342, %v4429
      %v4519 = vmax.bf16 %v4343, %v4433
      %v4520 = vmax.bf16 %v4344, %v4436
      %v4521 = vmax.bf16 %v4345, %v4440
      %v4522 = vmax.bf16 %v4346, %v4443
      %v4523 = vmax.bf16 %v4347, %v4447
      %v4524 = vmax.bf16 %v4348, %v4450
      %v4525 = vmax.bf16 %v4349, %v4454
      %v4526 = vmax.bf16 %v4350, %v4457
      %v4527 = vmax.bf16 %v4351, %v4461
      %v4528 = vmax.bf16 %v4352, %v4464
      %v4561 = vrot.slane %v4497, 7
      %v4562 = vrot.slane %v4561, 4
      %v4563 = vrot.slane %v4498, 7
      %v4564 = vsel %vm1002, %v4562, %v4563
      %v4565 = vrot.slane %v4563, 4
      %v4566 = vrot.slane %v4499, 7
      %v4567 = vrot.slane %v4566, 4
      %v4568 = vrot.slane %v4500, 7
      %v4569 = vsel %vm1002, %v4567, %v4568
      %v4570 = vrot.slane %v4568, 4
      %v4571 = vrot.slane %v4501, 7
      %v4572 = vrot.slane %v4571, 4
      %v4573 = vrot.slane %v4502, 7
      %v4574 = vsel %vm1002, %v4572, %v4573
      %v4575 = vrot.slane %v4573, 4
      %v4576 = vrot.slane %v4503, 7
      %v4577 = vrot.slane %v4576, 4
      %v4578 = vrot.slane %v4504, 7
      %v4579 = vsel %vm1002, %v4577, %v4578
      %v4580 = vrot.slane %v4578, 4
      %v4581 = vrot.slane %v4505, 7
      %v4582 = vrot.slane %v4581, 4
      %v4583 = vrot.slane %v4506, 7
      %v4584 = vsel %vm1002, %v4582, %v4583
      %v4585 = vrot.slane %v4583, 4
      %v4586 = vrot.slane %v4507, 7
      %v4587 = vrot.slane %v4586, 4
      %v4588 = vrot.slane %v4508, 7
      %v4589 = vsel %vm1002, %v4587, %v4588
      %v4590 = vrot.slane %v4588, 4
      %v4591 = vrot.slane %v4509, 7
      %v4592 = vrot.slane %v4591, 4
      %v4593 = vrot.slane %v4510, 7
      %v4594 = vsel %vm1002, %v4592, %v4593
      %v4595 = vrot.slane %v4593, 4
      %v4596 = vrot.slane %v4511, 7
      %v4597 = vrot.slane %v4596, 4
      %v4598 = vrot.slane %v4512, 7
      %v4599 = vsel %vm1002, %v4597, %v4598
      %v4600 = vrot.slane %v4598, 4
      %v4601 = vrot.slane %v4513, 7
      %v4602 = vrot.slane %v4601, 4
      %v4603 = vrot.slane %v4514, 7
      %v4604 = vsel %vm1002, %v4602, %v4603
      %v4605 = vrot.slane %v4603, 4
      %v4606 = vrot.slane %v4515, 7
      %v4607 = vrot.slane %v4606, 4
      %v4608 = vrot.slane %v4516, 7
      %v4609 = vsel %vm1002, %v4607, %v4608
      %v4610 = vrot.slane %v4608, 4
      %v4611 = vrot.slane %v4517, 7
      %v4612 = vrot.slane %v4611, 4
      %v4613 = vrot.slane %v4518, 7
      %v4614 = vsel %vm1002, %v4612, %v4613
      %v4615 = vrot.slane %v4613, 4
      %v4616 = vrot.slane %v4519, 7
      %v4617 = vrot.slane %v4616, 4
      %v4618 = vrot.slane %v4520, 7
      %v4619 = vsel %vm1002, %v4617, %v4618
      %v4620 = vrot.slane %v4618, 4
      %v4621 = vrot.slane %v4521, 7
      %v4622 = vrot.slane %v4621, 4
      %v4623 = vrot.slane %v4522, 7
      %v4624 = vsel %vm1002, %v4622, %v4623
      %v4625 = vrot.slane %v4623, 4
      %v4626 = vrot.slane %v4523, 7
      %v4627 = vrot.slane %v4626, 4
      %v4628 = vrot.slane %v4524, 7
      %v4629 = vsel %vm1002, %v4627, %v4628
      %v4630 = vrot.slane %v4628, 4
      %v4631 = vrot.slane %v4525, 7
      %v4632 = vrot.slane %v4631, 4
      %v4633 = vrot.slane %v4526, 7
      %v4634 = vsel %vm1002, %v4632, %v4633
      %v4635 = vrot.slane %v4633, 4
      %v4636 = vrot.slane %v4527, 7
      %v4637 = vrot.slane %v4636, 4
      %v4638 = vrot.slane %v4528, 7
      %v4639 = vsel %vm1002, %v4637, %v4638
      %v4640 = vrot.slane %v4638, 4
      %4689 = vst.msk [vmem:[%s1131] sm:$0xe] %vm1132, %v4561
      %4690 = vst.msk [vmem:[%s1131 + $0x4] sm:$0xf] %vm863, %v4564
      %4691 = vst.msk [vmem:[%s1131 + $0x8] sm:$0x1] %vm878, %v4565
      %4692 = vst.msk [vmem:[%s1131 + $0xc] sm:$0xe] %vm1132, %v4566
      %4693 = vst.msk [vmem:[%s1131 + $0x10] sm:$0xf] %vm863, %v4569
      %4694 = vst.msk [vmem:[%s1131 + $0x14] sm:$0x1] %vm878, %v4570
      %4695 = vst.msk [vmem:[%s1131 + $0x18] sm:$0xe] %vm1132, %v4571
      %4696 = vst.msk [vmem:[%s1131 + $0x1c] sm:$0xf] %vm863, %v4574
      %4697 = vst.msk [vmem:[%s1131 + $0x20] sm:$0x1] %vm878, %v4575
      %4698 = vst.msk [vmem:[%s1131 + $0x24] sm:$0xe] %vm1132, %v4576
      %4699 = vst.msk [vmem:[%s1131 + $0x28] sm:$0xf] %vm863, %v4579
      %4700 = vst.msk [vmem:[%s1131 + $0x2c] sm:$0x1] %vm878, %v4580
      %4701 = vst.msk [vmem:[%s1131 + $0x30] sm:$0xe] %vm1132, %v4581
      %4702 = vst.msk [vmem:[%s1131 + $0x34] sm:$0xf] %vm863, %v4584
      %4703 = vst.msk [vmem:[%s1131 + $0x38] sm:$0x1] %vm878, %v4585
      %4704 = vst.msk [vmem:[%s1131 + $0x3c] sm:$0xe] %vm1132, %v4586
      %4705 = vst.msk [vmem:[%s1131 + $0x40] sm:$0xf] %vm863, %v4589
      %4706 = vst.msk [vmem:[%s1131 + $0x44] sm:$0x1] %vm878, %v4590
      %4707 = vst.msk [vmem:[%s1131 + $0x48] sm:$0xe] %vm1132, %v4591
      %4708 = vst.msk [vmem:[%s1131 + $0x4c] sm:$0xf] %vm863, %v4594
      %4709 = vst.msk [vmem:[%s1131 + $0x50] sm:$0x1] %vm878, %v4595
      %4710 = vst.msk [vmem:[%s1131 + $0x54] sm:$0xe] %vm1132, %v4596
      %4711 = vst.msk [vmem:[%s1131 + $0x58] sm:$0xf] %vm863, %v4599
      %4712 = vst.msk [vmem:[%s1131 + $0x5c] sm:$0x1] %vm878, %v4600
      %4713 = vst.msk [vmem:[%s1131 + $0x60] sm:$0xe] %vm1132, %v4601
      %4714 = vst.msk [vmem:[%s1131 + $0x64] sm:$0xf] %vm863, %v4604
      %4715 = vst.msk [vmem:[%s1131 + $0x68] sm:$0x1] %vm878, %v4605
      %4716 = vst.msk [vmem:[%s1131 + $0x6c] sm:$0xe] %vm1132, %v4606
      %4717 = vst.msk [vmem:[%s1131 + $0x70] sm:$0xf] %vm863, %v4609
      %4718 = vst.msk [vmem:[%s1131 + $0x74] sm:$0x1] %vm878, %v4610
      %4719 = vst.msk [vmem:[%s1131 + $0x78] sm:$0xe] %vm1132, %v4611
      %4720 = vst.msk [vmem:[%s1131 + $0x7c] sm:$0xf] %vm863, %v4614
      %4721 = vst.msk [vmem:[%s1131 + $0x80] sm:$0x1] %vm878, %v4615
      %4722 = vst.msk [vmem:[%s1131 + $0x84] sm:$0xe] %vm1132, %v4616
      %4723 = vst.msk [vmem:[%s1131 + $0x88] sm:$0xf] %vm863, %v4619
      %4724 = vst.msk [vmem:[%s1131 + $0x8c] sm:$0x1] %vm878, %v4620
      %4725 = vst.msk [vmem:[%s1131 + $0x90] sm:$0xe] %vm1132, %v4621
      %4726 = vst.msk [vmem:[%s1131 + $0x94] sm:$0xf] %vm863, %v4624
      %4727 = vst.msk [vmem:[%s1131 + $0x98] sm:$0x1] %vm878, %v4625
      %4728 = vst.msk [vmem:[%s1131 + $0x9c] sm:$0xe] %vm1132, %v4626
      %4729 = vst.msk [vmem:[%s1131 + $0xa0] sm:$0xf] %vm863, %v4629
      %4730 = vst.msk [vmem:[%s1131 + $0xa4] sm:$0x1] %vm878, %v4630
      %4731 = vst.msk [vmem:[%s1131 + $0xa8] sm:$0xe] %vm1132, %v4631
      %4732 = vst.msk [vmem:[%s1131 + $0xac] sm:$0xf] %vm863, %v4634
      %4733 = vst.msk [vmem:[%s1131 + $0xb0] sm:$0x1] %vm878, %v4635
      %4734 = vst.msk [vmem:[%s1131 + $0xb4] sm:$0xe] %vm1132, %v4636
      %4735 = vst.msk [vmem:[%s1131 + $0xb8] sm:$0xf] %vm863, %v4639
      %4736 = vst.msk [vmem:[%s1131 + $0xbc] sm:$0x1] %vm878, %v4640
      %v4737 = vld [vmem:[%s1184] sm:$0xe]
      %v4738 = vld [vmem:[%s1184 + $0x4] sm:$0xf]
      %v4739 = vld [vmem:[%s1184 + $0x8] sm:$0x1]
      %v4740 = vld [vmem:[%s1184 + $0xc] sm:$0xe]
      %v4741 = vld [vmem:[%s1184 + $0x10] sm:$0xf]
      %v4742 = vld [vmem:[%s1184 + $0x14] sm:$0x1]
      %v4743 = vld [vmem:[%s1184 + $0x18] sm:$0xe]
      %v4744 = vld [vmem:[%s1184 + $0x1c] sm:$0xf]
      %v4745 = vld [vmem:[%s1184 + $0x20] sm:$0x1]
      %v4746 = vld [vmem:[%s1184 + $0x24] sm:$0xe]
      %v4747 = vld [vmem:[%s1184 + $0x28] sm:$0xf]
      %v4748 = vld [vmem:[%s1184 + $0x2c] sm:$0x1]
      %v4761 = vrot.slane %v4737, 5
      %v4762 = vrot.slane %v4761, 4
      %v4763 = vrot.slane %v4738, 5
      %v4764 = vsel %vm1211, %v4762, %v4763
      %v4765 = vrot.slane %v4763, 4
      %v4766 = vrot.slane %v4739, 5
      %v4767 = vsel %vm1211, %v4765, %v4766
      %v4768 = vrot.slane %v4740, 5
      %v4769 = vrot.slane %v4768, 4
      %v4770 = vrot.slane %v4741, 5
      %v4771 = vsel %vm1211, %v4769, %v4770
      %v4772 = vrot.slane %v4770, 4
      %v4773 = vrot.slane %v4742, 5
      %v4774 = vsel %vm1211, %v4772, %v4773
      %v4775 = vrot.slane %v4743, 5
      %v4776 = vrot.slane %v4775, 4
      %v4777 = vrot.slane %v4744, 5
      %v4778 = vsel %vm1211, %v4776, %v4777
      %v4779 = vrot.slane %v4777, 4
      %v4780 = vrot.slane %v4745, 5
      %v4781 = vsel %vm1211, %v4779, %v4780
      %v4782 = vrot.slane %v4746, 5
      %v4783 = vrot.slane %v4782, 4
      %v4784 = vrot.slane %v4747, 5
      %v4785 = vsel %vm1211, %v4783, %v4784
      %v4786 = vrot.slane %v4784, 4
      %v4787 = vrot.slane %v4748, 5
      %v4788 = vsel %vm1211, %v4786, %v4787
      %s4789 = scalar_lea.vmem %s3, 32
      %v4790 = vld [vmem:[%s4789] sm:$0xf]
      %v4791 = vld [vmem:[%s4789 + $0x4] sm:$0xf]
      %v4792 = vld [vmem:[%s4789 + $0x8] sm:$0xf]
      %v4793 = vld [vmem:[%s4789 + $0xc] sm:$0xf]
      %v4794 = vunpack.c.l.b16 %v4764
      %v4795 = vunpack.c.l.b16 %v4767
      %v4796 = vunpack.c.l.b16 %v4771
      %v4797 = vunpack.c.l.b16 %v4774
      %v4798 = vunpack.c.l.b16 %v4778
      %v4799 = vunpack.c.l.b16 %v4781
      %v4800 = vunpack.c.l.b16 %v4785
      %v4801 = vunpack.c.l.b16 %v4788
      %v4802 = vpack.c.b16 %v4795, %v4794
      %v4803 = vpack.c.b16 %v4797, %v4796
      %v4804 = vpack.c.b16 %v4799, %v4798
      %v4805 = vpack.c.b16 %v4801, %v4800
      %v4810 = vunpack.c.l.b16 %v4790
      %v4811 = vunpack.c.l.b16 %v4791
      %v4812 = vunpack.c.l.b16 %v4792
      %v4813 = vunpack.c.l.b16 %v4793
      %v4814 = vpack.c.b16 %v4811, %v4810
      %v4815 = vpack.c.b16 %v4813, %v4812
      %v4819 = vsel %vm2946, %v4802, 0
      %v4822 = vsel %vm2946, %v4803, 0
      %v4825 = vsel %vm2946, %v4804, 0
      %v4828 = vsel %vm2946, %v4805, 0
      %4830 = vmatprep.subr.bf16.mxu0 0
      %4831 = vmatpush1.bf16.msra.mxu0 %v4814
      %4832 = vmatprep.subr.bf16.mxu0 0
      %4833 = vmatpush1.bf16.msra.mxu0 %v4815
      %4834 = vmatprep.subr.bf16.mxu0 0
      %4835 = vmatpush1.bf16.msra.mxu0 0
      %4836 = vmatprep.subr.bf16.mxu0 0
      %4837 = vmatpush1.bf16.msra.mxu0 0
      %4838 = vmatprep.subr.bf16.mxu0 0
      %4839 = vmatpush1.bf16.msra.mxu0 0
      %4840 = vmatprep.subr.bf16.mxu0 0
      %4841 = vmatpush1.bf16.msra.mxu0 0
      %4842 = vmatprep.subr.bf16.mxu0 0
      %4843 = vmatpush1.bf16.msra.mxu0 0
      %4844 = vmatprep.subr.bf16.mxu0 0
      %4845 = vmatpush1.bf16.msra.mxu0 0
      %4846 = vmatprep.subr.bf16.mxu0 0
      %4847 = vmatpush1.bf16.msra.mxu0 0
      %4848 = vmatprep.subr.bf16.mxu0 0
      %4849 = vmatpush1.bf16.msra.mxu0 0
      %4850 = vmatprep.subr.bf16.mxu0 0
      %4851 = vmatpush1.bf16.msra.mxu0 0
      %4852 = vmatprep.subr.bf16.mxu0 0
      %4853 = vmatpush1.bf16.msra.mxu0 0
      %4854 = vmatprep.subr.bf16.mxu0 0
      %4855 = vmatpush1.bf16.msra.mxu0 0
      %4856 = vmatprep.subr.bf16.mxu0 0
      %4857 = vmatpush1.bf16.msra.mxu0 0
      %4858 = vmatprep.subr.bf16.mxu0 0
      %4859 = vmatpush1.bf16.msra.mxu0 0
      %4860 = vmatprep.subr.bf16.mxu0 0
      %4861 = vmatpush1.bf16.msra.mxu0 0
      %4862 = vmatprep.mubr.bf16.mxu0 0
      %4863 = vmatmul.mubr.bf16.gmra.mrb[0].mxu0 %v4819
      %v4864 = vpop.f32.mrb[0].mxu0
      %v4865 = vadd.f32 0.0, %v4864
      %v4866 = vpop.f32.mrb[0].mxu0
      %v4867 = vpop.f32.mrb[0].mxu0
      %v4868 = vadd.f32 0.0, %v4867
      %v4869 = vpop.f32.mrb[0].mxu0
      %4870 = vmatprep.mubr.bf16.mxu0 0
      %4871 = vmatmul.mubr.bf16.gmra.mrb[0].mxu0 %v4822
      %v4872 = vpop.f32.mrb[0].mxu0
      %v4873 = vadd.f32 0.0, %v4872
      %v4874 = vpop.f32.mrb[0].mxu0
      %v4875 = vpop.f32.mrb[0].mxu0
      %v4876 = vadd.f32 0.0, %v4875
      %v4877 = vpop.f32.mrb[0].mxu0
      %4878 = vmatprep.mubr.bf16.mxu0 0
      %4879 = vmatmul.mubr.bf16.gmra.mrb[0].mxu0 %v4825
      %v4880 = vpop.f32.mrb[0].mxu0
      %v4881 = vadd.f32 0.0, %v4880
      %v4882 = vpop.f32.mrb[0].mxu0
      %v4883 = vpop.f32.mrb[0].mxu0
      %v4884 = vadd.f32 0.0, %v4883
      %v4885 = vpop.f32.mrb[0].mxu0
      %4886 = vmatprep.mubr.bf16.mxu0 0
      %4887 = vmatmul.mubr.bf16.gmra.mrb[0].mxu0 %v4828
      %v4888 = vpop.f32.mrb[0].mxu0
      %v4889 = vadd.f32 0.0, %v4888
      %v4890 = vpop.f32.mrb[0].mxu0
      %v4891 = vpop.f32.mrb[0].mxu0
      %v4892 = vadd.f32 0.0, %v4891
      %v4893 = vpop.f32.mrb[0].mxu0
      %4894 = vdwg.mxu0
      %v4895 = vadd.f32 %v3095, %v4865
      %v4896 = vadd.f32 %v3098, %v4868
      %v4897 = vadd.f32 %v3103, %v4873
      %v4898 = vadd.f32 %v3106, %v4876
      %v4899 = vadd.f32 %v3111, %v4881
      %v4900 = vadd.f32 %v3114, %v4884
      %v4901 = vadd.f32 %v3119, %v4889
      %v4902 = vadd.f32 %v3122, %v4892
      %v4903 = vld [vmem:[#allocation2] sm:$0xf]
      %v4904 = vld [vmem:[#allocation2 + $0x4] sm:$0xf]
      %v4905 = vld [vmem:[#allocation2 + $0x8] sm:$0x3]
      %v4906 = vld [vmem:[#allocation2 + $0xc] sm:$0xf]
      %v4907 = vld [vmem:[#allocation2 + $0x10] sm:$0xf]
      %v4908 = vld [vmem:[#allocation2 + $0x14] sm:$0x3]
      %v4909 = vld [vmem:[#allocation2 + $0x18] sm:$0xf]
      %v4910 = vld [vmem:[#allocation2 + $0x1c] sm:$0xf]
      %v4911 = vld [vmem:[#allocation2 + $0x20] sm:$0x3]
      %v4912 = vld [vmem:[#allocation2 + $0x24] sm:$0xf]
      %v4913 = vld [vmem:[#allocation2 + $0x28] sm:$0xf]
      %v4914 = vld [vmem:[#allocation2 + $0x2c] sm:$0x3]
      %v4915 = vld [vmem:[#allocation2 + $0x30] sm:$0xf]
      %v4916 = vld [vmem:[#allocation2 + $0x34] sm:$0xf]
      %v4917 = vld [vmem:[#allocation2 + $0x38] sm:$0x3]
      %v4918 = vld [vmem:[#allocation2 + $0x3c] sm:$0xf]
      %v4919 = vld [vmem:[#allocation2 + $0x40] sm:$0xf]
      %v4920 = vld [vmem:[#allocation2 + $0x44] sm:$0x3]
      %v4921 = vld [vmem:[#allocation2 + $0x48] sm:$0xf]
      %v4922 = vld [vmem:[#allocation2 + $0x4c] sm:$0xf]
      %v4923 = vld [vmem:[#allocation2 + $0x50] sm:$0x3]
      %v4924 = vld [vmem:[#allocation2 + $0x54] sm:$0xf]
      %v4925 = vld [vmem:[#allocation2 + $0x58] sm:$0xf]
      %v4926 = vld [vmem:[#allocation2 + $0x5c] sm:$0x3]
      %v4927 = vld [vmem:[#allocation2 + $0x60] sm:$0xf]
      %v4928 = vld [vmem:[#allocation2 + $0x64] sm:$0xf]
      %v4929 = vld [vmem:[#allocation2 + $0x68] sm:$0x3]
      %v4930 = vld [vmem:[#allocation2 + $0x6c] sm:$0xf]
      %v4931 = vld [vmem:[#allocation2 + $0x70] sm:$0xf]
      %v4932 = vld [vmem:[#allocation2 + $0x74] sm:$0x3]
      %v4933 = vld [vmem:[#allocation2 + $0x78] sm:$0xf]
      %v4934 = vld [vmem:[#allocation2 + $0x7c] sm:$0xf]
      %v4935 = vld [vmem:[#allocation2 + $0x80] sm:$0x3]
      %v4936 = vld [vmem:[#allocation2 + $0x84] sm:$0xf]
      %v4937 = vld [vmem:[#allocation2 + $0x88] sm:$0xf]
      %v4938 = vld [vmem:[#allocation2 + $0x8c] sm:$0x3]
      %v4939 = vld [vmem:[#allocation2 + $0x90] sm:$0xf]
      %v4940 = vld [vmem:[#allocation2 + $0x94] sm:$0xf]
      %v4941 = vld [vmem:[#allocation2 + $0x98] sm:$0x3]
      %v4942 = vld [vmem:[#allocation2 + $0x9c] sm:$0xf]
      %v4943 = vld [vmem:[#allocation2 + $0xa0] sm:$0xf]
      %v4944 = vld [vmem:[#allocation2 + $0xa4] sm:$0x3]
      %v4945 = vld [vmem:[#allocation2 + $0xa8] sm:$0xf]
      %v4946 = vld [vmem:[#allocation2 + $0xac] sm:$0xf]
      %v4947 = vld [vmem:[#allocation2 + $0xb0] sm:$0x3]
      %v4948 = vld [vmem:[#allocation2 + $0xb4] sm:$0xf]
      %v4949 = vld [vmem:[#allocation2 + $0xb8] sm:$0xf]
      %v4950 = vld [vmem:[#allocation2 + $0xbc] sm:$0x3]
      %v4951 = vld [vmem:[#allocation2 + $0xc0] sm:$0xf]
      %v4952 = vld [vmem:[#allocation2 + $0xc4] sm:$0xf]
      %v4953 = vld [vmem:[#allocation2 + $0xc8] sm:$0x3]
      %v4954 = vld [vmem:[#allocation2 + $0xcc] sm:$0xf]
      %v4955 = vld [vmem:[#allocation2 + $0xd0] sm:$0xf]
      %v4956 = vld [vmem:[#allocation2 + $0xd4] sm:$0x3]
      %v4957 = vld [vmem:[#allocation2 + $0xd8] sm:$0xf]
      %v4958 = vld [vmem:[#allocation2 + $0xdc] sm:$0xf]
      %v4959 = vld [vmem:[#allocation2 + $0xe0] sm:$0x3]
      %v4960 = vld [vmem:[#allocation2 + $0xe4] sm:$0xf]
      %v4961 = vld [vmem:[#allocation2 + $0xe8] sm:$0xf]
      %v4962 = vld [vmem:[#allocation2 + $0xec] sm:$0x3]
      %v4963 = vmax.bf16 %v4903, %v4906
      %v4964 = vmax.bf16 %v4904, %v4907
      %v4965 = vmax.bf16 %v4905, %v4908
      %v4966 = vmax.bf16 %v4906, %v4909
      %v4967 = vmax.bf16 %v4907, %v4910
      %v4968 = vmax.bf16 %v4908, %v4911
      %v4969 = vmax.bf16 %v4909, %v4912
      %v4970 = vmax.bf16 %v4910, %v4913
      %v4971 = vmax.bf16 %v4911, %v4914
      %v4972 = vmax.bf16 %v4912, %v4915
      %v4973 = vmax.bf16 %v4913, %v4916
      %v4974 = vmax.bf16 %v4914, %v4917
      %v4975 = vmax.bf16 %v4915, %v4918
      %v4976 = vmax.bf16 %v4916, %v4919
      %v4977 = vmax.bf16 %v4917, %v4920
      %v4978 = vmax.bf16 %v4918, %v4921
      %v4979 = vmax.bf16 %v4919, %v4922
      %v4980 = vmax.bf16 %v4920, %v4923
      %v4981 = vmax.bf16 %v4921, %v4924
      %v4982 = vmax.bf16 %v4922, %v4925
      %v4983 = vmax.bf16 %v4923, %v4926
      %v4984 = vmax.bf16 %v4924, %v4927
      %v4985 = vmax.bf16 %v4925, %v4928
      %v4986 = vmax.bf16 %v4926, %v4929
      %v4987 = vmax.bf16 %v4927, %v4930
      %v4988 = vmax.bf16 %v4928, %v4931
      %v4989 = vmax.bf16 %v4929, %v4932
      %v4990 = vmax.bf16 %v4930, %v4933
      %v4991 = vmax.bf16 %v4931, %v4934
      %v4992 = vmax.bf16 %v4932, %v4935
      %v4993 = vmax.bf16 %v4933, %v4936
      %v4994 = vmax.bf16 %v4934, %v4937
      %v4995 = vmax.bf16 %v4935, %v4938
      %v4996 = vmax.bf16 %v4936, %v4939
      %v4997 = vmax.bf16 %v4937, %v4940
      %v4998 = vmax.bf16 %v4938, %v4941
      %v4999 = vmax.bf16 %v4939, %v4942
      %v5000 = vmax.bf16 %v4940, %v4943
      %v5001 = vmax.bf16 %v4941, %v4944
      %v5002 = vmax.bf16 %v4942, %v4945
      %v5003 = vmax.bf16 %v4943, %v4946
      %v5004 = vmax.bf16 %v4944, %v4947
      %v5005 = vmax.bf16 %v4945, %v4948
      %v5006 = vmax.bf16 %v4946, %v4949
      %v5007 = vmax.bf16 %v4947, %v4950
      %v5008 = vmax.bf16 %v4948, %v4951
      %v5009 = vmax.bf16 %v4949, %v4952
      %v5010 = vmax.bf16 %v4950, %v4953
      %v5011 = vmax.bf16 %v4963, %v4909
      %v5012 = vmax.bf16 %v4964, %v4910
      %v5013 = vmax.bf16 %v4965, %v4911
      %v5014 = vmax.bf16 %v4966, %v4912
      %v5015 = vmax.bf16 %v4967, %v4913
      %v5016 = vmax.bf16 %v4968, %v4914
      %v5017 = vmax.bf16 %v4969, %v4915
      %v5018 = vmax.bf16 %v4970, %v4916
      %v5019 = vmax.bf16 %v4971, %v4917
      %v5020 = vmax.bf16 %v4972, %v4918
      %v5021 = vmax.bf16 %v4973, %v4919
      %v5022 = vmax.bf16 %v4974, %v4920
      %v5023 = vmax.bf16 %v4975, %v4921
      %v5024 = vmax.bf16 %v4976, %v4922
      %v5025 = vmax.bf16 %v4977, %v4923
      %v5026 = vmax.bf16 %v4978, %v4924
      %v5027 = vmax.bf16 %v4979, %v4925
      %v5028 = vmax.bf16 %v4980, %v4926
      %v5029 = vmax.bf16 %v4981, %v4927
      %v5030 = vmax.bf16 %v4982, %v4928
      %v5031 = vmax.bf16 %v4983, %v4929
      %v5032 = vmax.bf16 %v4984, %v4930
      %v5033 = vmax.bf16 %v4985, %v4931
      %v5034 = vmax.bf16 %v4986, %v4932
      %v5035 = vmax.bf16 %v4987, %v4933
      %v5036 = vmax.bf16 %v4988, %v4934
      %v5037 = vmax.bf16 %v4989, %v4935
      %v5038 = vmax.bf16 %v4990, %v4936
      %v5039 = vmax.bf16 %v4991, %v4937
      %v5040 = vmax.bf16 %v4992, %v4938
      %v5041 = vmax.bf16 %v4993, %v4939
      %v5042 = vmax.bf16 %v4994, %v4940
      %v5043 = vmax.bf16 %v4995, %v4941
      %v5044 = vmax.bf16 %v4996, %v4942
      %v5045 = vmax.bf16 %v4997, %v4943
      %v5046 = vmax.bf16 %v4998, %v4944
      %v5047 = vmax.bf16 %v4999, %v4945
      %v5048 = vmax.bf16 %v5000, %v4946
      %v5049 = vmax.bf16 %v5001, %v4947
      %v5050 = vmax.bf16 %v5002, %v4948
      %v5051 = vmax.bf16 %v5003, %v4949
      %v5052 = vmax.bf16 %v5004, %v4950
      %v5053 = vmax.bf16 %v5005, %v4951
      %v5054 = vmax.bf16 %v5006, %v4952
      %v5055 = vmax.bf16 %v5007, %v4953
      %v5056 = vmax.bf16 %v5008, %v4954
      %v5057 = vmax.bf16 %v5009, %v4955
      %v5058 = vmax.bf16 %v5010, %v4956
      %v5059 = vmax.bf16 %v5011, %v4912
      %v5060 = vmax.bf16 %v5012, %v4913
      %v5061 = vmax.bf16 %v5013, %v4914
      %v5062 = vmax.bf16 %v5014, %v4915
      %v5063 = vmax.bf16 %v5015, %v4916
      %v5064 = vmax.bf16 %v5016, %v4917
      %v5065 = vmax.bf16 %v5017, %v4918
      %v5066 = vmax.bf16 %v5018, %v4919
      %v5067 = vmax.bf16 %v5019, %v4920
      %v5068 = vmax.bf16 %v5020, %v4921
      %v5069 = vmax.bf16 %v5021, %v4922
      %v5070 = vmax.bf16 %v5022, %v4923
      %v5071 = vmax.bf16 %v5023, %v4924
      %v5072 = vmax.bf16 %v5024, %v4925
      %v5073 = vmax.bf16 %v5025, %v4926
      %v5074 = vmax.bf16 %v5026, %v4927
      %v5075 = vmax.bf16 %v5027, %v4928
      %v5076 = vmax.bf16 %v5028, %v4929
      %v5077 = vmax.bf16 %v5029, %v4930
      %v5078 = vmax.bf16 %v5030, %v4931
      %v5079 = vmax.bf16 %v5031, %v4932
      %v5080 = vmax.bf16 %v5032, %v4933
      %v5081 = vmax.bf16 %v5033, %v4934
      %v5082 = vmax.bf16 %v5034, %v4935
      %v5083 = vmax.bf16 %v5035, %v4936
      %v5084 = vmax.bf16 %v5036, %v4937
      %v5085 = vmax.bf16 %v5037, %v4938
      %v5086 = vmax.bf16 %v5038, %v4939
      %v5087 = vmax.bf16 %v5039, %v4940
      %v5088 = vmax.bf16 %v5040, %v4941
      %v5089 = vmax.bf16 %v5041, %v4942
      %v5090 = vmax.bf16 %v5042, %v4943
      %v5091 = vmax.bf16 %v5043, %v4944
      %v5092 = vmax.bf16 %v5044, %v4945
      %v5093 = vmax.bf16 %v5045, %v4946
      %v5094 = vmax.bf16 %v5046, %v4947
      %v5095 = vmax.bf16 %v5047, %v4948
      %v5096 = vmax.bf16 %v5048, %v4949
      %v5097 = vmax.bf16 %v5049, %v4950
      %v5098 = vmax.bf16 %v5050, %v4951
      %v5099 = vmax.bf16 %v5051, %v4952
      %v5100 = vmax.bf16 %v5052, %v4953
      %v5101 = vmax.bf16 %v5053, %v4954
      %v5102 = vmax.bf16 %v5054, %v4955
      %v5103 = vmax.bf16 %v5055, %v4956
      %v5104 = vmax.bf16 %v5056, %v4957
      %v5105 = vmax.bf16 %v5057, %v4958
      %v5106 = vmax.bf16 %v5058, %v4959
      %v5107 = vmax.bf16 %v5059, %v4915
      %v5108 = vmax.bf16 %v5060, %v4916
      %v5109 = vmax.bf16 %v5061, %v4917
      %v5110 = vmax.bf16 %v5062, %v4918
      %v5111 = vmax.bf16 %v5063, %v4919
      %v5112 = vmax.bf16 %v5064, %v4920
      %v5113 = vmax.bf16 %v5065, %v4921
      %v5114 = vmax.bf16 %v5066, %v4922
      %v5115 = vmax.bf16 %v5067, %v4923
      %v5116 = vmax.bf16 %v5068, %v4924
      %v5117 = vmax.bf16 %v5069, %v4925
      %v5118 = vmax.bf16 %v5070, %v4926
      %v5119 = vmax.bf16 %v5071, %v4927
      %v5120 = vmax.bf16 %v5072, %v4928
      %v5121 = vmax.bf16 %v5073, %v4929
      %v5122 = vmax.bf16 %v5074, %v4930
      %v5123 = vmax.bf16 %v5075, %v4931
      %v5124 = vmax.bf16 %v5076, %v4932
      %v5125 = vmax.bf16 %v5077, %v4933
      %v5126 = vmax.bf16 %v5078, %v4934
      %v5127 = vmax.bf16 %v5079, %v4935
      %v5128 = vmax.bf16 %v5080, %v4936
      %v5129 = vmax.bf16 %v5081, %v4937
      %v5130 = vmax.bf16 %v5082, %v4938
      %v5131 = vmax.bf16 %v5083, %v4939
      %v5132 = vmax.bf16 %v5084, %v4940
      %v5133 = vmax.bf16 %v5085, %v4941
      %v5134 = vmax.bf16 %v5086, %v4942
      %v5135 = vmax.bf16 %v5087, %v4943
      %v5136 = vmax.bf16 %v5088, %v4944
      %v5137 = vmax.bf16 %v5089, %v4945
      %v5138 = vmax.bf16 %v5090, %v4946
      %v5139 = vmax.bf16 %v5091, %v4947
      %v5140 = vmax.bf16 %v5092, %v4948
      %v5141 = vmax.bf16 %v5093, %v4949
      %v5142 = vmax.bf16 %v5094, %v4950
      %v5143 = vmax.bf16 %v5095, %v4951
      %v5144 = vmax.bf16 %v5096, %v4952
      %v5145 = vmax.bf16 %v5097, %v4953
      %v5146 = vmax.bf16 %v5098, %v4954
      %v5147 = vmax.bf16 %v5099, %v4955
      %v5148 = vmax.bf16 %v5100, %v4956
      %v5149 = vmax.bf16 %v5101, %v4957
      %v5150 = vmax.bf16 %v5102, %v4958
      %v5151 = vmax.bf16 %v5103, %v4959
      %v5152 = vmax.bf16 %v5104, %v4960
      %v5153 = vmax.bf16 %v5105, %v4961
      %v5154 = vmax.bf16 %v5106, %v4962
      %v5156 = vshrl.u32 %v5107, 16
      %v5158 = vrot.slane %v5156, 4
      %v5159 = vshll.u32 %v5107, 16
      %v5161 = vrot.slane %v5159, 5
      %v5162 = vor.u32 %v5158, %v5161
      %v5163 = vrot.slane %v5162, 4
      %v5165 = vshll.u32 %v5108, 16
      %v5167 = vrot.slane %v5165, 5
      %v5168 = vsel %vm1498, %v5163, %v5167
      %v5169 = vshrl.u32 %v5108, 16
      %v5171 = vrot.slane %v5169, 4
      %v5172 = vor.u32 %v5171, %v5167
      %v5173 = vrot.slane %v5172, 4
      %v5175 = vshll.u32 %v5109, 16
      %v5177 = vrot.slane %v5175, 5
      %v5178 = vsel %vm1498, %v5173, %v5177
      %v5180 = vshrl.u32 %v5110, 16
      %v5182 = vrot.slane %v5180, 4
      %v5183 = vshll.u32 %v5110, 16
      %v5185 = vrot.slane %v5183, 5
      %v5186 = vor.u32 %v5182, %v5185
      %v5187 = vrot.slane %v5186, 4
      %v5189 = vshll.u32 %v5111, 16
      %v5191 = vrot.slane %v5189, 5
      %v5192 = vsel %vm1498, %v5187, %v5191
      %v5193 = vshrl.u32 %v5111, 16
      %v5195 = vrot.slane %v5193, 4
      %v5196 = vor.u32 %v5195, %v5191
      %v5197 = vrot.slane %v5196, 4
      %v5199 = vshll.u32 %v5112, 16
      %v5201 = vrot.slane %v5199, 5
      %v5202 = vsel %vm1498, %v5197, %v5201
      %v5204 = vshrl.u32 %v5113, 16
      %v5206 = vrot.slane %v5204, 4
      %v5207 = vshll.u32 %v5113, 16
      %v5209 = vrot.slane %v5207, 5
      %v5210 = vor.u32 %v5206, %v5209
      %v5211 = vrot.slane %v5210, 4
      %v5213 = vshll.u32 %v5114, 16
      %v5215 = vrot.slane %v5213, 5
      %v5216 = vsel %vm1498, %v5211, %v5215
      %v5217 = vshrl.u32 %v5114, 16
      %v5219 = vrot.slane %v5217, 4
      %v5220 = vor.u32 %v5219, %v5215
      %v5221 = vrot.slane %v5220, 4
      %v5223 = vshll.u32 %v5115, 16
      %v5225 = vrot.slane %v5223, 5
      %v5226 = vsel %vm1498, %v5221, %v5225
      %v5228 = vshrl.u32 %v5116, 16
      %v5230 = vrot.slane %v5228, 4
      %v5231 = vshll.u32 %v5116, 16
      %v5233 = vrot.slane %v5231, 5
      %v5234 = vor.u32 %v5230, %v5233
      %v5235 = vrot.slane %v5234, 4
      %v5237 = vshll.u32 %v5117, 16
      %v5239 = vrot.slane %v5237, 5
      %v5240 = vsel %vm1498, %v5235, %v5239
      %v5241 = vshrl.u32 %v5117, 16
      %v5243 = vrot.slane %v5241, 4
      %v5244 = vor.u32 %v5243, %v5239
      %v5245 = vrot.slane %v5244, 4
      %v5247 = vshll.u32 %v5118, 16
      %v5249 = vrot.slane %v5247, 5
      %v5250 = vsel %vm1498, %v5245, %v5249
      %v5252 = vshrl.u32 %v5119, 16
      %v5254 = vrot.slane %v5252, 4
      %v5255 = vshll.u32 %v5119, 16
      %v5257 = vrot.slane %v5255, 5
      %v5258 = vor.u32 %v5254, %v5257
      %v5259 = vrot.slane %v5258, 4
      %v5261 = vshll.u32 %v5120, 16
      %v5263 = vrot.slane %v5261, 5
      %v5264 = vsel %vm1498, %v5259, %v5263
      %v5265 = vshrl.u32 %v5120, 16
      %v5267 = vrot.slane %v5265, 4
      %v5268 = vor.u32 %v5267, %v5263
      %v5269 = vrot.slane %v5268, 4
      %v5271 = vshll.u32 %v5121, 16
      %v5273 = vrot.slane %v5271, 5
      %v5274 = vsel %vm1498, %v5269, %v5273
      %v5276 = vshrl.u32 %v5122, 16
      %v5278 = vrot.slane %v5276, 4
      %v5279 = vshll.u32 %v5122, 16
      %v5281 = vrot.slane %v5279, 5
      %v5282 = vor.u32 %v5278, %v5281
      %v5283 = vrot.slane %v5282, 4
      %v5285 = vshll.u32 %v5123, 16
      %v5287 = vrot.slane %v5285, 5
      %v5288 = vsel %vm1498, %v5283, %v5287
      %v5289 = vshrl.u32 %v5123, 16
      %v5291 = vrot.slane %v5289, 4
      %v5292 = vor.u32 %v5291, %v5287
      %v5293 = vrot.slane %v5292, 4
      %v5295 = vshll.u32 %v5124, 16
      %v5297 = vrot.slane %v5295, 5
      %v5298 = vsel %vm1498, %v5293, %v5297
      %v5300 = vshrl.u32 %v5125, 16
      %v5302 = vrot.slane %v5300, 4
      %v5303 = vshll.u32 %v5125, 16
      %v5305 = vrot.slane %v5303, 5
      %v5306 = vor.u32 %v5302, %v5305
      %v5307 = vrot.slane %v5306, 4
      %v5309 = vshll.u32 %v5126, 16
      %v5311 = vrot.slane %v5309, 5
      %v5312 = vsel %vm1498, %v5307, %v5311
      %v5313 = vshrl.u32 %v5126, 16
      %v5315 = vrot.slane %v5313, 4
      %v5316 = vor.u32 %v5315, %v5311
      %v5317 = vrot.slane %v5316, 4
      %v5319 = vshll.u32 %v5127, 16
      %v5321 = vrot.slane %v5319, 5
      %v5322 = vsel %vm1498, %v5317, %v5321
      %v5324 = vshrl.u32 %v5128, 16
      %v5326 = vrot.slane %v5324, 4
      %v5327 = vshll.u32 %v5128, 16
      %v5329 = vrot.slane %v5327, 5
      %v5330 = vor.u32 %v5326, %v5329
      %v5331 = vrot.slane %v5330, 4
      %v5333 = vshll.u32 %v5129, 16
      %v5335 = vrot.slane %v5333, 5
      %v5336 = vsel %vm1498, %v5331, %v5335
      %v5337 = vshrl.u32 %v5129, 16
      %v5339 = vrot.slane %v5337, 4
      %v5340 = vor.u32 %v5339, %v5335
      %v5341 = vrot.slane %v5340, 4
      %v5343 = vshll.u32 %v5130, 16
      %v5345 = vrot.slane %v5343, 5
      %v5346 = vsel %vm1498, %v5341, %v5345
      %v5348 = vshrl.u32 %v5131, 16
      %v5350 = vrot.slane %v5348, 4
      %v5351 = vshll.u32 %v5131, 16
      %v5353 = vrot.slane %v5351, 5
      %v5354 = vor.u32 %v5350, %v5353
      %v5355 = vrot.slane %v5354, 4
      %v5357 = vshll.u32 %v5132, 16
      %v5359 = vrot.slane %v5357, 5
      %v5360 = vsel %vm1498, %v5355, %v5359
      %v5361 = vshrl.u32 %v5132, 16
      %v5363 = vrot.slane %v5361, 4
      %v5364 = vor.u32 %v5363, %v5359
      %v5365 = vrot.slane %v5364, 4
      %v5367 = vshll.u32 %v5133, 16
      %v5369 = vrot.slane %v5367, 5
      %v5370 = vsel %vm1498, %v5365, %v5369
      %v5372 = vshrl.u32 %v5134, 16
      %v5374 = vrot.slane %v5372, 4
      %v5375 = vshll.u32 %v5134, 16
      %v5377 = vrot.slane %v5375, 5
      %v5378 = vor.u32 %v5374, %v5377
      %v5379 = vrot.slane %v5378, 4
      %v5381 = vshll.u32 %v5135, 16
      %v5383 = vrot.slane %v5381, 5
      %v5384 = vsel %vm1498, %v5379, %v5383
      %v5385 = vshrl.u32 %v5135, 16
      %v5387 = vrot.slane %v5385, 4
      %v5388 = vor.u32 %v5387, %v5383
      %v5389 = vrot.slane %v5388, 4
      %v5391 = vshll.u32 %v5136, 16
      %v5393 = vrot.slane %v5391, 5
      %v5394 = vsel %vm1498, %v5389, %v5393
      %v5396 = vshrl.u32 %v5137, 16
      %v5398 = vrot.slane %v5396, 4
      %v5399 = vshll.u32 %v5137, 16
      %v5401 = vrot.slane %v5399, 5
      %v5402 = vor.u32 %v5398, %v5401
      %v5403 = vrot.slane %v5402, 4
      %v5405 = vshll.u32 %v5138, 16
      %v5407 = vrot.slane %v5405, 5
      %v5408 = vsel %vm1498, %v5403, %v5407
      %v5409 = vshrl.u32 %v5138, 16
      %v5411 = vrot.slane %v5409, 4
      %v5412 = vor.u32 %v5411, %v5407
      %v5413 = vrot.slane %v5412, 4
      %v5415 = vshll.u32 %v5139, 16
      %v5417 = vrot.slane %v5415, 5
      %v5418 = vsel %vm1498, %v5413, %v5417
      %v5420 = vshrl.u32 %v5140, 16
      %v5422 = vrot.slane %v5420, 4
      %v5423 = vshll.u32 %v5140, 16
      %v5425 = vrot.slane %v5423, 5
      %v5426 = vor.u32 %v5422, %v5425
      %v5427 = vrot.slane %v5426, 4
      %v5429 = vshll.u32 %v5141, 16
      %v5431 = vrot.slane %v5429, 5
      %v5432 = vsel %vm1498, %v5427, %v5431
      %v5433 = vshrl.u32 %v5141, 16
      %v5435 = vrot.slane %v5433, 4
      %v5436 = vor.u32 %v5435, %v5431
      %v5437 = vrot.slane %v5436, 4
      %v5439 = vshll.u32 %v5142, 16
      %v5441 = vrot.slane %v5439, 5
      %v5442 = vsel %vm1498, %v5437, %v5441
      %v5444 = vshrl.u32 %v5143, 16
      %v5446 = vrot.slane %v5444, 4
      %v5447 = vshll.u32 %v5143, 16
      %v5449 = vrot.slane %v5447, 5
      %v5450 = vor.u32 %v5446, %v5449
      %v5451 = vrot.slane %v5450, 4
      %v5453 = vshll.u32 %v5144, 16
      %v5455 = vrot.slane %v5453, 5
      %v5456 = vsel %vm1498, %v5451, %v5455
      %v5457 = vshrl.u32 %v5144, 16
      %v5459 = vrot.slane %v5457, 4
      %v5460 = vor.u32 %v5459, %v5455
      %v5461 = vrot.slane %v5460, 4
      %v5463 = vshll.u32 %v5145, 16
      %v5465 = vrot.slane %v5463, 5
      %v5466 = vsel %vm1498, %v5461, %v5465
      %v5468 = vshrl.u32 %v5146, 16
      %v5470 = vrot.slane %v5468, 4
      %v5471 = vshll.u32 %v5146, 16
      %v5473 = vrot.slane %v5471, 5
      %v5474 = vor.u32 %v5470, %v5473
      %v5475 = vrot.slane %v5474, 4
      %v5477 = vshll.u32 %v5147, 16
      %v5479 = vrot.slane %v5477, 5
      %v5480 = vsel %vm1498, %v5475, %v5479
      %v5481 = vshrl.u32 %v5147, 16
      %v5483 = vrot.slane %v5481, 4
      %v5484 = vor.u32 %v5483, %v5479
      %v5485 = vrot.slane %v5484, 4
      %v5487 = vshll.u32 %v5148, 16
      %v5489 = vrot.slane %v5487, 5
      %v5490 = vsel %vm1498, %v5485, %v5489
      %v5492 = vshrl.u32 %v5149, 16
      %v5494 = vrot.slane %v5492, 4
      %v5495 = vshll.u32 %v5149, 16
      %v5497 = vrot.slane %v5495, 5
      %v5498 = vor.u32 %v5494, %v5497
      %v5499 = vrot.slane %v5498, 4
      %v5501 = vshll.u32 %v5150, 16
      %v5503 = vrot.slane %v5501, 5
      %v5504 = vsel %vm1498, %v5499, %v5503
      %v5505 = vshrl.u32 %v5150, 16
      %v5507 = vrot.slane %v5505, 4
      %v5508 = vor.u32 %v5507, %v5503
      %v5509 = vrot.slane %v5508, 4
      %v5511 = vshll.u32 %v5151, 16
      %v5513 = vrot.slane %v5511, 5
      %v5514 = vsel %vm1498, %v5509, %v5513
      %v5516 = vshrl.u32 %v5152, 16
      %v5518 = vrot.slane %v5516, 4
      %v5519 = vshll.u32 %v5152, 16
      %v5521 = vrot.slane %v5519, 5
      %v5522 = vor.u32 %v5518, %v5521
      %v5523 = vrot.slane %v5522, 4
      %v5525 = vshll.u32 %v5153, 16
      %v5527 = vrot.slane %v5525, 5
      %v5528 = vsel %vm1498, %v5523, %v5527
      %v5529 = vshrl.u32 %v5153, 16
      %v5531 = vrot.slane %v5529, 4
      %v5532 = vor.u32 %v5531, %v5527
      %v5533 = vrot.slane %v5532, 4
      %v5535 = vshll.u32 %v5154, 16
      %v5537 = vrot.slane %v5535, 5
      %v5538 = vsel %vm1498, %v5533, %v5537
      %v5571 = vmax.bf16 %v5107, %v5168
      %v5572 = vmax.bf16 %v5108, %v5178
      %v5573 = vmax.bf16 %v5110, %v5192
      %v5574 = vmax.bf16 %v5111, %v5202
      %v5575 = vmax.bf16 %v5113, %v5216
      %v5576 = vmax.bf16 %v5114, %v5226
      %v5577 = vmax.bf16 %v5116, %v5240
      %v5578 = vmax.bf16 %v5117, %v5250
      %v5579 = vmax.bf16 %v5119, %v5264
      %v5580 = vmax.bf16 %v5120, %v5274
      %v5581 = vmax.bf16 %v5122, %v5288
      %v5582 = vmax.bf16 %v5123, %v5298
      %v5583 = vmax.bf16 %v5125, %v5312
      %v5584 = vmax.bf16 %v5126, %v5322
      %v5585 = vmax.bf16 %v5128, %v5336
      %v5586 = vmax.bf16 %v5129, %v5346
      %v5587 = vmax.bf16 %v5131, %v5360
      %v5588 = vmax.bf16 %v5132, %v5370
      %v5589 = vmax.bf16 %v5134, %v5384
      %v5590 = vmax.bf16 %v5135, %v5394
      %v5591 = vmax.bf16 %v5137, %v5408
      %v5592 = vmax.bf16 %v5138, %v5418
      %v5593 = vmax.bf16 %v5140, %v5432
      %v5594 = vmax.bf16 %v5141, %v5442
      %v5595 = vmax.bf16 %v5143, %v5456
      %v5596 = vmax.bf16 %v5144, %v5466
      %v5597 = vmax.bf16 %v5146, %v5480
      %v5598 = vmax.bf16 %v5147, %v5490
      %v5599 = vmax.bf16 %v5149, %v5504
      %v5600 = vmax.bf16 %v5150, %v5514
      %v5601 = vmax.bf16 %v5152, %v5528
      %v5602 = vmax.bf16 %v5153, %v5538
      %v5651 = vrot.slane %v5107, 5
      %v5652 = vrot.slane %v5651, 4
      %v5653 = vrot.slane %v5108, 5
      %v5654 = vsel %vm1211, %v5652, %v5653
      %v5655 = vrot.slane %v5653, 4
      %v5656 = vrot.slane %v5109, 5
      %v5657 = vsel %vm1211, %v5655, %v5656
      %v5658 = vrot.slane %v5110, 5
      %v5659 = vrot.slane %v5658, 4
      %v5660 = vrot.slane %v5111, 5
      %v5661 = vsel %vm1211, %v5659, %v5660
      %v5662 = vrot.slane %v5660, 4
      %v5663 = vrot.slane %v5112, 5
      %v5664 = vsel %vm1211, %v5662, %v5663
      %v5665 = vrot.slane %v5113, 5
      %v5666 = vrot.slane %v5665, 4
      %v5667 = vrot.slane %v5114, 5
      %v5668 = vsel %vm1211, %v5666, %v5667
      %v5669 = vrot.slane %v5667, 4
      %v5670 = vrot.slane %v5115, 5
      %v5671 = vsel %vm1211, %v5669, %v5670
      %v5672 = vrot.slane %v5116, 5
      %v5673 = vrot.slane %v5672, 4
      %v5674 = vrot.slane %v5117, 5
      %v5675 = vsel %vm1211, %v5673, %v5674
      %v5676 = vrot.slane %v5674, 4
      %v5677 = vrot.slane %v5118, 5
      %v5678 = vsel %vm1211, %v5676, %v5677
      %v5679 = vrot.slane %v5119, 5
      %v5680 = vrot.slane %v5679, 4
      %v5681 = vrot.slane %v5120, 5
      %v5682 = vsel %vm1211, %v5680, %v5681
      %v5683 = vrot.slane %v5681, 4
      %v5684 = vrot.slane %v5121, 5
      %v5685 = vsel %vm1211, %v5683, %v5684
      %v5686 = vrot.slane %v5122, 5
      %v5687 = vrot.slane %v5686, 4
      %v5688 = vrot.slane %v5123, 5
      %v5689 = vsel %vm1211, %v5687, %v5688
      %v5690 = vrot.slane %v5688, 4
      %v5691 = vrot.slane %v5124, 5
      %v5692 = vsel %vm1211, %v5690, %v5691
      %v5693 = vrot.slane %v5125, 5
      %v5694 = vrot.slane %v5693, 4
      %v5695 = vrot.slane %v5126, 5
      %v5696 = vsel %vm1211, %v5694, %v5695
      %v5697 = vrot.slane %v5695, 4
      %v5698 = vrot.slane %v5127, 5
      %v5699 = vsel %vm1211, %v5697, %v5698
      %v5700 = vrot.slane %v5128, 5
      %v5701 = vrot.slane %v5700, 4
      %v5702 = vrot.slane %v5129, 5
      %v5703 = vsel %vm1211, %v5701, %v5702
      %v5704 = vrot.slane %v5702, 4
      %v5705 = vrot.slane %v5130, 5
      %v5706 = vsel %vm1211, %v5704, %v5705
      %v5707 = vrot.slane %v5131, 5
      %v5708 = vrot.slane %v5707, 4
      %v5709 = vrot.slane %v5132, 5
      %v5710 = vsel %vm1211, %v5708, %v5709
      %v5711 = vrot.slane %v5709, 4
      %v5712 = vrot.slane %v5133, 5
      %v5713 = vsel %vm1211, %v5711, %v5712
      %v5714 = vrot.slane %v5134, 5
      %v5715 = vrot.slane %v5714, 4
      %v5716 = vrot.slane %v5135, 5
      %v5717 = vsel %vm1211, %v5715, %v5716
      %v5718 = vrot.slane %v5716, 4
      %v5719 = vrot.slane %v5136, 5
      %v5720 = vsel %vm1211, %v5718, %v5719
      %v5721 = vrot.slane %v5137, 5
      %v5722 = vrot.slane %v5721, 4
      %v5723 = vrot.slane %v5138, 5
      %v5724 = vsel %vm1211, %v5722, %v5723
      %v5725 = vrot.slane %v5723, 4
      %v5726 = vrot.slane %v5139, 5
      %v5727 = vsel %vm1211, %v5725, %v5726
      %v5728 = vrot.slane %v5140, 5
      %v5729 = vrot.slane %v5728, 4
      %v5730 = vrot.slane %v5141, 5
      %v5731 = vsel %vm1211, %v5729, %v5730
      %v5732 = vrot.slane %v5730, 4
      %v5733 = vrot.slane %v5142, 5
      %v5734 = vsel %vm1211, %v5732, %v5733
      %v5735 = vrot.slane %v5143, 5
      %v5736 = vrot.slane %v5735, 4
      %v5737 = vrot.slane %v5144, 5
      %v5738 = vsel %vm1211, %v5736, %v5737
      %v5739 = vrot.slane %v5737, 4
      %v5740 = vrot.slane %v5145, 5
      %v5741 = vsel %vm1211, %v5739, %v5740
      %v5742 = vrot.slane %v5146, 5
      %v5743 = vrot.slane %v5742, 4
      %v5744 = vrot.slane %v5147, 5
      %v5745 = vsel %vm1211, %v5743, %v5744
      %v5746 = vrot.slane %v5744, 4
      %v5747 = vrot.slane %v5148, 5
      %v5748 = vsel %vm1211, %v5746, %v5747
      %v5749 = vrot.slane %v5149, 5
      %v5750 = vrot.slane %v5749, 4
      %v5751 = vrot.slane %v5150, 5
      %v5752 = vsel %vm1211, %v5750, %v5751
      %v5753 = vrot.slane %v5751, 4
      %v5754 = vrot.slane %v5151, 5
      %v5755 = vsel %vm1211, %v5753, %v5754
      %v5756 = vrot.slane %v5152, 5
      %v5757 = vrot.slane %v5756, 4
      %v5758 = vrot.slane %v5153, 5
      %v5759 = vsel %vm1211, %v5757, %v5758
      %v5760 = vrot.slane %v5758, 4
      %v5761 = vrot.slane %v5154, 5
      %v5762 = vsel %vm1211, %v5760, %v5761
      %v5795 = vmax.bf16 %v5571, %v5654
      %v5796 = vmax.bf16 %v5572, %v5657
      %v5797 = vmax.bf16 %v5573, %v5661
      %v5798 = vmax.bf16 %v5574, %v5664
      %v5799 = vmax.bf16 %v5575, %v5668
      %v5800 = vmax.bf16 %v5576, %v5671
      %v5801 = vmax.bf16 %v5577, %v5675
      %v5802 = vmax.bf16 %v5578, %v5678
      %v5803 = vmax.bf16 %v5579, %v5682
      %v5804 = vmax.bf16 %v5580, %v5685
      %v5805 = vmax.bf16 %v5581, %v5689
      %v5806 = vmax.bf16 %v5582, %v5692
      %v5807 = vmax.bf16 %v5583, %v5696
      %v5808 = vmax.bf16 %v5584, %v5699
      %v5809 = vmax.bf16 %v5585, %v5703
      %v5810 = vmax.bf16 %v5586, %v5706
      %v5811 = vmax.bf16 %v5587, %v5710
      %v5812 = vmax.bf16 %v5588, %v5713
      %v5813 = vmax.bf16 %v5589, %v5717
      %v5814 = vmax.bf16 %v5590, %v5720
      %v5815 = vmax.bf16 %v5591, %v5724
      %v5816 = vmax.bf16 %v5592, %v5727
      %v5817 = vmax.bf16 %v5593, %v5731
      %v5818 = vmax.bf16 %v5594, %v5734
      %v5819 = vmax.bf16 %v5595, %v5738
      %v5820 = vmax.bf16 %v5596, %v5741
      %v5821 = vmax.bf16 %v5597, %v5745
      %v5822 = vmax.bf16 %v5598, %v5748
      %v5823 = vmax.bf16 %v5599, %v5752
      %v5824 = vmax.bf16 %v5600, %v5755
      %v5825 = vmax.bf16 %v5601, %v5759
      %v5826 = vmax.bf16 %v5602, %v5762
      %v5827 = vrot.slane %v5156, 5
      %v5828 = vrot.slane %v5159, 6
      %v5829 = vor.u32 %v5827, %v5828
      %v5830 = vrot.slane %v5829, 4
      %v5831 = vrot.slane %v5169, 5
      %v5832 = vrot.slane %v5165, 6
      %v5833 = vor.u32 %v5831, %v5832
      %v5834 = vsel %vm2173, %v5830, %v5833
      %v5835 = vrot.slane %v5833, 4
      %v5836 = vshrl.u32 %v5109, 16
      %v5838 = vrot.slane %v5836, 5
      %v5839 = vrot.slane %v5175, 6
      %v5840 = vor.u32 %v5838, %v5839
      %v5841 = vsel %vm2173, %v5835, %v5840
      %v5842 = vrot.slane %v5180, 5
      %v5843 = vrot.slane %v5183, 6
      %v5844 = vor.u32 %v5842, %v5843
      %v5845 = vrot.slane %v5844, 4
      %v5846 = vrot.slane %v5193, 5
      %v5847 = vrot.slane %v5189, 6
      %v5848 = vor.u32 %v5846, %v5847
      %v5849 = vsel %vm2173, %v5845, %v5848
      %v5850 = vrot.slane %v5848, 4
      %v5851 = vshrl.u32 %v5112, 16
      %v5853 = vrot.slane %v5851, 5
      %v5854 = vrot.slane %v5199, 6
      %v5855 = vor.u32 %v5853, %v5854
      %v5856 = vsel %vm2173, %v5850, %v5855
      %v5857 = vrot.slane %v5204, 5
      %v5858 = vrot.slane %v5207, 6
      %v5859 = vor.u32 %v5857, %v5858
      %v5860 = vrot.slane %v5859, 4
      %v5861 = vrot.slane %v5217, 5
      %v5862 = vrot.slane %v5213, 6
      %v5863 = vor.u32 %v5861, %v5862
      %v5864 = vsel %vm2173, %v5860, %v5863
      %v5865 = vrot.slane %v5863, 4
      %v5866 = vshrl.u32 %v5115, 16
      %v5868 = vrot.slane %v5866, 5
      %v5869 = vrot.slane %v5223, 6
      %v5870 = vor.u32 %v5868, %v5869
      %v5871 = vsel %vm2173, %v5865, %v5870
      %v5872 = vrot.slane %v5228, 5
      %v5873 = vrot.slane %v5231, 6
      %v5874 = vor.u32 %v5872, %v5873
      %v5875 = vrot.slane %v5874, 4
      %v5876 = vrot.slane %v5241, 5
      %v5877 = vrot.slane %v5237, 6
      %v5878 = vor.u32 %v5876, %v5877
      %v5879 = vsel %vm2173, %v5875, %v5878
      %v5880 = vrot.slane %v5878, 4
      %v5881 = vshrl.u32 %v5118, 16
      %v5883 = vrot.slane %v5881, 5
      %v5884 = vrot.slane %v5247, 6
      %v5885 = vor.u32 %v5883, %v5884
      %v5886 = vsel %vm2173, %v5880, %v5885
      %v5887 = vrot.slane %v5252, 5
      %v5888 = vrot.slane %v5255, 6
      %v5889 = vor.u32 %v5887, %v5888
      %v5890 = vrot.slane %v5889, 4
      %v5891 = vrot.slane %v5265, 5
      %v5892 = vrot.slane %v5261, 6
      %v5893 = vor.u32 %v5891, %v5892
      %v5894 = vsel %vm2173, %v5890, %v5893
      %v5895 = vrot.slane %v5893, 4
      %v5896 = vshrl.u32 %v5121, 16
      %v5898 = vrot.slane %v5896, 5
      %v5899 = vrot.slane %v5271, 6
      %v5900 = vor.u32 %v5898, %v5899
      %v5901 = vsel %vm2173, %v5895, %v5900
      %v5902 = vrot.slane %v5276, 5
      %v5903 = vrot.slane %v5279, 6
      %v5904 = vor.u32 %v5902, %v5903
      %v5905 = vrot.slane %v5904, 4
      %v5906 = vrot.slane %v5289, 5
      %v5907 = vrot.slane %v5285, 6
      %v5908 = vor.u32 %v5906, %v5907
      %v5909 = vsel %vm2173, %v5905, %v5908
      %v5910 = vrot.slane %v5908, 4
      %v5911 = vshrl.u32 %v5124, 16
      %v5913 = vrot.slane %v5911, 5
      %v5914 = vrot.slane %v5295, 6
      %v5915 = vor.u32 %v5913, %v5914
      %v5916 = vsel %vm2173, %v5910, %v5915
      %v5917 = vrot.slane %v5300, 5
      %v5918 = vrot.slane %v5303, 6
      %v5919 = vor.u32 %v5917, %v5918
      %v5920 = vrot.slane %v5919, 4
      %v5921 = vrot.slane %v5313, 5
      %v5922 = vrot.slane %v5309, 6
      %v5923 = vor.u32 %v5921, %v5922
      %v5924 = vsel %vm2173, %v5920, %v5923
      %v5925 = vrot.slane %v5923, 4
      %v5926 = vshrl.u32 %v5127, 16
      %v5928 = vrot.slane %v5926, 5
      %v5929 = vrot.slane %v5319, 6
      %v5930 = vor.u32 %v5928, %v5929
      %v5931 = vsel %vm2173, %v5925, %v5930
      %v5932 = vrot.slane %v5324, 5
      %v5933 = vrot.slane %v5327, 6
      %v5934 = vor.u32 %v5932, %v5933
      %v5935 = vrot.slane %v5934, 4
      %v5936 = vrot.slane %v5337, 5
      %v5937 = vrot.slane %v5333, 6
      %v5938 = vor.u32 %v5936, %v5937
      %v5939 = vsel %vm2173, %v5935, %v5938
      %v5940 = vrot.slane %v5938, 4
      %v5941 = vshrl.u32 %v5130, 16
      %v5943 = vrot.slane %v5941, 5
      %v5944 = vrot.slane %v5343, 6
      %v5945 = vor.u32 %v5943, %v5944
      %v5946 = vsel %vm2173, %v5940, %v5945
      %v5947 = vrot.slane %v5348, 5
      %v5948 = vrot.slane %v5351, 6
      %v5949 = vor.u32 %v5947, %v5948
      %v5950 = vrot.slane %v5949, 4
      %v5951 = vrot.slane %v5361, 5
      %v5952 = vrot.slane %v5357, 6
      %v5953 = vor.u32 %v5951, %v5952
      %v5954 = vsel %vm2173, %v5950, %v5953
      %v5955 = vrot.slane %v5953, 4
      %v5956 = vshrl.u32 %v5133, 16
      %v5958 = vrot.slane %v5956, 5
      %v5959 = vrot.slane %v5367, 6
      %v5960 = vor.u32 %v5958, %v5959
      %v5961 = vsel %vm2173, %v5955, %v5960
      %v5962 = vrot.slane %v5372, 5
      %v5963 = vrot.slane %v5375, 6
      %v5964 = vor.u32 %v5962, %v5963
      %v5965 = vrot.slane %v5964, 4
      %v5966 = vrot.slane %v5385, 5
      %v5967 = vrot.slane %v5381, 6
      %v5968 = vor.u32 %v5966, %v5967
      %v5969 = vsel %vm2173, %v5965, %v5968
      %v5970 = vrot.slane %v5968, 4
      %v5971 = vshrl.u32 %v5136, 16
      %v5973 = vrot.slane %v5971, 5
      %v5974 = vrot.slane %v5391, 6
      %v5975 = vor.u32 %v5973, %v5974
      %v5976 = vsel %vm2173, %v5970, %v5975
      %v5977 = vrot.slane %v5396, 5
      %v5978 = vrot.slane %v5399, 6
      %v5979 = vor.u32 %v5977, %v5978
      %v5980 = vrot.slane %v5979, 4
      %v5981 = vrot.slane %v5409, 5
      %v5982 = vrot.slane %v5405, 6
      %v5983 = vor.u32 %v5981, %v5982
      %v5984 = vsel %vm2173, %v5980, %v5983
      %v5985 = vrot.slane %v5983, 4
      %v5986 = vshrl.u32 %v5139, 16
      %v5988 = vrot.slane %v5986, 5
      %v5989 = vrot.slane %v5415, 6
      %v5990 = vor.u32 %v5988, %v5989
      %v5991 = vsel %vm2173, %v5985, %v5990
      %v5992 = vrot.slane %v5420, 5
      %v5993 = vrot.slane %v5423, 6
      %v5994 = vor.u32 %v5992, %v5993
      %v5995 = vrot.slane %v5994, 4
      %v5996 = vrot.slane %v5433, 5
      %v5997 = vrot.slane %v5429, 6
      %v5998 = vor.u32 %v5996, %v5997
      %v5999 = vsel %vm2173, %v5995, %v5998
      %v6000 = vrot.slane %v5998, 4
      %v6001 = vshrl.u32 %v5142, 16
      %v6003 = vrot.slane %v6001, 5
      %v6004 = vrot.slane %v5439, 6
      %v6005 = vor.u32 %v6003, %v6004
      %v6006 = vsel %vm2173, %v6000, %v6005
      %v6007 = vrot.slane %v5444, 5
      %v6008 = vrot.slane %v5447, 6
      %v6009 = vor.u32 %v6007, %v6008
      %v6010 = vrot.slane %v6009, 4
      %v6011 = vrot.slane %v5457, 5
      %v6012 = vrot.slane %v5453, 6
      %v6013 = vor.u32 %v6011, %v6012
      %v6014 = vsel %vm2173, %v6010, %v6013
      %v6015 = vrot.slane %v6013, 4
      %v6016 = vshrl.u32 %v5145, 16
      %v6018 = vrot.slane %v6016, 5
      %v6019 = vrot.slane %v5463, 6
      %v6020 = vor.u32 %v6018, %v6019
      %v6021 = vsel %vm2173, %v6015, %v6020
      %v6022 = vrot.slane %v5468, 5
      %v6023 = vrot.slane %v5471, 6
      %v6024 = vor.u32 %v6022, %v6023
      %v6025 = vrot.slane %v6024, 4
      %v6026 = vrot.slane %v5481, 5
      %v6027 = vrot.slane %v5477, 6
      %v6028 = vor.u32 %v6026, %v6027
      %v6029 = vsel %vm2173, %v6025, %v6028
      %v6030 = vrot.slane %v6028, 4
      %v6031 = vshrl.u32 %v5148, 16
      %v6033 = vrot.slane %v6031, 5
      %v6034 = vrot.slane %v5487, 6
      %v6035 = vor.u32 %v6033, %v6034
      %v6036 = vsel %vm2173, %v6030, %v6035
      %v6037 = vrot.slane %v5492, 5
      %v6038 = vrot.slane %v5495, 6
      %v6039 = vor.u32 %v6037, %v6038
      %v6040 = vrot.slane %v6039, 4
      %v6041 = vrot.slane %v5505, 5
      %v6042 = vrot.slane %v5501, 6
      %v6043 = vor.u32 %v6041, %v6042
      %v6044 = vsel %vm2173, %v6040, %v6043
      %v6045 = vrot.slane %v6043, 4
      %v6046 = vshrl.u32 %v5151, 16
      %v6048 = vrot.slane %v6046, 5
      %v6049 = vrot.slane %v5511, 6
      %v6050 = vor.u32 %v6048, %v6049
      %v6051 = vsel %vm2173, %v6045, %v6050
      %v6052 = vrot.slane %v5516, 5
      %v6053 = vrot.slane %v5519, 6
      %v6054 = vor.u32 %v6052, %v6053
      %v6055 = vrot.slane %v6054, 4
      %v6056 = vrot.slane %v5529, 5
      %v6057 = vrot.slane %v5525, 6
      %v6058 = vor.u32 %v6056, %v6057
      %v6059 = vsel %vm2173, %v6055, %v6058
      %v6060 = vrot.slane %v6058, 4
      %v6061 = vshrl.u32 %v5154, 16
      %v6063 = vrot.slane %v6061, 5
      %v6064 = vrot.slane %v5535, 6
      %v6065 = vor.u32 %v6063, %v6064
      %v6066 = vsel %vm2173, %v6060, %v6065
      %v6099 = vmax.bf16 %v5795, %v5834
      %v6100 = vmax.bf16 %v5796, %v5841
      %v6101 = vmax.bf16 %v5797, %v5849
      %v6102 = vmax.bf16 %v5798, %v5856
      %v6103 = vmax.bf16 %v5799, %v5864
      %v6104 = vmax.bf16 %v5800, %v5871
      %v6105 = vmax.bf16 %v5801, %v5879
      %v6106 = vmax.bf16 %v5802, %v5886
      %v6107 = vmax.bf16 %v5803, %v5894
      %v6108 = vmax.bf16 %v5804, %v5901
      %v6109 = vmax.bf16 %v5805, %v5909
      %v6110 = vmax.bf16 %v5806, %v5916
      %v6111 = vmax.bf16 %v5807, %v5924
      %v6112 = vmax.bf16 %v5808, %v5931
      %v6113 = vmax.bf16 %v5809, %v5939
      %v6114 = vmax.bf16 %v5810, %v5946
      %v6115 = vmax.bf16 %v5811, %v5954
      %v6116 = vmax.bf16 %v5812, %v5961
      %v6117 = vmax.bf16 %v5813, %v5969
      %v6118 = vmax.bf16 %v5814, %v5976
      %v6119 = vmax.bf16 %v5815, %v5984
      %v6120 = vmax.bf16 %v5816, %v5991
      %v6121 = vmax.bf16 %v5817, %v5999
      %v6122 = vmax.bf16 %v5818, %v6006
      %v6123 = vmax.bf16 %v5819, %v6014
      %v6124 = vmax.bf16 %v5820, %v6021
      %v6125 = vmax.bf16 %v5821, %v6029
      %v6126 = vmax.bf16 %v5822, %v6036
      %v6127 = vmax.bf16 %v5823, %v6044
      %v6128 = vmax.bf16 %v5824, %v6051
      %v6129 = vmax.bf16 %v5825, %v6059
      %v6130 = vmax.bf16 %v5826, %v6066
      %v6131 = vrot.slane %v5107, 6
      %v6132 = vrot.slane %v6131, 4
      %v6133 = vrot.slane %v5108, 6
      %v6134 = vsel %vm2480, %v6132, %v6133
      %v6135 = vrot.slane %v6133, 4
      %v6136 = vrot.slane %v5109, 6
      %v6137 = vsel %vm2480, %v6135, %v6136
      %v6138 = vrot.slane %v5110, 6
      %v6139 = vrot.slane %v6138, 4
      %v6140 = vrot.slane %v5111, 6
      %v6141 = vsel %vm2480, %v6139, %v6140
      %v6142 = vrot.slane %v6140, 4
      %v6143 = vrot.slane %v5112, 6
      %v6144 = vsel %vm2480, %v6142, %v6143
      %v6145 = vrot.slane %v5113, 6
      %v6146 = vrot.slane %v6145, 4
      %v6147 = vrot.slane %v5114, 6
      %v6148 = vsel %vm2480, %v6146, %v6147
      %v6149 = vrot.slane %v6147, 4
      %v6150 = vrot.slane %v5115, 6
      %v6151 = vsel %vm2480, %v6149, %v6150
      %v6152 = vrot.slane %v5116, 6
      %v6153 = vrot.slane %v6152, 4
      %v6154 = vrot.slane %v5117, 6
      %v6155 = vsel %vm2480, %v6153, %v6154
      %v6156 = vrot.slane %v6154, 4
      %v6157 = vrot.slane %v5118, 6
      %v6158 = vsel %vm2480, %v6156, %v6157
      %v6159 = vrot.slane %v5119, 6
      %v6160 = vrot.slane %v6159, 4
      %v6161 = vrot.slane %v5120, 6
      %v6162 = vsel %vm2480, %v6160, %v6161
      %v6163 = vrot.slane %v6161, 4
      %v6164 = vrot.slane %v5121, 6
      %v6165 = vsel %vm2480, %v6163, %v6164
      %v6166 = vrot.slane %v5122, 6
      %v6167 = vrot.slane %v6166, 4
      %v6168 = vrot.slane %v5123, 6
      %v6169 = vsel %vm2480, %v6167, %v6168
      %v6170 = vrot.slane %v6168, 4
      %v6171 = vrot.slane %v5124, 6
      %v6172 = vsel %vm2480, %v6170, %v6171
      %v6173 = vrot.slane %v5125, 6
      %v6174 = vrot.slane %v6173, 4
      %v6175 = vrot.slane %v5126, 6
      %v6176 = vsel %vm2480, %v6174, %v6175
      %v6177 = vrot.slane %v6175, 4
      %v6178 = vrot.slane %v5127, 6
      %v6179 = vsel %vm2480, %v6177, %v6178
      %v6180 = vrot.slane %v5128, 6
      %v6181 = vrot.slane %v6180, 4
      %v6182 = vrot.slane %v5129, 6
      %v6183 = vsel %vm2480, %v6181, %v6182
      %v6184 = vrot.slane %v6182, 4
      %v6185 = vrot.slane %v5130, 6
      %v6186 = vsel %vm2480, %v6184, %v6185
      %v6187 = vrot.slane %v5131, 6
      %v6188 = vrot.slane %v6187, 4
      %v6189 = vrot.slane %v5132, 6
      %v6190 = vsel %vm2480, %v6188, %v6189
      %v6191 = vrot.slane %v6189, 4
      %v6192 = vrot.slane %v5133, 6
      %v6193 = vsel %vm2480, %v6191, %v6192
      %v6194 = vrot.slane %v5134, 6
      %v6195 = vrot.slane %v6194, 4
      %v6196 = vrot.slane %v5135, 6
      %v6197 = vsel %vm2480, %v6195, %v6196
      %v6198 = vrot.slane %v6196, 4
      %v6199 = vrot.slane %v5136, 6
      %v6200 = vsel %vm2480, %v6198, %v6199
      %v6201 = vrot.slane %v5137, 6
      %v6202 = vrot.slane %v6201, 4
      %v6203 = vrot.slane %v5138, 6
      %v6204 = vsel %vm2480, %v6202, %v6203
      %v6205 = vrot.slane %v6203, 4
      %v6206 = vrot.slane %v5139, 6
      %v6207 = vsel %vm2480, %v6205, %v6206
      %v6208 = vrot.slane %v5140, 6
      %v6209 = vrot.slane %v6208, 4
      %v6210 = vrot.slane %v5141, 6
      %v6211 = vsel %vm2480, %v6209, %v6210
      %v6212 = vrot.slane %v6210, 4
      %v6213 = vrot.slane %v5142, 6
      %v6214 = vsel %vm2480, %v6212, %v6213
      %v6215 = vrot.slane %v5143, 6
      %v6216 = vrot.slane %v6215, 4
      %v6217 = vrot.slane %v5144, 6
      %v6218 = vsel %vm2480, %v6216, %v6217
      %v6219 = vrot.slane %v6217, 4
      %v6220 = vrot.slane %v5145, 6
      %v6221 = vsel %vm2480, %v6219, %v6220
      %v6222 = vrot.slane %v5146, 6
      %v6223 = vrot.slane %v6222, 4
      %v6224 = vrot.slane %v5147, 6
      %v6225 = vsel %vm2480, %v6223, %v6224
      %v6226 = vrot.slane %v6224, 4
      %v6227 = vrot.slane %v5148, 6
      %v6228 = vsel %vm2480, %v6226, %v6227
      %v6229 = vrot.slane %v5149, 6
      %v6230 = vrot.slane %v6229, 4
      %v6231 = vrot.slane %v5150, 6
      %v6232 = vsel %vm2480, %v6230, %v6231
      %v6233 = vrot.slane %v6231, 4
      %v6234 = vrot.slane %v5151, 6
      %v6235 = vsel %vm2480, %v6233, %v6234
      %v6236 = vrot.slane %v5152, 6
      %v6237 = vrot.slane %v6236, 4
      %v6238 = vrot.slane %v5153, 6
      %v6239 = vsel %vm2480, %v6237, %v6238
      %v6240 = vrot.slane %v6238, 4
      %v6241 = vrot.slane %v5154, 6
      %v6242 = vsel %vm2480, %v6240, %v6241
      %v6275 = vmax.bf16 %v6099, %v6134
      %v6276 = vmax.bf16 %v6100, %v6137
      %v6277 = vmax.bf16 %v6101, %v6141
      %v6278 = vmax.bf16 %v6102, %v6144
      %v6279 = vmax.bf16 %v6103, %v6148
      %v6280 = vmax.bf16 %v6104, %v6151
      %v6281 = vmax.bf16 %v6105, %v6155
      %v6282 = vmax.bf16 %v6106, %v6158
      %v6283 = vmax.bf16 %v6107, %v6162
      %v6284 = vmax.bf16 %v6108, %v6165
      %v6285 = vmax.bf16 %v6109, %v6169
      %v6286 = vmax.bf16 %v6110, %v6172
      %v6287 = vmax.bf16 %v6111, %v6176
      %v6288 = vmax.bf16 %v6112, %v6179
      %v6289 = vmax.bf16 %v6113, %v6183
      %v6290 = vmax.bf16 %v6114, %v6186
      %v6291 = vmax.bf16 %v6115, %v6190
      %v6292 = vmax.bf16 %v6116, %v6193
      %v6293 = vmax.bf16 %v6117, %v6197
      %v6294 = vmax.bf16 %v6118, %v6200
      %v6295 = vmax.bf16 %v6119, %v6204
      %v6296 = vmax.bf16 %v6120, %v6207
      %v6297 = vmax.bf16 %v6121, %v6211
      %v6298 = vmax.bf16 %v6122, %v6214
      %v6299 = vmax.bf16 %v6123, %v6218
      %v6300 = vmax.bf16 %v6124, %v6221
      %v6301 = vmax.bf16 %v6125, %v6225
      %v6302 = vmax.bf16 %v6126, %v6228
      %v6303 = vmax.bf16 %v6127, %v6232
      %v6304 = vmax.bf16 %v6128, %v6235
      %v6305 = vmax.bf16 %v6129, %v6239
      %v6306 = vmax.bf16 %v6130, %v6242
      %v6339 = vrot.slane %v6275, 7
      %v6340 = vrot.slane %v6339, 4
      %v6341 = vrot.slane %v6276, 7
      %v6342 = vsel %vm1002, %v6340, %v6341
      %v6343 = vrot.slane %v6341, 4
      %v6344 = vrot.slane %v6277, 7
      %v6345 = vrot.slane %v6344, 4
      %v6346 = vrot.slane %v6278, 7
      %v6347 = vsel %vm1002, %v6345, %v6346
      %v6348 = vrot.slane %v6346, 4
      %v6349 = vrot.slane %v6279, 7
      %v6350 = vrot.slane %v6349, 4
      %v6351 = vrot.slane %v6280, 7
      %v6352 = vsel %vm1002, %v6350, %v6351
      %v6353 = vrot.slane %v6351, 4
      %v6354 = vrot.slane %v6281, 7
      %v6355 = vrot.slane %v6354, 4
      %v6356 = vrot.slane %v6282, 7
      %v6357 = vsel %vm1002, %v6355, %v6356
      %v6358 = vrot.slane %v6356, 4
      %v6359 = vrot.slane %v6283, 7
      %v6360 = vrot.slane %v6359, 4
      %v6361 = vrot.slane %v6284, 7
      %v6362 = vsel %vm1002, %v6360, %v6361
      %v6363 = vrot.slane %v6361, 4
      %v6364 = vrot.slane %v6285, 7
      %v6365 = vrot.slane %v6364, 4
      %v6366 = vrot.slane %v6286, 7
      %v6367 = vsel %vm1002, %v6365, %v6366
      %v6368 = vrot.slane %v6366, 4
      %v6369 = vrot.slane %v6287, 7
      %v6370 = vrot.slane %v6369, 4
      %v6371 = vrot.slane %v6288, 7
      %v6372 = vsel %vm1002, %v6370, %v6371
      %v6373 = vrot.slane %v6371, 4
      %v6374 = vrot.slane %v6289, 7
      %v6375 = vrot.slane %v6374, 4
      %v6376 = vrot.slane %v6290, 7
      %v6377 = vsel %vm1002, %v6375, %v6376
      %v6378 = vrot.slane %v6376, 4
      %v6379 = vrot.slane %v6291, 7
      %v6380 = vrot.slane %v6379, 4
      %v6381 = vrot.slane %v6292, 7
      %v6382 = vsel %vm1002, %v6380, %v6381
      %v6383 = vrot.slane %v6381, 4
      %v6384 = vrot.slane %v6293, 7
      %v6385 = vrot.slane %v6384, 4
      %v6386 = vrot.slane %v6294, 7
      %v6387 = vsel %vm1002, %v6385, %v6386
      %v6388 = vrot.slane %v6386, 4
      %v6389 = vrot.slane %v6295, 7
      %v6390 = vrot.slane %v6389, 4
      %v6391 = vrot.slane %v6296, 7
      %v6392 = vsel %vm1002, %v6390, %v6391
      %v6393 = vrot.slane %v6391, 4
      %v6394 = vrot.slane %v6297, 7
      %v6395 = vrot.slane %v6394, 4
      %v6396 = vrot.slane %v6298, 7
      %v6397 = vsel %vm1002, %v6395, %v6396
      %v6398 = vrot.slane %v6396, 4
      %v6399 = vrot.slane %v6299, 7
      %v6400 = vrot.slane %v6399, 4
      %v6401 = vrot.slane %v6300, 7
      %v6402 = vsel %vm1002, %v6400, %v6401
      %v6403 = vrot.slane %v6401, 4
      %v6404 = vrot.slane %v6301, 7
      %v6405 = vrot.slane %v6404, 4
      %v6406 = vrot.slane %v6302, 7
      %v6407 = vsel %vm1002, %v6405, %v6406
      %v6408 = vrot.slane %v6406, 4
      %v6409 = vrot.slane %v6303, 7
      %v6410 = vrot.slane %v6409, 4
      %v6411 = vrot.slane %v6304, 7
      %v6412 = vsel %vm1002, %v6410, %v6411
      %v6413 = vrot.slane %v6411, 4
      %v6414 = vrot.slane %v6305, 7
      %v6415 = vrot.slane %v6414, 4
      %v6416 = vrot.slane %v6306, 7
      %v6417 = vsel %vm1002, %v6415, %v6416
      %v6418 = vrot.slane %v6416, 4
      %6467 = vst.msk [vmem:[%s1131] sm:$0xe] %vm1132, %v6339
      %6468 = vst.msk [vmem:[%s1131 + $0x4] sm:$0xf] %vm863, %v6342
      %6469 = vst.msk [vmem:[%s1131 + $0x8] sm:$0x1] %vm878, %v6343
      %6470 = vst.msk [vmem:[%s1131 + $0xc] sm:$0xe] %vm1132, %v6344
      %6471 = vst.msk [vmem:[%s1131 + $0x10] sm:$0xf] %vm863, %v6347
      %6472 = vst.msk [vmem:[%s1131 + $0x14] sm:$0x1] %vm878, %v6348
      %6473 = vst.msk [vmem:[%s1131 + $0x18] sm:$0xe] %vm1132, %v6349
      %6474 = vst.msk [vmem:[%s1131 + $0x1c] sm:$0xf] %vm863, %v6352
      %6475 = vst.msk [vmem:[%s1131 + $0x20] sm:$0x1] %vm878, %v6353
      %6476 = vst.msk [vmem:[%s1131 + $0x24] sm:$0xe] %vm1132, %v6354
      %6477 = vst.msk [vmem:[%s1131 + $0x28] sm:$0xf] %vm863, %v6357
      %6478 = vst.msk [vmem:[%s1131 + $0x2c] sm:$0x1] %vm878, %v6358
      %6479 = vst.msk [vmem:[%s1131 + $0x30] sm:$0xe] %vm1132, %v6359
      %6480 = vst.msk [vmem:[%s1131 + $0x34] sm:$0xf] %vm863, %v6362
      %6481 = vst.msk [vmem:[%s1131 + $0x38] sm:$0x1] %vm878, %v6363
      %6482 = vst.msk [vmem:[%s1131 + $0x3c] sm:$0xe] %vm1132, %v6364
      %6483 = vst.msk [vmem:[%s1131 + $0x40] sm:$0xf] %vm863, %v6367
      %6484 = vst.msk [vmem:[%s1131 + $0x44] sm:$0x1] %vm878, %v6368
      %6485 = vst.msk [vmem:[%s1131 + $0x48] sm:$0xe] %vm1132, %v6369
      %6486 = vst.msk [vmem:[%s1131 + $0x4c] sm:$0xf] %vm863, %v6372
      %6487 = vst.msk [vmem:[%s1131 + $0x50] sm:$0x1] %vm878, %v6373
      %6488 = vst.msk [vmem:[%s1131 + $0x54] sm:$0xe] %vm1132, %v6374
      %6489 = vst.msk [vmem:[%s1131 + $0x58] sm:$0xf] %vm863, %v6377
      %6490 = vst.msk [vmem:[%s1131 + $0x5c] sm:$0x1] %vm878, %v6378
      %6491 = vst.msk [vmem:[%s1131 + $0x60] sm:$0xe] %vm1132, %v6379
      %6492 = vst.msk [vmem:[%s1131 + $0x64] sm:$0xf] %vm863, %v6382
      %6493 = vst.msk [vmem:[%s1131 + $0x68] sm:$0x1] %vm878, %v6383
      %6494 = vst.msk [vmem:[%s1131 + $0x6c] sm:$0xe] %vm1132, %v6384
      %6495 = vst.msk [vmem:[%s1131 + $0x70] sm:$0xf] %vm863, %v6387
      %6496 = vst.msk [vmem:[%s1131 + $0x74] sm:$0x1] %vm878, %v6388
      %6497 = vst.msk [vmem:[%s1131 + $0x78] sm:$0xe] %vm1132, %v6389
      %6498 = vst.msk [vmem:[%s1131 + $0x7c] sm:$0xf] %vm863, %v6392
      %6499 = vst.msk [vmem:[%s1131 + $0x80] sm:$0x1] %vm878, %v6393
      %6500 = vst.msk [vmem:[%s1131 + $0x84] sm:$0xe] %vm1132, %v6394
      %6501 = vst.msk [vmem:[%s1131 + $0x88] sm:$0xf] %vm863, %v6397
      %6502 = vst.msk [vmem:[%s1131 + $0x8c] sm:$0x1] %vm878, %v6398
      %6503 = vst.msk [vmem:[%s1131 + $0x90] sm:$0xe] %vm1132, %v6399
      %6504 = vst.msk [vmem:[%s1131 + $0x94] sm:$0xf] %vm863, %v6402
      %6505 = vst.msk [vmem:[%s1131 + $0x98] sm:$0x1] %vm878, %v6403
      %6506 = vst.msk [vmem:[%s1131 + $0x9c] sm:$0xe] %vm1132, %v6404
      %6507 = vst.msk [vmem:[%s1131 + $0xa0] sm:$0xf] %vm863, %v6407
      %6508 = vst.msk [vmem:[%s1131 + $0xa4] sm:$0x1] %vm878, %v6408
      %6509 = vst.msk [vmem:[%s1131 + $0xa8] sm:$0xe] %vm1132, %v6409
      %6510 = vst.msk [vmem:[%s1131 + $0xac] sm:$0xf] %vm863, %v6412
      %6511 = vst.msk [vmem:[%s1131 + $0xb0] sm:$0x1] %vm878, %v6413
      %6512 = vst.msk [vmem:[%s1131 + $0xb4] sm:$0xe] %vm1132, %v6414
      %6513 = vst.msk [vmem:[%s1131 + $0xb8] sm:$0xf] %vm863, %v6417
      %6514 = vst.msk [vmem:[%s1131 + $0xbc] sm:$0x1] %vm878, %v6418
      %v6515 = vld [vmem:[%s1184] sm:$0xe]
      %v6516 = vld [vmem:[%s1184 + $0x4] sm:$0xf]
      %v6517 = vld [vmem:[%s1184 + $0x8] sm:$0x1]
      %v6518 = vld [vmem:[%s1184 + $0xc] sm:$0xe]
      %v6519 = vld [vmem:[%s1184 + $0x10] sm:$0xf]
      %v6520 = vld [vmem:[%s1184 + $0x14] sm:$0x1]
      %v6521 = vld [vmem:[%s1184 + $0x18] sm:$0xe]
      %v6522 = vld [vmem:[%s1184 + $0x1c] sm:$0xf]
      %v6523 = vld [vmem:[%s1184 + $0x20] sm:$0x1]
      %v6524 = vld [vmem:[%s1184 + $0x24] sm:$0xe]
      %v6525 = vld [vmem:[%s1184 + $0x28] sm:$0xf]
      %v6526 = vld [vmem:[%s1184 + $0x2c] sm:$0x1]
      %v6539 = vrot.slane %v6515, 5
      %v6540 = vrot.slane %v6539, 4
      %v6541 = vrot.slane %v6516, 5
      %v6542 = vsel %vm1211, %v6540, %v6541
      %v6543 = vrot.slane %v6541, 4
      %v6544 = vrot.slane %v6517, 5
      %v6545 = vsel %vm1211, %v6543, %v6544
      %v6546 = vrot.slane %v6518, 5
      %v6547 = vrot.slane %v6546, 4
      %v6548 = vrot.slane %v6519, 5
      %v6549 = vsel %vm1211, %v6547, %v6548
      %v6550 = vrot.slane %v6548, 4
      %v6551 = vrot.slane %v6520, 5
      %v6552 = vsel %vm1211, %v6550, %v6551
      %v6553 = vrot.slane %v6521, 5
      %v6554 = vrot.slane %v6553, 4
      %v6555 = vrot.slane %v6522, 5
      %v6556 = vsel %vm1211, %v6554, %v6555
      %v6557 = vrot.slane %v6555, 4
      %v6558 = vrot.slane %v6523, 5
      %v6559 = vsel %vm1211, %v6557, %v6558
      %v6560 = vrot.slane %v6524, 5
      %v6561 = vrot.slane %v6560, 4
      %v6562 = vrot.slane %v6525, 5
      %v6563 = vsel %vm1211, %v6561, %v6562
      %v6564 = vrot.slane %v6562, 4
      %v6565 = vrot.slane %v6526, 5
      %v6566 = vsel %vm1211, %v6564, %v6565
      %s6567 = scalar_lea.vmem %s3, 48
      %v6568 = vld [vmem:[%s6567] sm:$0xf]
      %v6569 = vld [vmem:[%s6567 + $0x4] sm:$0xf]
      %v6570 = vld [vmem:[%s6567 + $0x8] sm:$0xf]
      %v6571 = vld [vmem:[%s6567 + $0xc] sm:$0xf]
      %v6572 = vunpack.c.l.b16 %v6542
      %v6573 = vunpack.c.l.b16 %v6545
      %v6574 = vunpack.c.l.b16 %v6549
      %v6575 = vunpack.c.l.b16 %v6552
      %v6576 = vunpack.c.l.b16 %v6556
      %v6577 = vunpack.c.l.b16 %v6559
      %v6578 = vunpack.c.l.b16 %v6563
      %v6579 = vunpack.c.l.b16 %v6566
      %v6580 = vpack.c.b16 %v6573, %v6572
      %v6581 = vpack.c.b16 %v6575, %v6574
      %v6582 = vpack.c.b16 %v6577, %v6576
      %v6583 = vpack.c.b16 %v6579, %v6578
      %v6588 = vunpack.c.l.b16 %v6568
      %v6589 = vunpack.c.l.b16 %v6569
      %v6590 = vunpack.c.l.b16 %v6570
      %v6591 = vunpack.c.l.b16 %v6571
      %v6592 = vpack.c.b16 %v6589, %v6588
      %v6593 = vpack.c.b16 %v6591, %v6590
      %v6597 = vsel %vm2946, %v6580, 0
      %v6600 = vsel %vm2946, %v6581, 0
      %v6603 = vsel %vm2946, %v6582, 0
      %v6606 = vsel %vm2946, %v6583, 0
      %6608 = vmatprep.subr.bf16.mxu0 0
      %6609 = vmatpush1.bf16.msra.mxu0 %v6592
      %6610 = vmatprep.subr.bf16.mxu0 0
      %6611 = vmatpush1.bf16.msra.mxu0 %v6593
      %6612 = vmatprep.subr.bf16.mxu0 0
      %6613 = vmatpush1.bf16.msra.mxu0 0
      %6614 = vmatprep.subr.bf16.mxu0 0
      %6615 = vmatpush1.bf16.msra.mxu0 0
      %6616 = vmatprep.subr.bf16.mxu0 0
      %6617 = vmatpush1.bf16.msra.mxu0 0
      %6618 = vmatprep.subr.bf16.mxu0 0
      %6619 = vmatpush1.bf16.msra.mxu0 0
      %6620 = vmatprep.subr.bf16.mxu0 0
      %6621 = vmatpush1.bf16.msra.mxu0 0
      %6622 = vmatprep.subr.bf16.mxu0 0
      %6623 = vmatpush1.bf16.msra.mxu0 0
      %6624 = vmatprep.subr.bf16.mxu0 0
      %6625 = vmatpush1.bf16.msra.mxu0 0
      %6626 = vmatprep.subr.bf16.mxu0 0
      %6627 = vmatpush1.bf16.msra.mxu0 0
      %6628 = vmatprep.subr.bf16.mxu0 0
      %6629 = vmatpush1.bf16.msra.mxu0 0
      %6630 = vmatprep.subr.bf16.mxu0 0
      %6631 = vmatpush1.bf16.msra.mxu0 0
      %6632 = vmatprep.subr.bf16.mxu0 0
      %6633 = vmatpush1.bf16.msra.mxu0 0
      %6634 = vmatprep.subr.bf16.mxu0 0
      %6635 = vmatpush1.bf16.msra.mxu0 0
      %6636 = vmatprep.subr.bf16.mxu0 0
      %6637 = vmatpush1.bf16.msra.mxu0 0
      %6638 = vmatprep.subr.bf16.mxu0 0
      %6639 = vmatpush1.bf16.msra.mxu0 0
      %6640 = vmatprep.mubr.bf16.mxu0 0
      %6641 = vmatmul.mubr.bf16.gmra.mrb[0].mxu0 %v6597
      %v6642 = vpop.f32.mrb[0].mxu0
      %v6643 = vadd.f32 0.0, %v6642
      %v6644 = vpop.f32.mrb[0].mxu0
      %v6645 = vpop.f32.mrb[0].mxu0
      %v6646 = vadd.f32 0.0, %v6645
      %v6647 = vpop.f32.mrb[0].mxu0
      %6648 = vmatprep.mubr.bf16.mxu0 0
      %6649 = vmatmul.mubr.bf16.gmra.mrb[0].mxu0 %v6600
      %v6650 = vpop.f32.mrb[0].mxu0
      %v6651 = vadd.f32 0.0, %v6650
      %v6652 = vpop.f32.mrb[0].mxu0
      %v6653 = vpop.f32.mrb[0].mxu0
      %v6654 = vadd.f32 0.0, %v6653
      %v6655 = vpop.f32.mrb[0].mxu0
      %6656 = vmatprep.mubr.bf16.mxu0 0
      %6657 = vmatmul.mubr.bf16.gmra.mrb[0].mxu0 %v6603
      %v6658 = vpop.f32.mrb[0].mxu0
      %v6659 = vadd.f32 0.0, %v6658
      %v6660 = vpop.f32.mrb[0].mxu0
      %v6661 = vpop.f32.mrb[0].mxu0
      %v6662 = vadd.f32 0.0, %v6661
      %v6663 = vpop.f32.mrb[0].mxu0
      %6664 = vmatprep.mubr.bf16.mxu0 0
      %6665 = vmatmul.mubr.bf16.gmra.mrb[0].mxu0 %v6606
      %v6666 = vpop.f32.mrb[0].mxu0
      %v6667 = vadd.f32 0.0, %v6666
      %v6668 = vpop.f32.mrb[0].mxu0
      %v6669 = vpop.f32.mrb[0].mxu0
      %v6670 = vadd.f32 0.0, %v6669
      %v6671 = vpop.f32.mrb[0].mxu0
      %6672 = vdwg.mxu0
      %v6673 = vadd.f32 %v4895, %v6643
      %v6674 = vadd.f32 %v4896, %v6646
      %v6675 = vadd.f32 %v4897, %v6651
      %v6676 = vadd.f32 %v4898, %v6654
      %v6677 = vadd.f32 %v4899, %v6659
      %v6678 = vadd.f32 %v4900, %v6662
      %v6679 = vadd.f32 %v4901, %v6667
      %v6680 = vadd.f32 %v4902, %v6670
      %v6681 = vld [vmem:[%s4] sm:$0x1]
      %v6683 = vlaneseq
      %v6684 = vshrl.u32 %v6683, 7
      %v6685 = vsub.s32 0, %v6684
      %v6686 = vrot.slane %v6681, %v6685
      %v6688 = vadd.f32 %v6673, %v6686
      %v6689 = vadd.f32 %v6674, %v6686
      %v6690 = vadd.f32 %v6675, %v6686
      %v6691 = vadd.f32 %v6676, %v6686
      %v6692 = vadd.f32 %v6677, %v6686
      %v6693 = vadd.f32 %v6678, %v6686
      %v6694 = vadd.f32 %v6679, %v6686
      %v6695 = vadd.f32 %v6680, %v6686
      %v6696 = vsub.f32 0.0, %v6688
      %v6697 = vsub.f32 0.0, %v6689
      %v6698 = vsub.f32 0.0, %v6690
      %v6699 = vsub.f32 0.0, %v6691
      %v6700 = vsub.f32 0.0, %v6692
      %v6701 = vsub.f32 0.0, %v6693
      %v6702 = vsub.f32 0.0, %v6694
      %v6703 = vsub.f32 0.0, %v6695
      %v6704 = vmul.f32 %v6696, 1.442695
      %v6705 = vpow.pop %v6704
      %v6706 = vmul.f32 %v6697, 1.442695
      %v6707 = vpow.pop %v6706
      %v6708 = vmul.f32 %v6698, 1.442695
      %v6709 = vpow.pop %v6708
      %v6710 = vmul.f32 %v6699, 1.442695
      %v6711 = vpow.pop %v6710
      %v6712 = vmul.f32 %v6700, 1.442695
      %v6713 = vpow.pop %v6712
      %v6714 = vmul.f32 %v6701, 1.442695
      %v6715 = vpow.pop %v6714
      %v6716 = vmul.f32 %v6702, 1.442695
      %v6717 = vpow.pop %v6716
      %v6718 = vmul.f32 %v6703, 1.442695
      %v6719 = vpow.pop %v6718
      %v6720 = vadd.f32 %v6705, 1.0
      %v6721 = vadd.f32 %v6707, 1.0
      %v6722 = vadd.f32 %v6709, 1.0
      %v6723 = vadd.f32 %v6711, 1.0
      %v6724 = vadd.f32 %v6713, 1.0
      %v6725 = vadd.f32 %v6715, 1.0
      %v6726 = vadd.f32 %v6717, 1.0
      %v6727 = vadd.f32 %v6719, 1.0
      %v6728 = vrcp.pop %v6720
      %v6729 = vmul.f32 1.0, %v6728
      %v6730 = vrcp.pop %v6721
      %v6731 = vmul.f32 1.0, %v6730
      %v6732 = vrcp.pop %v6722
      %v6733 = vmul.f32 1.0, %v6732
      %v6734 = vrcp.pop %v6723
      %v6735 = vmul.f32 1.0, %v6734
      %v6736 = vrcp.pop %v6724
      %v6737 = vmul.f32 1.0, %v6736
      %v6738 = vrcp.pop %v6725
      %v6739 = vmul.f32 1.0, %v6738
      %v6740 = vrcp.pop %v6726
      %v6741 = vmul.f32 1.0, %v6740
      %v6742 = vrcp.pop %v6727
      %v6743 = vmul.f32 1.0, %v6742
      %v6744 = vmul.f32 %v6688, %v6729
      %v6745 = vmul.f32 %v6689, %v6731
      %v6746 = vmul.f32 %v6690, %v6733
      %v6747 = vmul.f32 %v6691, %v6735
      %v6748 = vmul.f32 %v6692, %v6737
      %v6749 = vmul.f32 %v6693, %v6739
      %v6750 = vmul.f32 %v6694, %v6741
      %v6751 = vmul.f32 %v6695, %v6743
      %v6752 = vpack.c.bf16 %v6745, %v6744
      %v6753 = vpack.c.bf16 %v6747, %v6746
      %v6754 = vpack.c.bf16 %v6749, %v6748
      %v6755 = vpack.c.bf16 %v6751, %v6750
      %v6760 = vunpack.c.l.b16 %v6752
      %v6761 = vunpack.c.h.b16 %v6752
      %v6762 = vunpack.c.l.b16 %v6753
      %v6763 = vunpack.c.h.b16 %v6753
      %v6764 = vunpack.c.l.b16 %v6754
      %v6765 = vunpack.c.h.b16 %v6754
      %v6766 = vunpack.c.l.b16 %v6755
      %v6767 = vunpack.c.h.b16 %v6755
      %v6768 = vpack.c.b16 %v6760, %v6760
      %v6769 = vpack.c.b16 %v6761, %v6761
      %v6770 = vpack.c.b16 %v6762, %v6762
      %v6771 = vpack.c.b16 %v6763, %v6763
      %v6772 = vpack.c.b16 %v6764, %v6764
      %v6773 = vpack.c.b16 %v6765, %v6765
      %v6774 = vpack.c.b16 %v6766, %v6766
      %v6775 = vpack.c.b16 %v6767, %v6767
      %6784 = vst [vmem:[%s248] sm:$0xf] %v6768
      %6785 = vst [vmem:[%s248 + $0x4] sm:$0xf] %v6769
      %6786 = vst [vmem:[%s248 + $0x8] sm:$0xf] %v6770
      %6787 = vst [vmem:[%s248 + $0xc] sm:$0xf] %v6771
      %6788 = vst [vmem:[%s248 + $0x10] sm:$0xf] %v6772
      %6789 = vst [vmem:[%s248 + $0x14] sm:$0xf] %v6773
      %6790 = vst [vmem:[%s248 + $0x18] sm:$0xf] %v6774
      %6791 = vst [vmem:[%s248 + $0x1c] sm:$0xf] %v6775
      %s6792 = smul.u32 4, %s21
      %p6793 = scmp.lt.s32.totalorder %s20, 1
      %s6794 = scalar_select %p6793, %s20, 1
      %p6795 = scmp.lt.s32.totalorder %s6792, 15
      %s6796 = scalar_select %p6795, %s6792, 15
      %s6797 = smul.addr %s6796, 2
      %s6798 = smul.addr %s6794, 32
      %s6799 = sadd.s32 %s6797, %s6798
      %s6800 = smul.addr %s6799, 4
      %s6801 = scalar_lea.vmem %s5, %s6800
      // Predicated region
      $region41: #{sppf_apply.1} parent=39 // pred_check
        %p6802 = pneg %p158
      $region42: #{sppf_apply.1} parent=39 // pred_check_branch
        %6804 = sbr.rel (%p6802) target = $region44
      $region43: #{sppf_apply.1} parent=39 // pred_region
        %s6805 = smul.u32 4, %s21
      $region44: #{sppf_apply.1} parent=39 // pred_fallthru
        _
    $region40: #{sppf_apply.1} parent=5 // pred_fallthru
      _
    %p6806 = scmp.le.s32.totalorder 2, %s11
    // Predicated region
    $region45: #{sppf_apply.1} parent=5 // pred_check
      %p6807 = pneg %p6806
    $region46: #{sppf_apply.1} parent=5 // pred_check_branch
      %6809 = sbr.rel (%p6807) target = $region48
    $region47: #{sppf_apply.1} parent=5 // pred_region
      %s6810 = ssub.s32 %s11, 2
      // Predicated region
      $region49: #{sppf_apply.1} parent=47 // pred_check
        %p6811 = pneg %p164
      $region50: #{sppf_apply.1} parent=47 // pred_check_branch
        %6813 = sbr.rel (%p6811) target = $region52
      $region51: #{sppf_apply.1} parent=47 // pred_region
        %s6814 = smul.u32 4, %s23
        %p6815 = scmp.lt.s32.totalorder %s22, 1
        %s6816 = scalar_select %p6815, %s22, 1
        %p6817 = scmp.lt.s32.totalorder %s6814, 15
        %s6818 = scalar_select %p6817, %s6814, 15
        %s6819 = smul.addr %s6818, 2
        %s6820 = smul.addr %s6816, 32
        %s6821 = sadd.s32 %s6819, %s6820
        %s6822 = smul.addr %s6821, 4
        %s6823 = scalar_lea.vmem %s5, %s6822
      $region52: #{sppf_apply.1} parent=47 // pred_fallthru
        _
    $region48: #{sppf_apply.1} parent=5 // pred_fallthru
      _
  $region6: #{sppf_apply.1} parent=0 // loop_footer
    %s15 = sadd.s32 1, %s11
  $region7: #{sppf_apply.1} parent=0 // loop_footer_branch
    %10 = sbr.rel target = $region3
  $region8: #{sppf_apply.1} parent=0 // loop_exit
    _

</llo_original>
